<compile_context>
chip_gen: v6e
topology: v6e:2x2x1
jax: 0.10.0
libtpu: 0.0.40
codegen_flags: <defaults>
</compile_context>

<pallas_src>
import jax
import jax.numpy as jnp
from jax.experimental import pallas as pl
from jax.experimental.pallas import tpu as pltpu


def _round_up(x, m):
    return (x + m - 1) // m * m


def _vmem_limit(footprint_bytes):
    # Per-generation scoped-VMEM budget: ~80% of physical VMEM (~100 MiB on the
    # 128 MiB v5e/v6e parts, ~51 MiB on v7x's 64 MiB), sized to the actual footprint.
    try:
        cap = int(getattr(pltpu.get_tpu_info(), "vmem_capacity_bytes", 64 << 20))
    except Exception:
        cap = 64 << 20
    budget = max(int(cap * 0.8), 32 << 20)
    return int(min(max(int(footprint_bytes) + (4 << 20), 32 << 20), budget))


def _lstm_gates(gates, c_prev, H):
    # PyTorch gate order i, f, g, o.  H is a multiple of 128 -> lane-aligned slices.
    i_g = jax.nn.sigmoid(gates[:, 0 * H:1 * H])
    f_g = jax.nn.sigmoid(gates[:, 1 * H:2 * H])
    g_g = jnp.tanh(gates[:, 2 * H:3 * H])
    o_g = jax.nn.sigmoid(gates[:, 3 * H:4 * H])
    c_new = f_g * c_prev + i_g * g_g                          # cell state stays f32
    h_new = (o_g * jnp.tanh(c_new)).astype(jnp.bfloat16)      # bf16 MXU operand
    return h_new, c_new


# -----------------------------------------------------------------------------
# Kernel 1: fused input projection + 2-layer LSTM recurrence (time-blocked)
# -----------------------------------------------------------------------------
def _make_recurrence_kernel(T, TT, TB, Hp, need_mask):
    f32 = jnp.float32

    def kernel(x_ref, wih1_ref, b1_ref, whh1_ref, wih2_ref, whh2_ref, b2_ref,
               h2out_ref, g1_ref, h1_ref, h2_ref, c1_ref, c2_ref):
        tb = pl.program_id(1)

        @pl.when(tb == 0)
        def _init():
            h1_ref[...] = jnp.zeros_like(h1_ref)
            h2_ref[...] = jnp.zeros_like(h2_ref)
            c1_ref[...] = jnp.zeros_like(c1_ref)
            c2_ref[...] = jnp.zeros_like(c2_ref)

        # Hoisted layer-1 input projection for the whole time block: one big MXU op
        # (bf16 operands, f32 accumulation) into VMEM scratch.  No HBM round-trip.
        tt, tbk, dp = x_ref.shape
        xb = x_ref[...].reshape(tt * tbk, dp)
        g1_ref[...] = (
            jnp.dot(xb, wih1_ref[...], preferred_element_type=f32) + b1_ref[...]
        ).reshape(tt, tbk, 4 * Hp)

        # Carry state as values across the unrolled TT-step loop (h in bf16, c in f32).
        h1 = h1_ref[...]
        h2 = h2_ref[...]
        c1 = c1_ref[...]
        c2 = c2_ref[...]

        # Static Python loop == fully unrolled inner time loop (TT is small); lets the
        # scheduler overlap the layer-1 matmul of t+1 with the layer-2 matmuls of t.
        for t in range(TT):
            # ---- layer 1: recurrent matmul only (x projection already in g1 scratch)
            gates1 = g1_ref[t] + jnp.dot(h1, whh1_ref[...],
                                         preferred_element_type=f32)
            h1n, c1n = _lstm_gates(gates1, c1, Hp)

            # ---- layer 2: two dots into one f32 accumulator (no concat temporary)
            gates2 = (jnp.dot(h1n, wih2_ref[...], preferred_element_type=f32)
                      + jnp.dot(h2, whh2_ref[...], preferred_element_type=f32)
                      + b2_ref[...])
            h2n, c2n = _lstm_gates(gates2, c2, Hp)

            if need_mask:
                # T was padded up to a multiple of TT: freeze state on padded steps.
                valid = (tb * TT + t) < T
                h1 = jnp.where(valid, h1n, h1)
                c1 = jnp.where(valid, c1n, c1)
                h2 = jnp.where(valid, h2n, h2)
                c2 = jnp.where(valid, c2n, c2)
            else:
                h1, c1, h2, c2 = h1n, c1n, h2n, c2n

        h1_ref[...] = h1
        h2_ref[...] = h2
        c1_ref[...] = c1
        c2_ref[...] = c2
        # Output block index is constant along the (arbitrary) time axis, so Pallas
        # writes it back to HBM only once per batch block; writing every time block
        # is cheap and keeps correctness independent of grid-axis ordering.
        h2out_ref[...] = h2.astype(h2out_ref.dtype)

    return kernel


# -----------------------------------------------------------------------------
# Kernel 2: tiny epilogue -- last-step linear + softmax (lane-dense store)
# -----------------------------------------------------------------------------
def _make_epilogue_kernel(A, Ap):
    def kernel(h2_ref, wlin_ref, blin_ref, out_ref):
        logits = (jnp.dot(h2_ref[...].astype(jnp.bfloat16), wlin_ref[...],
                          preferred_element_type=jnp.float32)
                  + blin_ref[...])
        m = jnp.max(logits, axis=-1, keepdims=True)
        e = jnp.exp(logits - m)
        if Ap > A:
            # Mask padded answer lanes on lane index (safer than -1e30 bias padding).
            lane = jax.lax.broadcasted_iota(jnp.int32, e.shape, 1)
            e = jnp.where(lane < A, e, 0.0)
        s = jnp.sum(e, axis=-1, keepdims=True)
        # EUP approximate reciprocal + 2 Newton refinements -> f32-accurate, no vdiv.
        inv = pl.reciprocal(s, approx=True)
        inv = inv * (2.0 - s * inv)
        inv = inv * (2.0 - s * inv)
        out_ref[...] = (e * inv).astype(out_ref.dtype)

    return kernel


# -----------------------------------------------------------------------------
# Wrapper: padding / gate rearrangement / two pallas_calls
# -----------------------------------------------------------------------------
def _pad_gate_weight(w, H, Hp, k, kp):
    # w: (4H, k) PyTorch layout (gate order i,f,g,o) -> padded, transposed (kp, 4Hp)
    w = w.astype(jnp.float32).reshape(4, H, k)
    w = jnp.pad(w, ((0, 0), (0, Hp - H), (0, kp - k)))
    return w.reshape(4 * Hp, kp).T


def _pad_gate_bias(b_ih, b_hh, H, Hp):
    b = (b_ih.astype(jnp.float32) + b_hh.astype(jnp.float32)).reshape(4, H)
    b = jnp.pad(b, ((0, 0), (0, Hp - H)))
    return b.reshape(1, 4 * Hp)


@jax.jit
def vqa_forward(x, params):
    """x: (T, B, D) float32 (seq-major, like nn.LSTM batch_first=False)."""
    T, B, D = x.shape
    H = params["w_hh_l0"].shape[1]
    A = params["w_lin"].shape[0]
    f32, bf16 = jnp.float32, jnp.bfloat16

    # ---- lane/sublane aligned sizes (f32 vreg tile = (8, 128)) ----
    Bp = _round_up(B, 8)
    if Bp > 128:
        Bp = _round_up(Bp, 128)
        TB = 128                      # batch tile -> parallel grid axis
    else:
        TB = Bp
    Dp = _round_up(D, 128)
    Hp = _round_up(H, 128)
    Ap = _round_up(A, 128)

    # Time-block size: amortize per-grid-step overhead; keep the in-VMEM projection
    # scratch (TT, TB, 4Hp) f32 under ~8 MiB so it also fits v7x.
    TT = int(max(1, min(T, 8, (8 << 20) // max(TB * 4 * Hp * 4, 1))))
    Tp = int(pl.cdiv(T, TT)) * TT
    n_tb = Tp // TT

    # ---- weights: pad, gate-rearrange, transpose; bf16 MXU operands, f32 biases ----
    wih1 = _pad_gate_weight(params["w_ih_l0"], H, Hp, D, Dp).astype(bf16)   # (Dp, 4Hp)
    whh1 = _pad_gate_weight(params["w_hh_l0"], H, Hp, H, Hp).astype(bf16)   # (Hp, 4Hp)
    b1 = _pad_gate_bias(params["b_ih_l0"], params["b_hh_l0"], H, Hp)        # (1, 4Hp) f32
    wih2 = _pad_gate_weight(params["w_ih_l1"], H, Hp, H, Hp).astype(bf16)   # (Hp, 4Hp)
    whh2 = _pad_gate_weight(params["w_hh_l1"], H, Hp, H, Hp).astype(bf16)   # (Hp, 4Hp)
    b2 = _pad_gate_bias(params["b_ih_l1"], params["b_hh_l1"], H, Hp)        # (1, 4Hp) f32
    wlin = jnp.pad(params["w_lin"].astype(f32),
                   ((0, Ap - A), (0, Hp - H))).T.astype(bf16)               # (Hp, Ap)
    blin = jnp.pad(params["b_lin"].astype(f32), (0, Ap - A)).reshape(1, Ap)  # (1, Ap) f32

    # ---- pad x (zero-padded timesteps are masked in-kernel); bf16 halves the DMA ----
    xp = jnp.pad(x.astype(f32), ((0, Tp - T), (0, Bp - B), (0, Dp - D))).astype(bf16)

    resident = lambda: pl.BlockSpec(memory_space=pltpu.MemorySpace.VMEM)

    # ---------------- kernel 1: fused projection + recurrence ----------------
    rec_fp = (
        (Dp + 3 * Hp) * 4 * Hp * 2          # resident bf16 weights (single buffered)
        + 2 * 4 * Hp * 4                    # resident f32 biases
        + 2 * TT * TB * Dp * 2              # streamed x block (double buffered)
        + 2 * TB * Hp * 4                   # h2 output block
        + TT * TB * 4 * Hp * 4              # g1 projection scratch
        + 2 * TB * Hp * 2 + 2 * TB * Hp * 4  # h (bf16) + c (f32) state scratch
    )
    rec_kernel = _make_recurrence_kernel(T=T, TT=TT, TB=TB, Hp=Hp, need_mask=(Tp != T))
    h2_final = pl.pallas_call(
        rec_kernel,
        out_shape=jax.ShapeDtypeStruct((Bp, Hp), f32),
        grid=(Bp // TB, n_tb),
        in_specs=[
            pl.BlockSpec((TT, TB, Dp), lambda b, t: (t, b, 0)),   # streamed raw x block
            resident(),   # W_ih1 (Dp, 4Hp)
            resident(),   # b1
            resident(),   # W_hh1 (Hp, 4Hp)
            resident(),   # W_ih2 (Hp, 4Hp)
            resident(),   # W_hh2 (Hp, 4Hp)
            resident(),   # b2
        ],
        out_specs=pl.BlockSpec((TB, Hp), lambda b, t: (b, 0)),
        scratch_shapes=[
            pltpu.VMEM((TT, TB, 4 * Hp), f32),   # per-block input projection
            pltpu.VMEM((TB, Hp), bf16),          # h1 state
            pltpu.VMEM((TB, Hp), bf16),          # h2 state
            pltpu.VMEM((TB, Hp), f32),           # c1 state
            pltpu.VMEM((TB, Hp), f32),           # c2 state
        ],
        compiler_params=pltpu.CompilerParams(
            dimension_semantics=("parallel", "arbitrary"),
            vmem_limit_bytes=_vmem_limit(rec_fp),
        ),
    )(xp, wih1, b1, whh1, wih2, whh2, b2)

    # ---------------- kernel 2: linear + softmax epilogue ----------------
    epi_fp = Hp * Ap * 2 + Ap * 4 + 2 * TB * Hp * 4 + 2 * TB * Ap * 4
    epi_kernel = _make_epilogue_kernel(A=A, Ap=Ap)
    out_p = pl.pallas_call(
        epi_kernel,
        out_shape=jax.ShapeDtypeStruct((Bp, Ap), f32),
        grid=(Bp // TB,),
        in_specs=[
            pl.BlockSpec((TB, Hp), lambda b: (b, 0)),
            resident(),   # W_lin (Hp, Ap)
            resident(),   # b_lin
        ],
        out_specs=pl.BlockSpec((TB, Ap), lambda b: (b, 0)),
        compiler_params=pltpu.CompilerParams(
            dimension_semantics=("parallel",),
            vmem_limit_bytes=_vmem_limit(epi_fp),
        ),
    )(h2_final, wlin, blin)

    return out_p[:B, :A]


# -----------------------------------------------------------------------------
# Pure-JAX reference mirroring the PyTorch module (f32 throughout)
# -----------------------------------------------------------------------------
def reference_forward(x, params):
    T, B, D = x.shape
    H = params["w_hh_l0"].shape[1]

    def cell(x_in, h, c, wih, whh, bih, bhh):
        g = x_in @ wih.T + bih + h @ whh.T + bhh
        i, f, gg, o = jnp.split(g, 4, axis=-1)
        c = jax.nn.sigmoid(f) * c + jax.nn.sigmoid(i) * jnp.tanh(gg)
        h = jax.nn.sigmoid(o) * jnp.tanh(c)
        return h, c

    h1 = c1 = h2 = c2 = jnp.zeros((B, H), jnp.float32)
    for t in range(T):
        h1, c1 = cell(x[t], h1, c1, params["w_ih_l0"], params["w_hh_l0"],
                      params["b_ih_l0"], params["b_hh_l0"])
        h2, c2 = cell(h1, h2, c2, params["w_ih_l1"], params["w_hh_l1"],
                      params["b_ih_l1"], params["b_hh_l1"])
    logits = h2 @ params["w_lin"].T + params["b_lin"]
    return jax.nn.softmax(logits, axis=-1)


def make_params(key, input_size, hidden_size, len_answers):
    ks = jax.random.split(key, 10)
    s = 0.1
    H, D, A = hidden_size, input_size, len_answers
    return {
        "w_ih_l0": s * jax.random.normal(ks[0], (4 * H, D), jnp.float32),
        "w_hh_l0": s * jax.random.normal(ks[1], (4 * H, H), jnp.float32),
        "b_ih_l0": s * jax.random.normal(ks[2], (4 * H,), jnp.float32),
        "b_hh_l0": s * jax.random.normal(ks[3], (4 * H,), jnp.float32),
        "w_ih_l1": s * jax.random.normal(ks[4], (4 * H, H), jnp.float32),
        "w_hh_l1": s * jax.random.normal(ks[5], (4 * H, H), jnp.float32),
        "b_ih_l1": s * jax.random.normal(ks[6], (4 * H,), jnp.float32),
        "b_hh_l1": s * jax.random.normal(ks[7], (4 * H,), jnp.float32),
        "w_lin":   s * jax.random.normal(ks[8], (A, H), jnp.float32),
        "b_lin":   s * jax.random.normal(ks[9], (A,), jnp.float32),
    }


if __name__ == "__main__":
    T, B, D = 8, 2, 16          # seq_len, batch, input_size
    H, A = 32, 16               # hidden_size, len_answers (small synthetic)

    key = jax.random.PRNGKey(0)
    kx, kp = jax.random.split(key)
    x = jax.random.normal(kx, (T, B, D), jnp.float32)
    params = make_params(kp, D, H, A)

    out = jax.block_until_ready(vqa_forward(x, params))
    ref = reference_forward(x, params)

    assert out.shape == (B, A)
    assert jnp.allclose(jnp.sum(out, axis=-1), 1.0, atol=1e-4)
    # bf16 MXU operands (f32 accumulation / gating) -> relaxed tolerance vs f32 reference
    assert jnp.allclose(out, ref, atol=3e-3, rtol=3e-2)
    print("KERNEL_OK")
</pallas_src>

<mosaic_0001>
module attributes {stable_mosaic.version = 11 : i64} {
  func.func @kernel(%arg0: i32, %arg1: memref<8x128xf32, #tpu.memory_space<vmem>>, %arg2: memref<128x128xbf16, #tpu.memory_space<vmem>>, %arg3: memref<1x128xf32, #tpu.memory_space<vmem>>, %arg4: memref<8x128xf32, #tpu.memory_space<vmem>>) attributes {dimension_semantics = [#tpu.dimension_semantics<parallel>], iteration_bounds = array<i64: 1>, scalar_prefetch = 0 : i64, scratch_operands = 0 : i64, tpu.core_type = #tpu.core_type<tc>, window_params = [{transform_indices = @transform_0, window_bounds = array<i64: 8, 128>}, {pipeline_mode = #tpu.pipeline_mode<synchronous>, transform_indices = @transform_1, window_bounds = array<i64: 128, 128>}, {pipeline_mode = #tpu.pipeline_mode<synchronous>, transform_indices = @transform_2, window_bounds = array<i64: 1, 128>}, {transform_indices = @transform_3, window_bounds = array<i64: 8, 128>}]} {
    %c0 = arith.constant 0 : index
    %c0_0 = arith.constant 0 : index
    %0 = vector.load %arg1[%c0, %c0_0] : memref<8x128xf32, #tpu.memory_space<vmem>>, vector<8x128xf32>
    %1 = arith.truncf %0 : vector<8x128xf32> to vector<8x128xbf16>
    %c0_1 = arith.constant 0 : index
    %c0_2 = arith.constant 0 : index
    %2 = vector.load %arg2[%c0_1, %c0_2] : memref<128x128xbf16, #tpu.memory_space<vmem>>, vector<128x128xbf16>
    %cst = arith.constant dense<0.000000e+00> : vector<8x128xf32>
    %3 = tpu.matmul %1, %2, %cst {dimension_numbers = #tpu.dot_dimension_numbers<[1], [0], [0], [1], [0, 0, 1, 1], [], []>} : vector<8x128xbf16>, vector<128x128xbf16>, vector<8x128xf32> -> vector<8x128xf32>
    %c0_3 = arith.constant 0 : index
    %c0_4 = arith.constant 0 : index
    %4 = vector.load %arg3[%c0_3, %c0_4] : memref<1x128xf32, #tpu.memory_space<vmem>>, vector<1x128xf32>
    %5 = vector.broadcast %4 : vector<1x128xf32> to vector<8x128xf32>
    %6 = arith.addf %3, %5 : vector<8x128xf32>
    %cst_5 = arith.constant dense<0xFF800000> : vector<8xf32>
    %7 = vector.multi_reduction <maximumf>, %6, %cst_5 [1] : vector<8x128xf32> to vector<8xf32>
    %8 = vector.shape_cast %7 : vector<8xf32> to vector<8x1xf32>
    %9 = vector.broadcast %8 : vector<8x1xf32> to vector<8x128xf32>
    %10 = arith.subf %6, %9 : vector<8x128xf32>
    %11 = math.exp %10 : vector<8x128xf32>
    %12 = tpu.iota {dimensions = array<i32: 1>} : vector<8x128xi32>
    %c16_i32 = arith.constant 16 : i32
    %13 = vector.broadcast %c16_i32 : i32 to vector<8x128xi32>
    %14 = arith.cmpi slt, %12, %13 : vector<8x128xi32>
    %cst_6 = arith.constant 0.000000e+00 : f32
    %15 = vector.broadcast %cst_6 : f32 to vector<8x128xf32>
    %16 = arith.select %14, %11, %15 : vector<8x128xi1>, vector<8x128xf32>
    %cst_7 = arith.constant dense<0.000000e+00> : vector<8xf32>
    %17 = vector.multi_reduction <add>, %16, %cst_7 [1] : vector<8x128xf32> to vector<8xf32>
    %18 = vector.shape_cast %17 : vector<8xf32> to vector<8x1xf32>
    %19 = tpu.reciprocal %18 {approx = true} : vector<8x1xf32> -> vector<8x1xf32>
    %20 = arith.mulf %18, %19 : vector<8x1xf32>
    %cst_8 = arith.constant 2.000000e+00 : f32
    %21 = vector.broadcast %cst_8 : f32 to vector<8x1xf32>
    %22 = arith.subf %21, %20 : vector<8x1xf32>
    %23 = arith.mulf %19, %22 : vector<8x1xf32>
    %24 = arith.mulf %18, %23 : vector<8x1xf32>
    %cst_9 = arith.constant 2.000000e+00 : f32
    %25 = vector.broadcast %cst_9 : f32 to vector<8x1xf32>
    %26 = arith.subf %25, %24 : vector<8x1xf32>
    %27 = arith.mulf %23, %26 : vector<8x1xf32>
    %28 = vector.broadcast %27 : vector<8x1xf32> to vector<8x128xf32>
    %29 = arith.mulf %16, %28 : vector<8x128xf32>
    %c0_10 = arith.constant 0 : index
    %c0_11 = arith.constant 0 : index
    %30 = vector.load %arg4[%c0_10, %c0_11] : memref<8x128xf32, #tpu.memory_space<vmem>>, vector<8x128xf32>
    tpu.vector_store %arg4[%c0_10, %c0_11], %29 {strides = array<i32>} : memref<8x128xf32, #tpu.memory_space<vmem>>, vector<8x128xf32>,
    return
  }
  func.func @transform_0(%arg0: i32) -> (i32, i32) {
    %c0_i32 = arith.constant 0 : i32
    %c0_i32_0 = arith.constant 0 : i32
    return %arg0, %c0_i32 : i32, i32
  }
  func.func @transform_1(%arg0: i32) -> (i32, i32) {
    %c0_i32 = arith.constant 0 : i32
    %c0_i32_0 = arith.constant 0 : i32
    %c0_i32_1 = arith.constant 0 : i32
    return %c0_i32, %c0_i32_0 : i32, i32
  }
  func.func @transform_2(%arg0: i32) -> (i32, i32) {
    %c0_i32 = arith.constant 0 : i32
    %c0_i32_0 = arith.constant 0 : i32
    %c0_i32_1 = arith.constant 0 : i32
    return %c0_i32, %c0_i32_0 : i32, i32
  }
  func.func @transform_3(%arg0: i32) -> (i32, i32) {
    %c0_i32 = arith.constant 0 : i32
    %c0_i32_0 = arith.constant 0 : i32
    return %arg0, %c0_i32 : i32, i32
  }
}

module attributes {stable_mosaic.version = 11 : i64} {
  func.func @kernel(%arg0: i32, %arg1: i32, %arg2: memref<8x8x128xbf16, #tpu.memory_space<vmem>>, %arg3: memref<128x512xbf16, #tpu.memory_space<vmem>>, %arg4: memref<1x512xf32, #tpu.memory_space<vmem>>, %arg5: memref<128x512xbf16, #tpu.memory_space<vmem>>, %arg6: memref<128x512xbf16, #tpu.memory_space<vmem>>, %arg7: memref<128x512xbf16, #tpu.memory_space<vmem>>, %arg8: memref<1x512xf32, #tpu.memory_space<vmem>>, %arg9: memref<8x128xf32, #tpu.memory_space<vmem>>, %arg10: memref<8x8x512xf32, #tpu.memory_space<vmem>>, %arg11: memref<8x128xbf16, #tpu.memory_space<vmem>>, %arg12: memref<8x128xbf16, #tpu.memory_space<vmem>>, %arg13: memref<8x128xf32, #tpu.memory_space<vmem>>, %arg14: memref<8x128xf32, #tpu.memory_space<vmem>>) attributes {dimension_semantics = [#tpu.dimension_semantics<parallel>, #tpu.dimension_semantics<arbitrary>], iteration_bounds = array<i64: 1, 1>, scalar_prefetch = 0 : i64, scratch_operands = 5 : i64, tpu.core_type = #tpu.core_type<tc>, window_params = [{transform_indices = @transform_0, window_bounds = array<i64: 8, 8, 128>}, {pipeline_mode = #tpu.pipeline_mode<synchronous>, transform_indices = @transform_1, window_bounds = array<i64: 128, 512>}, {pipeline_mode = #tpu.pipeline_mode<synchronous>, transform_indices = @transform_2, window_bounds = array<i64: 1, 512>}, {pipeline_mode = #tpu.pipeline_mode<synchronous>, transform_indices = @transform_3, window_bounds = array<i64: 128, 512>}, {pipeline_mode = #tpu.pipeline_mode<synchronous>, transform_indices = @transform_4, window_bounds = array<i64: 128, 512>}, {pipeline_mode = #tpu.pipeline_mode<synchronous>, transform_indices = @transform_5, window_bounds = array<i64: 128, 512>}, {pipeline_mode = #tpu.pipeline_mode<synchronous>, transform_indices = @transform_6, window_bounds = array<i64: 1, 512>}, {transform_indices = @transform_7, window_bounds = array<i64: 8, 128>}]} {
    %c0_i32 = arith.constant 0 : i32
    %0 = arith.cmpi eq, %arg1, %c0_i32 : i32
    %1 = arith.extui %0 : i1 to i32
    %c0_i32_0 = arith.constant 0 : i32
    %2 = arith.cmpi ne, %1, %c0_i32_0 : i32
    scf.if %2 {
      %cst_181 = arith.constant 0.000000e+00 : bf16
      %542 = vector.broadcast %cst_181 : bf16 to vector<8x128xbf16>
      %c0_182 = arith.constant 0 : index
      %c0_183 = arith.constant 0 : index
      %543 = vector.load %arg11[%c0_182, %c0_183] : memref<8x128xbf16, #tpu.memory_space<vmem>>, vector<8x128xbf16>
      tpu.vector_store %arg11[%c0_182, %c0_183], %542 {strides = array<i32>} : memref<8x128xbf16, #tpu.memory_space<vmem>>, vector<8x128xbf16>,
      %cst_184 = arith.constant 0.000000e+00 : bf16
      %544 = vector.broadcast %cst_184 : bf16 to vector<8x128xbf16>
      %c0_185 = arith.constant 0 : index
      %c0_186 = arith.constant 0 : index
      %545 = vector.load %arg12[%c0_185, %c0_186] : memref<8x128xbf16, #tpu.memory_space<vmem>>, vector<8x128xbf16>
      tpu.vector_store %arg12[%c0_185, %c0_186], %544 {strides = array<i32>} : memref<8x128xbf16, #tpu.memory_space<vmem>>, vector<8x128xbf16>,
      %cst_187 = arith.constant 0.000000e+00 : f32
      %546 = vector.broadcast %cst_187 : f32 to vector<8x128xf32>
      %c0_188 = arith.constant 0 : index
      %c0_189 = arith.constant 0 : index
      %547 = vector.load %arg13[%c0_188, %c0_189] : memref<8x128xf32, #tpu.memory_space<vmem>>, vector<8x128xf32>
      tpu.vector_store %arg13[%c0_188, %c0_189], %546 {strides = array<i32>} : memref<8x128xf32, #tpu.memory_space<vmem>>, vector<8x128xf32>,
      %cst_190 = arith.constant 0.000000e+00 : f32
      %548 = vector.broadcast %cst_190 : f32 to vector<8x128xf32>
      %c0_191 = arith.constant 0 : index
      %c0_192 = arith.constant 0 : index
      %549 = vector.load %arg14[%c0_191, %c0_192] : memref<8x128xf32, #tpu.memory_space<vmem>>, vector<8x128xf32>
      tpu.vector_store %arg14[%c0_191, %c0_192], %548 {strides = array<i32>} : memref<8x128xf32, #tpu.memory_space<vmem>>, vector<8x128xf32>,
    } else {
    }
    %c0 = arith.constant 0 : index
    %c0_1 = arith.constant 0 : index
    %c0_2 = arith.constant 0 : index
    %3 = vector.load %arg2[%c0, %c0_1, %c0_2] : memref<8x8x128xbf16, #tpu.memory_space<vmem>>, vector<8x8x128xbf16>
    %4 = vector.shape_cast %3 : vector<8x8x128xbf16> to vector<64x128xbf16>
    %c0_3 = arith.constant 0 : index
    %c0_4 = arith.constant 0 : index
    %5 = vector.load %arg3[%c0_3, %c0_4] : memref<128x512xbf16, #tpu.memory_space<vmem>>, vector<128x512xbf16>
    %cst = arith.constant dense<0.000000e+00> : vector<64x512xf32>
    %6 = tpu.matmul %4, %5, %cst {dimension_numbers = #tpu.dot_dimension_numbers<[1], [0], [0], [1], [0, 0, 1, 1], [], []>} : vector<64x128xbf16>, vector<128x512xbf16>, vector<64x512xf32> -> vector<64x512xf32>
    %c0_5 = arith.constant 0 : index
    %c0_6 = arith.constant 0 : index
    %7 = vector.load %arg4[%c0_5, %c0_6] : memref<1x512xf32, #tpu.memory_space<vmem>>, vector<1x512xf32>
    %8 = vector.broadcast %7 : vector<1x512xf32> to vector<64x512xf32>
    %9 = arith.addf %6, %8 : vector<64x512xf32>
    %10 = vector.shape_cast %9 : vector<64x512xf32> to vector<8x8x512xf32>
    %c0_7 = arith.constant 0 : index
    %c0_8 = arith.constant 0 : index
    %c0_9 = arith.constant 0 : index
    %11 = vector.load %arg10[%c0_7, %c0_8, %c0_9] : memref<8x8x512xf32, #tpu.memory_space<vmem>>, vector<8x8x512xf32>
    tpu.vector_store %arg10[%c0_7, %c0_8, %c0_9], %10 {strides = array<i32>} : memref<8x8x512xf32, #tpu.memory_space<vmem>>, vector<8x8x512xf32>,
    %c0_10 = arith.constant 0 : index
    %c0_11 = arith.constant 0 : index
    %12 = vector.load %arg11[%c0_10, %c0_11] : memref<8x128xbf16, #tpu.memory_space<vmem>>, vector<8x128xbf16>
    %c0_12 = arith.constant 0 : index
    %c0_13 = arith.constant 0 : index
    %13 = vector.load %arg12[%c0_12, %c0_13] : memref<8x128xbf16, #tpu.memory_space<vmem>>, vector<8x128xbf16>
    %c0_14 = arith.constant 0 : index
    %c0_15 = arith.constant 0 : index
    %14 = vector.load %arg13[%c0_14, %c0_15] : memref<8x128xf32, #tpu.memory_space<vmem>>, vector<8x128xf32>
    %c0_16 = arith.constant 0 : index
    %c0_17 = arith.constant 0 : index
    %15 = vector.load %arg14[%c0_16, %c0_17] : memref<8x128xf32, #tpu.memory_space<vmem>>, vector<8x128xf32>
    %c0_18 = arith.constant 0 : index
    %c0_19 = arith.constant 0 : index
    %c0_20 = arith.constant 0 : index
    %16 = vector.load %arg10[%c0_18, %c0_19, %c0_20] : memref<8x8x512xf32, #tpu.memory_space<vmem>>, vector<1x8x512xf32>
    %17 = vector.shape_cast %16 : vector<1x8x512xf32> to vector<8x512xf32>
    %c0_21 = arith.constant 0 : index
    %c0_22 = arith.constant 0 : index
    %18 = vector.load %arg5[%c0_21, %c0_22] : memref<128x512xbf16, #tpu.memory_space<vmem>>, vector<128x512xbf16>
    %cst_23 = arith.constant dense<0.000000e+00> : vector<8x512xf32>
    %19 = tpu.matmul %12, %18, %cst_23 {dimension_numbers = #tpu.dot_dimension_numbers<[1], [0], [0], [1], [0, 0, 1, 1], [], []>} : vector<8x128xbf16>, vector<128x512xbf16>, vector<8x512xf32> -> vector<8x512xf32>
    %20 = arith.addf %17, %19 : vector<8x512xf32>
    %21 = vector.extract_strided_slice %20 {offsets = [0, 0], sizes = [8, 128], strides = [1, 1]} : vector<8x512xf32> to vector<8x128xf32>
    %22 = arith.negf %21 : vector<8x128xf32>
    %23 = math.exp %22 : vector<8x128xf32>
    %cst_24 = arith.constant 1.000000e+00 : f32
    %24 = vector.broadcast %cst_24 : f32 to vector<8x128xf32>
    %25 = arith.addf %24, %23 : vector<8x128xf32>
    %26 = arith.divf %24, %25 : vector<8x128xf32>
    %27 = vector.extract_strided_slice %20 {offsets = [0, 128], sizes = [8, 128], strides = [1, 1]} : vector<8x512xf32> to vector<8x128xf32>
    %28 = arith.negf %27 : vector<8x128xf32>
    %29 = math.exp %28 : vector<8x128xf32>
    %cst_25 = arith.constant 1.000000e+00 : f32
    %30 = vector.broadcast %cst_25 : f32 to vector<8x128xf32>
    %31 = arith.addf %30, %29 : vector<8x128xf32>
    %32 = arith.divf %30, %31 : vector<8x128xf32>
    %33 = vector.extract_strided_slice %20 {offsets = [0, 256], sizes = [8, 128], strides = [1, 1]} : vector<8x512xf32> to vector<8x128xf32>
    %34 = math.tanh %33 : vector<8x128xf32>
    %35 = vector.extract_strided_slice %20 {offsets = [0, 384], sizes = [8, 128], strides = [1, 1]} : vector<8x512xf32> to vector<8x128xf32>
    %36 = arith.negf %35 : vector<8x128xf32>
    %37 = math.exp %36 : vector<8x128xf32>
    %cst_26 = arith.constant 1.000000e+00 : f32
    %38 = vector.broadcast %cst_26 : f32 to vector<8x128xf32>
    %39 = arith.addf %38, %37 : vector<8x128xf32>
    %40 = arith.divf %38, %39 : vector<8x128xf32>
    %41 = arith.mulf %32, %14 : vector<8x128xf32>
    %42 = arith.mulf %26, %34 : vector<8x128xf32>
    %43 = arith.addf %41, %42 : vector<8x128xf32>
    %44 = math.tanh %43 : vector<8x128xf32>
    %45 = arith.mulf %40, %44 : vector<8x128xf32>
    %46 = arith.truncf %45 : vector<8x128xf32> to vector<8x128xbf16>
    %c0_27 = arith.constant 0 : index
    %c0_28 = arith.constant 0 : index
    %47 = vector.load %arg6[%c0_27, %c0_28] : memref<128x512xbf16, #tpu.memory_space<vmem>>, vector<128x512xbf16>
    %cst_29 = arith.constant dense<0.000000e+00> : vector<8x512xf32>
    %48 = tpu.matmul %46, %47, %cst_29 {dimension_numbers = #tpu.dot_dimension_numbers<[1], [0], [0], [1], [0, 0, 1, 1], [], []>} : vector<8x128xbf16>, vector<128x512xbf16>, vector<8x512xf32> -> vector<8x512xf32>
    %c0_30 = arith.constant 0 : index
    %c0_31 = arith.constant 0 : index
    %49 = vector.load %arg7[%c0_30, %c0_31] : memref<128x512xbf16, #tpu.memory_space<vmem>>, vector<128x512xbf16>
    %cst_32 = arith.constant dense<0.000000e+00> : vector<8x512xf32>
    %50 = tpu.matmul %13, %49, %cst_32 {dimension_numbers = #tpu.dot_dimension_numbers<[1], [0], [0], [1], [0, 0, 1, 1], [], []>} : vector<8x128xbf16>, vector<128x512xbf16>, vector<8x512xf32> -> vector<8x512xf32>
    %51 = arith.addf %48, %50 : vector<8x512xf32>
    %c0_33 = arith.constant 0 : index
    %c0_34 = arith.constant 0 : index
    %52 = vector.load %arg8[%c0_33, %c0_34] : memref<1x512xf32, #tpu.memory_space<vmem>>, vector<1x512xf32>
    %53 = vector.broadcast %52 : vector<1x512xf32> to vector<8x512xf32>
    %54 = arith.addf %51, %53 : vector<8x512xf32>
    %55 = vector.extract_strided_slice %54 {offsets = [0, 0], sizes = [8, 128], strides = [1, 1]} : vector<8x512xf32> to vector<8x128xf32>
    %56 = arith.negf %55 : vector<8x128xf32>
    %57 = math.exp %56 : vector<8x128xf32>
    %cst_35 = arith.constant 1.000000e+00 : f32
    %58 = vector.broadcast %cst_35 : f32 to vector<8x128xf32>
    %59 = arith.addf %58, %57 : vector<8x128xf32>
    %60 = arith.divf %58, %59 : vector<8x128xf32>
    %61 = vector.extract_strided_slice %54 {offsets = [0, 128], sizes = [8, 128], strides = [1, 1]} : vector<8x512xf32> to vector<8x128xf32>
    %62 = arith.negf %61 : vector<8x128xf32>
    %63 = math.exp %62 : vector<8x128xf32>
    %cst_36 = arith.constant 1.000000e+00 : f32
    %64 = vector.broadcast %cst_36 : f32 to vector<8x128xf32>
    %65 = arith.addf %64, %63 : vector<8x128xf32>
    %66 = arith.divf %64, %65 : vector<8x128xf32>
    %67 = vector.extract_strided_slice %54 {offsets = [0, 256], sizes = [8, 128], strides = [1, 1]} : vector<8x512xf32> to vector<8x128xf32>
    %68 = math.tanh %67 : vector<8x128xf32>
    %69 = vector.extract_strided_slice %54 {offsets = [0, 384], sizes = [8, 128], strides = [1, 1]} : vector<8x512xf32> to vector<8x128xf32>
    %70 = arith.negf %69 : vector<8x128xf32>
    %71 = math.exp %70 : vector<8x128xf32>
    %cst_37 = arith.constant 1.000000e+00 : f32
    %72 = vector.broadcast %cst_37 : f32 to vector<8x128xf32>
    %73 = arith.addf %72, %71 : vector<8x128xf32>
    %74 = arith.divf %72, %73 : vector<8x128xf32>
    %75 = arith.mulf %66, %15 : vector<8x128xf32>
    %76 = arith.mulf %60, %68 : vector<8x128xf32>
    %77 = arith.addf %75, %76 : vector<8x128xf32>
    %78 = math.tanh %77 : vector<8x128xf32>
    %79 = arith.mulf %74, %78 : vector<8x128xf32>
    %80 = arith.truncf %79 : vector<8x128xf32> to vector<8x128xbf16>
    %c1 = arith.constant 1 : index
    %c0_38 = arith.constant 0 : index
    %c0_39 = arith.constant 0 : index
    %81 = vector.load %arg10[%c1, %c0_38, %c0_39] : memref<8x8x512xf32, #tpu.memory_space<vmem>>, vector<1x8x512xf32>
    %82 = vector.shape_cast %81 : vector<1x8x512xf32> to vector<8x512xf32>
    %c0_40 = arith.constant 0 : index
    %c0_41 = arith.constant 0 : index
    %83 = vector.load %arg5[%c0_40, %c0_41] : memref<128x512xbf16, #tpu.memory_space<vmem>>, vector<128x512xbf16>
    %cst_42 = arith.constant dense<0.000000e+00> : vector<8x512xf32>
    %84 = tpu.matmul %46, %83, %cst_42 {dimension_numbers = #tpu.dot_dimension_numbers<[1], [0], [0], [1], [0, 0, 1, 1], [], []>} : vector<8x128xbf16>, vector<128x512xbf16>, vector<8x512xf32> -> vector<8x512xf32>
    %85 = arith.addf %82, %84 : vector<8x512xf32>
    %86 = vector.extract_strided_slice %85 {offsets = [0, 0], sizes = [8, 128], strides = [1, 1]} : vector<8x512xf32> to vector<8x128xf32>
    %87 = arith.negf %86 : vector<8x128xf32>
    %88 = math.exp %87 : vector<8x128xf32>
    %cst_43 = arith.constant 1.000000e+00 : f32
    %89 = vector.broadcast %cst_43 : f32 to vector<8x128xf32>
    %90 = arith.addf %89, %88 : vector<8x128xf32>
    %91 = arith.divf %89, %90 : vector<8x128xf32>
    %92 = vector.extract_strided_slice %85 {offsets = [0, 128], sizes = [8, 128], strides = [1, 1]} : vector<8x512xf32> to vector<8x128xf32>
    %93 = arith.negf %92 : vector<8x128xf32>
    %94 = math.exp %93 : vector<8x128xf32>
    %cst_44 = arith.constant 1.000000e+00 : f32
    %95 = vector.broadcast %cst_44 : f32 to vector<8x128xf32>
    %96 = arith.addf %95, %94 : vector<8x128xf32>
    %97 = arith.divf %95, %96 : vector<8x128xf32>
    %98 = vector.extract_strided_slice %85 {offsets = [0, 256], sizes = [8, 128], strides = [1, 1]} : vector<8x512xf32> to vector<8x128xf32>
    %99 = math.tanh %98 : vector<8x128xf32>
    %100 = vector.extract_strided_slice %85 {offsets = [0, 384], sizes = [8, 128], strides = [1, 1]} : vector<8x512xf32> to vector<8x128xf32>
    %101 = arith.negf %100 : vector<8x128xf32>
    %102 = math.exp %101 : vector<8x128xf32>
    %cst_45 = arith.constant 1.000000e+00 : f32
    %103 = vector.broadcast %cst_45 : f32 to vector<8x128xf32>
    %104 = arith.addf %103, %102 : vector<8x128xf32>
    %105 = arith.divf %103, %104 : vector<8x128xf32>
    %106 = arith.mulf %97, %43 : vector<8x128xf32>
    %107 = arith.mulf %91, %99 : vector<8x128xf32>
    %108 = arith.addf %106, %107 : vector<8x128xf32>
    %109 = math.tanh %108 : vector<8x128xf32>
    %110 = arith.mulf %105, %109 : vector<8x128xf32>
    %111 = arith.truncf %110 : vector<8x128xf32> to vector<8x128xbf16>
    %c0_46 = arith.constant 0 : index
    %c0_47 = arith.constant 0 : index
    %112 = vector.load %arg6[%c0_46, %c0_47] : memref<128x512xbf16, #tpu.memory_space<vmem>>, vector<128x512xbf16>
    %cst_48 = arith.constant dense<0.000000e+00> : vector<8x512xf32>
    %113 = tpu.matmul %111, %112, %cst_48 {dimension_numbers = #tpu.dot_dimension_numbers<[1], [0], [0], [1], [0, 0, 1, 1], [], []>} : vector<8x128xbf16>, vector<128x512xbf16>, vector<8x512xf32> -> vector<8x512xf32>
    %c0_49 = arith.constant 0 : index
    %c0_50 = arith.constant 0 : index
    %114 = vector.load %arg7[%c0_49, %c0_50] : memref<128x512xbf16, #tpu.memory_space<vmem>>, vector<128x512xbf16>
    %cst_51 = arith.constant dense<0.000000e+00> : vector<8x512xf32>
    %115 = tpu.matmul %80, %114, %cst_51 {dimension_numbers = #tpu.dot_dimension_numbers<[1], [0], [0], [1], [0, 0, 1, 1], [], []>} : vector<8x128xbf16>, vector<128x512xbf16>, vector<8x512xf32> -> vector<8x512xf32>
    %116 = arith.addf %113, %115 : vector<8x512xf32>
    %c0_52 = arith.constant 0 : index
    %c0_53 = arith.constant 0 : index
    %117 = vector.load %arg8[%c0_52, %c0_53] : memref<1x512xf32, #tpu.memory_space<vmem>>, vector<1x512xf32>
    %118 = vector.broadcast %117 : vector<1x512xf32> to vector<8x512xf32>
    %119 = arith.addf %116, %118 : vector<8x512xf32>
    %120 = vector.extract_strided_slice %119 {offsets = [0, 0], sizes = [8, 128], strides = [1, 1]} : vector<8x512xf32> to vector<8x128xf32>
    %121 = arith.negf %120 : vector<8x128xf32>
    %122 = math.exp %121 : vector<8x128xf32>
    %cst_54 = arith.constant 1.000000e+00 : f32
    %123 = vector.broadcast %cst_54 : f32 to vector<8x128xf32>
    %124 = arith.addf %123, %122 : vector<8x128xf32>
    %125 = arith.divf %123, %124 : vector<8x128xf32>
    %126 = vector.extract_strided_slice %119 {offsets = [0, 128], sizes = [8, 128], strides = [1, 1]} : vector<8x512xf32> to vector<8x128xf32>
    %127 = arith.negf %126 : vector<8x128xf32>
    %128 = math.exp %127 : vector<8x128xf32>
    %cst_55 = arith.constant 1.000000e+00 : f32
    %129 = vector.broadcast %cst_55 : f32 to vector<8x128xf32>
    %130 = arith.addf %129, %128 : vector<8x128xf32>
    %131 = arith.divf %129, %130 : vector<8x128xf32>
    %132 = vector.extract_strided_slice %119 {offsets = [0, 256], sizes = [8, 128], strides = [1, 1]} : vector<8x512xf32> to vector<8x128xf32>
    %133 = math.tanh %132 : vector<8x128xf32>
    %134 = vector.extract_strided_slice %119 {offsets = [0, 384], sizes = [8, 128], strides = [1, 1]} : vector<8x512xf32> to vector<8x128xf32>
    %135 = arith.negf %134 : vector<8x128xf32>
    %136 = math.exp %135 : vector<8x128xf32>
    %cst_56 = arith.constant 1.000000e+00 : f32
    %137 = vector.broadcast %cst_56 : f32 to vector<8x128xf32>
    %138 = arith.addf %137, %136 : vector<8x128xf32>
    %139 = arith.divf %137, %138 : vector<8x128xf32>
    %140 = arith.mulf %131, %77 : vector<8x128xf32>
    %141 = arith.mulf %125, %133 : vector<8x128xf32>
    %142 = arith.addf %140, %141 : vector<8x128xf32>
    %143 = math.tanh %142 : vector<8x128xf32>
    %144 = arith.mulf %139, %143 : vector<8x128xf32>
    %145 = arith.truncf %144 : vector<8x128xf32> to vector<8x128xbf16>
    %c2 = arith.constant 2 : index
    %c0_57 = arith.constant 0 : index
    %c0_58 = arith.constant 0 : index
    %146 = vector.load %arg10[%c2, %c0_57, %c0_58] : memref<8x8x512xf32, #tpu.memory_space<vmem>>, vector<1x8x512xf32>
    %147 = vector.shape_cast %146 : vector<1x8x512xf32> to vector<8x512xf32>
    %c0_59 = arith.constant 0 : index
    %c0_60 = arith.constant 0 : index
    %148 = vector.load %arg5[%c0_59, %c0_60] : memref<128x512xbf16, #tpu.memory_space<vmem>>, vector<128x512xbf16>
    %cst_61 = arith.constant dense<0.000000e+00> : vector<8x512xf32>
    %149 = tpu.matmul %111, %148, %cst_61 {dimension_numbers = #tpu.dot_dimension_numbers<[1], [0], [0], [1], [0, 0, 1, 1], [], []>} : vector<8x128xbf16>, vector<128x512xbf16>, vector<8x512xf32> -> vector<8x512xf32>
    %150 = arith.addf %147, %149 : vector<8x512xf32>
    %151 = vector.extract_strided_slice %150 {offsets = [0, 0], sizes = [8, 128], strides = [1, 1]} : vector<8x512xf32> to vector<8x128xf32>
    %152 = arith.negf %151 : vector<8x128xf32>
    %153 = math.exp %152 : vector<8x128xf32>
    %cst_62 = arith.constant 1.000000e+00 : f32
    %154 = vector.broadcast %cst_62 : f32 to vector<8x128xf32>
    %155 = arith.addf %154, %153 : vector<8x128xf32>
    %156 = arith.divf %154, %155 : vector<8x128xf32>
    %157 = vector.extract_strided_slice %150 {offsets = [0, 128], sizes = [8, 128], strides = [1, 1]} : vector<8x512xf32> to vector<8x128xf32>
    %158 = arith.negf %157 : vector<8x128xf32>
    %159 = math.exp %158 : vector<8x128xf32>
    %cst_63 = arith.constant 1.000000e+00 : f32
    %160 = vector.broadcast %cst_63 : f32 to vector<8x128xf32>
    %161 = arith.addf %160, %159 : vector<8x128xf32>
    %162 = arith.divf %160, %161 : vector<8x128xf32>
    %163 = vector.extract_strided_slice %150 {offsets = [0, 256], sizes = [8, 128], strides = [1, 1]} : vector<8x512xf32> to vector<8x128xf32>
    %164 = math.tanh %163 : vector<8x128xf32>
    %165 = vector.extract_strided_slice %150 {offsets = [0, 384], sizes = [8, 128], strides = [1, 1]} : vector<8x512xf32> to vector<8x128xf32>
    %166 = arith.negf %165 : vector<8x128xf32>
    %167 = math.exp %166 : vector<8x128xf32>
    %cst_64 = arith.constant 1.000000e+00 : f32
    %168 = vector.broadcast %cst_64 : f32 to vector<8x128xf32>
    %169 = arith.addf %168, %167 : vector<8x128xf32>
    %170 = arith.divf %168, %169 : vector<8x128xf32>
    %171 = arith.mulf %162, %108 : vector<8x128xf32>
    %172 = arith.mulf %156, %164 : vector<8x128xf32>
    %173 = arith.addf %171, %172 : vector<8x128xf32>
    %174 = math.tanh %173 : vector<8x128xf32>
    %175 = arith.mulf %170, %174 : vector<8x128xf32>
    %176 = arith.truncf %175 : vector<8x128xf32> to vector<8x128xbf16>
    %c0_65 = arith.constant 0 : index
    %c0_66 = arith.constant 0 : index
    %177 = vector.load %arg6[%c0_65, %c0_66] : memref<128x512xbf16, #tpu.memory_space<vmem>>, vector<128x512xbf16>
    %cst_67 = arith.constant dense<0.000000e+00> : vector<8x512xf32>
    %178 = tpu.matmul %176, %177, %cst_67 {dimension_numbers = #tpu.dot_dimension_numbers<[1], [0], [0], [1], [0, 0, 1, 1], [], []>} : vector<8x128xbf16>, vector<128x512xbf16>, vector<8x512xf32> -> vector<8x512xf32>
    %c0_68 = arith.constant 0 : index
    %c0_69 = arith.constant 0 : index
    %179 = vector.load %arg7[%c0_68, %c0_69] : memref<128x512xbf16, #tpu.memory_space<vmem>>, vector<128x512xbf16>
    %cst_70 = arith.constant dense<0.000000e+00> : vector<8x512xf32>
    %180 = tpu.matmul %145, %179, %cst_70 {dimension_numbers = #tpu.dot_dimension_numbers<[1], [0], [0], [1], [0, 0, 1, 1], [], []>} : vector<8x128xbf16>, vector<128x512xbf16>, vector<8x512xf32> -> vector<8x512xf32>
    %181 = arith.addf %178, %180 : vector<8x512xf32>
    %c0_71 = arith.constant 0 : index
    %c0_72 = arith.constant 0 : index
    %182 = vector.load %arg8[%c0_71, %c0_72] : memref<1x512xf32, #tpu.memory_space<vmem>>, vector<1x512xf32>
    %183 = vector.broadcast %182 : vector<1x512xf32> to vector<8x512xf32>
    %184 = arith.addf %181, %183 : vector<8x512xf32>
    %185 = vector.extract_strided_slice %184 {offsets = [0, 0], sizes = [8, 128], strides = [1, 1]} : vector<8x512xf32> to vector<8x128xf32>
    %186 = arith.negf %185 : vector<8x128xf32>
    %187 = math.exp %186 : vector<8x128xf32>
    %cst_73 = arith.constant 1.000000e+00 : f32
    %188 = vector.broadcast %cst_73 : f32 to vector<8x128xf32>
    %189 = arith.addf %188, %187 : vector<8x128xf32>
    %190 = arith.divf %188, %189 : vector<8x128xf32>
    %191 = vector.extract_strided_slice %184 {offsets = [0, 128], sizes = [8, 128], strides = [1, 1]} : vector<8x512xf32> to vector<8x128xf32>
    %192 = arith.negf %191 : vector<8x128xf32>
    %193 = math.exp %192 : vector<8x128xf32>
    %cst_74 = arith.constant 1.000000e+00 : f32
    %194 = vector.broadcast %cst_74 : f32 to vector<8x128xf32>
    %195 = arith.addf %194, %193 : vector<8x128xf32>
    %196 = arith.divf %194, %195 : vector<8x128xf32>
    %197 = vector.extract_strided_slice %184 {offsets = [0, 256], sizes = [8, 128], strides = [1, 1]} : vector<8x512xf32> to vector<8x128xf32>
    %198 = math.tanh %197 : vector<8x128xf32>
    %199 = vector.extract_strided_slice %184 {offsets = [0, 384], sizes = [8, 128], strides = [1, 1]} : vector<8x512xf32> to vector<8x128xf32>
    %200 = arith.negf %199 : vector<8x128xf32>
    %201 = math.exp %200 : vector<8x128xf32>
    %cst_75 = arith.constant 1.000000e+00 : f32
    %202 = vector.broadcast %cst_75 : f32 to vector<8x128xf32>
    %203 = arith.addf %202, %201 : vector<8x128xf32>
    %204 = arith.divf %202, %203 : vector<8x128xf32>
    %205 = arith.mulf %196, %142 : vector<8x128xf32>
    %206 = arith.mulf %190, %198 : vector<8x128xf32>
    %207 = arith.addf %205, %206 : vector<8x128xf32>
    %208 = math.tanh %207 : vector<8x128xf32>
    %209 = arith.mulf %204, %208 : vector<8x128xf32>
    %210 = arith.truncf %209 : vector<8x128xf32> to vector<8x128xbf16>
    %c3 = arith.constant 3 : index
    %c0_76 = arith.constant 0 : index
    %c0_77 = arith.constant 0 : index
    %211 = vector.load %arg10[%c3, %c0_76, %c0_77] : memref<8x8x512xf32, #tpu.memory_space<vmem>>, vector<1x8x512xf32>
    %212 = vector.shape_cast %211 : vector<1x8x512xf32> to vector<8x512xf32>
    %c0_78 = arith.constant 0 : index
    %c0_79 = arith.constant 0 : index
    %213 = vector.load %arg5[%c0_78, %c0_79] : memref<128x512xbf16, #tpu.memory_space<vmem>>, vector<128x512xbf16>
    %cst_80 = arith.constant dense<0.000000e+00> : vector<8x512xf32>
    %214 = tpu.matmul %176, %213, %cst_80 {dimension_numbers = #tpu.dot_dimension_numbers<[1], [0], [0], [1], [0, 0, 1, 1], [], []>} : vector<8x128xbf16>, vector<128x512xbf16>, vector<8x512xf32> -> vector<8x512xf32>
    %215 = arith.addf %212, %214 : vector<8x512xf32>
    %216 = vector.extract_strided_slice %215 {offsets = [0, 0], sizes = [8, 128], strides = [1, 1]} : vector<8x512xf32> to vector<8x128xf32>
    %217 = arith.negf %216 : vector<8x128xf32>
    %218 = math.exp %217 : vector<8x128xf32>
    %cst_81 = arith.constant 1.000000e+00 : f32
    %219 = vector.broadcast %cst_81 : f32 to vector<8x128xf32>
    %220 = arith.addf %219, %218 : vector<8x128xf32>
    %221 = arith.divf %219, %220 : vector<8x128xf32>
    %222 = vector.extract_strided_slice %215 {offsets = [0, 128], sizes = [8, 128], strides = [1, 1]} : vector<8x512xf32> to vector<8x128xf32>
    %223 = arith.negf %222 : vector<8x128xf32>
    %224 = math.exp %223 : vector<8x128xf32>
    %cst_82 = arith.constant 1.000000e+00 : f32
    %225 = vector.broadcast %cst_82 : f32 to vector<8x128xf32>
    %226 = arith.addf %225, %224 : vector<8x128xf32>
    %227 = arith.divf %225, %226 : vector<8x128xf32>
    %228 = vector.extract_strided_slice %215 {offsets = [0, 256], sizes = [8, 128], strides = [1, 1]} : vector<8x512xf32> to vector<8x128xf32>
    %229 = math.tanh %228 : vector<8x128xf32>
    %230 = vector.extract_strided_slice %215 {offsets = [0, 384], sizes = [8, 128], strides = [1, 1]} : vector<8x512xf32> to vector<8x128xf32>
    %231 = arith.negf %230 : vector<8x128xf32>
    %232 = math.exp %231 : vector<8x128xf32>
    %cst_83 = arith.constant 1.000000e+00 : f32
    %233 = vector.broadcast %cst_83 : f32 to vector<8x128xf32>
    %234 = arith.addf %233, %232 : vector<8x128xf32>
    %235 = arith.divf %233, %234 : vector<8x128xf32>
    %236 = arith.mulf %227, %173 : vector<8x128xf32>
    %237 = arith.mulf %221, %229 : vector<8x128xf32>
    %238 = arith.addf %236, %237 : vector<8x128xf32>
    %239 = math.tanh %238 : vector<8x128xf32>
    %240 = arith.mulf %235, %239 : vector<8x128xf32>
    %241 = arith.truncf %240 : vector<8x128xf32> to vector<8x128xbf16>
    %c0_84 = arith.constant 0 : index
    %c0_85 = arith.constant 0 : index
    %242 = vector.load %arg6[%c0_84, %c0_85] : memref<128x512xbf16, #tpu.memory_space<vmem>>, vector<128x512xbf16>
    %cst_86 = arith.constant dense<0.000000e+00> : vector<8x512xf32>
    %243 = tpu.matmul %241, %242, %cst_86 {dimension_numbers = #tpu.dot_dimension_numbers<[1], [0], [0], [1], [0, 0, 1, 1], [], []>} : vector<8x128xbf16>, vector<128x512xbf16>, vector<8x512xf32> -> vector<8x512xf32>
    %c0_87 = arith.constant 0 : index
    %c0_88 = arith.constant 0 : index
    %244 = vector.load %arg7[%c0_87, %c0_88] : memref<128x512xbf16, #tpu.memory_space<vmem>>, vector<128x512xbf16>
    %cst_89 = arith.constant dense<0.000000e+00> : vector<8x512xf32>
    %245 = tpu.matmul %210, %244, %cst_89 {dimension_numbers = #tpu.dot_dimension_numbers<[1], [0], [0], [1], [0, 0, 1, 1], [], []>} : vector<8x128xbf16>, vector<128x512xbf16>, vector<8x512xf32> -> vector<8x512xf32>
    %246 = arith.addf %243, %245 : vector<8x512xf32>
    %c0_90 = arith.constant 0 : index
    %c0_91 = arith.constant 0 : index
    %247 = vector.load %arg8[%c0_90, %c0_91] : memref<1x512xf32, #tpu.memory_space<vmem>>, vector<1x512xf32>
    %248 = vector.broadcast %247 : vector<1x512xf32> to vector<8x512xf32>
    %249 = arith.addf %246, %248 : vector<8x512xf32>
    %250 = vector.extract_strided_slice %249 {offsets = [0, 0], sizes = [8, 128], strides = [1, 1]} : vector<8x512xf32> to vector<8x128xf32>
    %251 = arith.negf %250 : vector<8x128xf32>
    %252 = math.exp %251 : vector<8x128xf32>
    %cst_92 = arith.constant 1.000000e+00 : f32
    %253 = vector.broadcast %cst_92 : f32 to vector<8x128xf32>
    %254 = arith.addf %253, %252 : vector<8x128xf32>
    %255 = arith.divf %253, %254 : vector<8x128xf32>
    %256 = vector.extract_strided_slice %249 {offsets = [0, 128], sizes = [8, 128], strides = [1, 1]} : vector<8x512xf32> to vector<8x128xf32>
    %257 = arith.negf %256 : vector<8x128xf32>
    %258 = math.exp %257 : vector<8x128xf32>
    %cst_93 = arith.constant 1.000000e+00 : f32
    %259 = vector.broadcast %cst_93 : f32 to vector<8x128xf32>
    %260 = arith.addf %259, %258 : vector<8x128xf32>
    %261 = arith.divf %259, %260 : vector<8x128xf32>
    %262 = vector.extract_strided_slice %249 {offsets = [0, 256], sizes = [8, 128], strides = [1, 1]} : vector<8x512xf32> to vector<8x128xf32>
    %263 = math.tanh %262 : vector<8x128xf32>
    %264 = vector.extract_strided_slice %249 {offsets = [0, 384], sizes = [8, 128], strides = [1, 1]} : vector<8x512xf32> to vector<8x128xf32>
    %265 = arith.negf %264 : vector<8x128xf32>
    %266 = math.exp %265 : vector<8x128xf32>
    %cst_94 = arith.constant 1.000000e+00 : f32
    %267 = vector.broadcast %cst_94 : f32 to vector<8x128xf32>
    %268 = arith.addf %267, %266 : vector<8x128xf32>
    %269 = arith.divf %267, %268 : vector<8x128xf32>
    %270 = arith.mulf %261, %207 : vector<8x128xf32>
    %271 = arith.mulf %255, %263 : vector<8x128xf32>
    %272 = arith.addf %270, %271 : vector<8x128xf32>
    %273 = math.tanh %272 : vector<8x128xf32>
    %274 = arith.mulf %269, %273 : vector<8x128xf32>
    %275 = arith.truncf %274 : vector<8x128xf32> to vector<8x128xbf16>
    %c4 = arith.constant 4 : index
    %c0_95 = arith.constant 0 : index
    %c0_96 = arith.constant 0 : index
    %276 = vector.load %arg10[%c4, %c0_95, %c0_96] : memref<8x8x512xf32, #tpu.memory_space<vmem>>, vector<1x8x512xf32>
    %277 = vector.shape_cast %276 : vector<1x8x512xf32> to vector<8x512xf32>
    %c0_97 = arith.constant 0 : index
    %c0_98 = arith.constant 0 : index
    %278 = vector.load %arg5[%c0_97, %c0_98] : memref<128x512xbf16, #tpu.memory_space<vmem>>, vector<128x512xbf16>
    %cst_99 = arith.constant dense<0.000000e+00> : vector<8x512xf32>
    %279 = tpu.matmul %241, %278, %cst_99 {dimension_numbers = #tpu.dot_dimension_numbers<[1], [0], [0], [1], [0, 0, 1, 1], [], []>} : vector<8x128xbf16>, vector<128x512xbf16>, vector<8x512xf32> -> vector<8x512xf32>
    %280 = arith.addf %277, %279 : vector<8x512xf32>
    %281 = vector.extract_strided_slice %280 {offsets = [0, 0], sizes = [8, 128], strides = [1, 1]} : vector<8x512xf32> to vector<8x128xf32>
    %282 = arith.negf %281 : vector<8x128xf32>
    %283 = math.exp %282 : vector<8x128xf32>
    %cst_100 = arith.constant 1.000000e+00 : f32
    %284 = vector.broadcast %cst_100 : f32 to vector<8x128xf32>
    %285 = arith.addf %284, %283 : vector<8x128xf32>
    %286 = arith.divf %284, %285 : vector<8x128xf32>
    %287 = vector.extract_strided_slice %280 {offsets = [0, 128], sizes = [8, 128], strides = [1, 1]} : vector<8x512xf32> to vector<8x128xf32>
    %288 = arith.negf %287 : vector<8x128xf32>
    %289 = math.exp %288 : vector<8x128xf32>
    %cst_101 = arith.constant 1.000000e+00 : f32
    %290 = vector.broadcast %cst_101 : f32 to vector<8x128xf32>
    %291 = arith.addf %290, %289 : vector<8x128xf32>
    %292 = arith.divf %290, %291 : vector<8x128xf32>
    %293 = vector.extract_strided_slice %280 {offsets = [0, 256], sizes = [8, 128], strides = [1, 1]} : vector<8x512xf32> to vector<8x128xf32>
    %294 = math.tanh %293 : vector<8x128xf32>
    %295 = vector.extract_strided_slice %280 {offsets = [0, 384], sizes = [8, 128], strides = [1, 1]} : vector<8x512xf32> to vector<8x128xf32>
    %296 = arith.negf %295 : vector<8x128xf32>
    %297 = math.exp %296 : vector<8x128xf32>
    %cst_102 = arith.constant 1.000000e+00 : f32
    %298 = vector.broadcast %cst_102 : f32 to vector<8x128xf32>
    %299 = arith.addf %298, %297 : vector<8x128xf32>
    %300 = arith.divf %298, %299 : vector<8x128xf32>
    %301 = arith.mulf %292, %238 : vector<8x128xf32>
    %302 = arith.mulf %286, %294 : vector<8x128xf32>
    %303 = arith.addf %301, %302 : vector<8x128xf32>
    %304 = math.tanh %303 : vector<8x128xf32>
    %305 = arith.mulf %300, %304 : vector<8x128xf32>
    %306 = arith.truncf %305 : vector<8x128xf32> to vector<8x128xbf16>
    %c0_103 = arith.constant 0 : index
    %c0_104 = arith.constant 0 : index
    %307 = vector.load %arg6[%c0_103, %c0_104] : memref<128x512xbf16, #tpu.memory_space<vmem>>, vector<128x512xbf16>
    %cst_105 = arith.constant dense<0.000000e+00> : vector<8x512xf32>
    %308 = tpu.matmul %306, %307, %cst_105 {dimension_numbers = #tpu.dot_dimension_numbers<[1], [0], [0], [1], [0, 0, 1, 1], [], []>} : vector<8x128xbf16>, vector<128x512xbf16>, vector<8x512xf32> -> vector<8x512xf32>
    %c0_106 = arith.constant 0 : index
    %c0_107 = arith.constant 0 : index
    %309 = vector.load %arg7[%c0_106, %c0_107] : memref<128x512xbf16, #tpu.memory_space<vmem>>, vector<128x512xbf16>
    %cst_108 = arith.constant dense<0.000000e+00> : vector<8x512xf32>
    %310 = tpu.matmul %275, %309, %cst_108 {dimension_numbers = #tpu.dot_dimension_numbers<[1], [0], [0], [1], [0, 0, 1, 1], [], []>} : vector<8x128xbf16>, vector<128x512xbf16>, vector<8x512xf32> -> vector<8x512xf32>
    %311 = arith.addf %308, %310 : vector<8x512xf32>
    %c0_109 = arith.constant 0 : index
    %c0_110 = arith.constant 0 : index
    %312 = vector.load %arg8[%c0_109, %c0_110] : memref<1x512xf32, #tpu.memory_space<vmem>>, vector<1x512xf32>
    %313 = vector.broadcast %312 : vector<1x512xf32> to vector<8x512xf32>
    %314 = arith.addf %311, %313 : vector<8x512xf32>
    %315 = vector.extract_strided_slice %314 {offsets = [0, 0], sizes = [8, 128], strides = [1, 1]} : vector<8x512xf32> to vector<8x128xf32>
    %316 = arith.negf %315 : vector<8x128xf32>
    %317 = math.exp %316 : vector<8x128xf32>
    %cst_111 = arith.constant 1.000000e+00 : f32
    %318 = vector.broadcast %cst_111 : f32 to vector<8x128xf32>
    %319 = arith.addf %318, %317 : vector<8x128xf32>
    %320 = arith.divf %318, %319 : vector<8x128xf32>
    %321 = vector.extract_strided_slice %314 {offsets = [0, 128], sizes = [8, 128], strides = [1, 1]} : vector<8x512xf32> to vector<8x128xf32>
    %322 = arith.negf %321 : vector<8x128xf32>
    %323 = math.exp %322 : vector<8x128xf32>
    %cst_112 = arith.constant 1.000000e+00 : f32
    %324 = vector.broadcast %cst_112 : f32 to vector<8x128xf32>
    %325 = arith.addf %324, %323 : vector<8x128xf32>
    %326 = arith.divf %324, %325 : vector<8x128xf32>
    %327 = vector.extract_strided_slice %314 {offsets = [0, 256], sizes = [8, 128], strides = [1, 1]} : vector<8x512xf32> to vector<8x128xf32>
    %328 = math.tanh %327 : vector<8x128xf32>
    %329 = vector.extract_strided_slice %314 {offsets = [0, 384], sizes = [8, 128], strides = [1, 1]} : vector<8x512xf32> to vector<8x128xf32>
    %330 = arith.negf %329 : vector<8x128xf32>
    %331 = math.exp %330 : vector<8x128xf32>
    %cst_113 = arith.constant 1.000000e+00 : f32
    %332 = vector.broadcast %cst_113 : f32 to vector<8x128xf32>
    %333 = arith.addf %332, %331 : vector<8x128xf32>
    %334 = arith.divf %332, %333 : vector<8x128xf32>
    %335 = arith.mulf %326, %272 : vector<8x128xf32>
    %336 = arith.mulf %320, %328 : vector<8x128xf32>
    %337 = arith.addf %335, %336 : vector<8x128xf32>
    %338 = math.tanh %337 : vector<8x128xf32>
    %339 = arith.mulf %334, %338 : vector<8x128xf32>
    %340 = arith.truncf %339 : vector<8x128xf32> to vector<8x128xbf16>
    %c5 = arith.constant 5 : index
    %c0_114 = arith.constant 0 : index
    %c0_115 = arith.constant 0 : index
    %341 = vector.load %arg10[%c5, %c0_114, %c0_115] : memref<8x8x512xf32, #tpu.memory_space<vmem>>, vector<1x8x512xf32>
    %342 = vector.shape_cast %341 : vector<1x8x512xf32> to vector<8x512xf32>
    %c0_116 = arith.constant 0 : index
    %c0_117 = arith.constant 0 : index
    %343 = vector.load %arg5[%c0_116, %c0_117] : memref<128x512xbf16, #tpu.memory_space<vmem>>, vector<128x512xbf16>
    %cst_118 = arith.constant dense<0.000000e+00> : vector<8x512xf32>
    %344 = tpu.matmul %306, %343, %cst_118 {dimension_numbers = #tpu.dot_dimension_numbers<[1], [0], [0], [1], [0, 0, 1, 1], [], []>} : vector<8x128xbf16>, vector<128x512xbf16>, vector<8x512xf32> -> vector<8x512xf32>
    %345 = arith.addf %342, %344 : vector<8x512xf32>
    %346 = vector.extract_strided_slice %345 {offsets = [0, 0], sizes = [8, 128], strides = [1, 1]} : vector<8x512xf32> to vector<8x128xf32>
    %347 = arith.negf %346 : vector<8x128xf32>
    %348 = math.exp %347 : vector<8x128xf32>
    %cst_119 = arith.constant 1.000000e+00 : f32
    %349 = vector.broadcast %cst_119 : f32 to vector<8x128xf32>
    %350 = arith.addf %349, %348 : vector<8x128xf32>
    %351 = arith.divf %349, %350 : vector<8x128xf32>
    %352 = vector.extract_strided_slice %345 {offsets = [0, 128], sizes = [8, 128], strides = [1, 1]} : vector<8x512xf32> to vector<8x128xf32>
    %353 = arith.negf %352 : vector<8x128xf32>
    %354 = math.exp %353 : vector<8x128xf32>
    %cst_120 = arith.constant 1.000000e+00 : f32
    %355 = vector.broadcast %cst_120 : f32 to vector<8x128xf32>
    %356 = arith.addf %355, %354 : vector<8x128xf32>
    %357 = arith.divf %355, %356 : vector<8x128xf32>
    %358 = vector.extract_strided_slice %345 {offsets = [0, 256], sizes = [8, 128], strides = [1, 1]} : vector<8x512xf32> to vector<8x128xf32>
    %359 = math.tanh %358 : vector<8x128xf32>
    %360 = vector.extract_strided_slice %345 {offsets = [0, 384], sizes = [8, 128], strides = [1, 1]} : vector<8x512xf32> to vector<8x128xf32>
    %361 = arith.negf %360 : vector<8x128xf32>
    %362 = math.exp %361 : vector<8x128xf32>
    %cst_121 = arith.constant 1.000000e+00 : f32
    %363 = vector.broadcast %cst_121 : f32 to vector<8x128xf32>
    %364 = arith.addf %363, %362 : vector<8x128xf32>
    %365 = arith.divf %363, %364 : vector<8x128xf32>
    %366 = arith.mulf %357, %303 : vector<8x128xf32>
    %367 = arith.mulf %351, %359 : vector<8x128xf32>
    %368 = arith.addf %366, %367 : vector<8x128xf32>
    %369 = math.tanh %368 : vector<8x128xf32>
    %370 = arith.mulf %365, %369 : vector<8x128xf32>
    %371 = arith.truncf %370 : vector<8x128xf32> to vector<8x128xbf16>
    %c0_122 = arith.constant 0 : index
    %c0_123 = arith.constant 0 : index
    %372 = vector.load %arg6[%c0_122, %c0_123] : memref<128x512xbf16, #tpu.memory_space<vmem>>, vector<128x512xbf16>
    %cst_124 = arith.constant dense<0.000000e+00> : vector<8x512xf32>
    %373 = tpu.matmul %371, %372, %cst_124 {dimension_numbers = #tpu.dot_dimension_numbers<[1], [0], [0], [1], [0, 0, 1, 1], [], []>} : vector<8x128xbf16>, vector<128x512xbf16>, vector<8x512xf32> -> vector<8x512xf32>
    %c0_125 = arith.constant 0 : index
    %c0_126 = arith.constant 0 : index
    %374 = vector.load %arg7[%c0_125, %c0_126] : memref<128x512xbf16, #tpu.memory_space<vmem>>, vector<128x512xbf16>
    %cst_127 = arith.constant dense<0.000000e+00> : vector<8x512xf32>
    %375 = tpu.matmul %340, %374, %cst_127 {dimension_numbers = #tpu.dot_dimension_numbers<[1], [0], [0], [1], [0, 0, 1, 1], [], []>} : vector<8x128xbf16>, vector<128x512xbf16>, vector<8x512xf32> -> vector<8x512xf32>
    %376 = arith.addf %373, %375 : vector<8x512xf32>
    %c0_128 = arith.constant 0 : index
    %c0_129 = arith.constant 0 : index
    %377 = vector.load %arg8[%c0_128, %c0_129] : memref<1x512xf32, #tpu.memory_space<vmem>>, vector<1x512xf32>
    %378 = vector.broadcast %377 : vector<1x512xf32> to vector<8x512xf32>
    %379 = arith.addf %376, %378 : vector<8x512xf32>
    %380 = vector.extract_strided_slice %379 {offsets = [0, 0], sizes = [8, 128], strides = [1, 1]} : vector<8x512xf32> to vector<8x128xf32>
    %381 = arith.negf %380 : vector<8x128xf32>
    %382 = math.exp %381 : vector<8x128xf32>
    %cst_130 = arith.constant 1.000000e+00 : f32
    %383 = vector.broadcast %cst_130 : f32 to vector<8x128xf32>
    %384 = arith.addf %383, %382 : vector<8x128xf32>
    %385 = arith.divf %383, %384 : vector<8x128xf32>
    %386 = vector.extract_strided_slice %379 {offsets = [0, 128], sizes = [8, 128], strides = [1, 1]} : vector<8x512xf32> to vector<8x128xf32>
    %387 = arith.negf %386 : vector<8x128xf32>
    %388 = math.exp %387 : vector<8x128xf32>
    %cst_131 = arith.constant 1.000000e+00 : f32
    %389 = vector.broadcast %cst_131 : f32 to vector<8x128xf32>
    %390 = arith.addf %389, %388 : vector<8x128xf32>
    %391 = arith.divf %389, %390 : vector<8x128xf32>
    %392 = vector.extract_strided_slice %379 {offsets = [0, 256], sizes = [8, 128], strides = [1, 1]} : vector<8x512xf32> to vector<8x128xf32>
    %393 = math.tanh %392 : vector<8x128xf32>
    %394 = vector.extract_strided_slice %379 {offsets = [0, 384], sizes = [8, 128], strides = [1, 1]} : vector<8x512xf32> to vector<8x128xf32>
    %395 = arith.negf %394 : vector<8x128xf32>
    %396 = math.exp %395 : vector<8x128xf32>
    %cst_132 = arith.constant 1.000000e+00 : f32
    %397 = vector.broadcast %cst_132 : f32 to vector<8x128xf32>
    %398 = arith.addf %397, %396 : vector<8x128xf32>
    %399 = arith.divf %397, %398 : vector<8x128xf32>
    %400 = arith.mulf %391, %337 : vector<8x128xf32>
    %401 = arith.mulf %385, %393 : vector<8x128xf32>
    %402 = arith.addf %400, %401 : vector<8x128xf32>
    %403 = math.tanh %402 : vector<8x128xf32>
    %404 = arith.mulf %399, %403 : vector<8x128xf32>
    %405 = arith.truncf %404 : vector<8x128xf32> to vector<8x128xbf16>
    %c6 = arith.constant 6 : index
    %c0_133 = arith.constant 0 : index
    %c0_134 = arith.constant 0 : index
    %406 = vector.load %arg10[%c6, %c0_133, %c0_134] : memref<8x8x512xf32, #tpu.memory_space<vmem>>, vector<1x8x512xf32>
    %407 = vector.shape_cast %406 : vector<1x8x512xf32> to vector<8x512xf32>
    %c0_135 = arith.constant 0 : index
    %c0_136 = arith.constant 0 : index
    %408 = vector.load %arg5[%c0_135, %c0_136] : memref<128x512xbf16, #tpu.memory_space<vmem>>, vector<128x512xbf16>
    %cst_137 = arith.constant dense<0.000000e+00> : vector<8x512xf32>
    %409 = tpu.matmul %371, %408, %cst_137 {dimension_numbers = #tpu.dot_dimension_numbers<[1], [0], [0], [1], [0, 0, 1, 1], [], []>} : vector<8x128xbf16>, vector<128x512xbf16>, vector<8x512xf32> -> vector<8x512xf32>
    %410 = arith.addf %407, %409 : vector<8x512xf32>
    %411 = vector.extract_strided_slice %410 {offsets = [0, 0], sizes = [8, 128], strides = [1, 1]} : vector<8x512xf32> to vector<8x128xf32>
    %412 = arith.negf %411 : vector<8x128xf32>
    %413 = math.exp %412 : vector<8x128xf32>
    %cst_138 = arith.constant 1.000000e+00 : f32
    %414 = vector.broadcast %cst_138 : f32 to vector<8x128xf32>
    %415 = arith.addf %414, %413 : vector<8x128xf32>
    %416 = arith.divf %414, %415 : vector<8x128xf32>
    %417 = vector.extract_strided_slice %410 {offsets = [0, 128], sizes = [8, 128], strides = [1, 1]} : vector<8x512xf32> to vector<8x128xf32>
    %418 = arith.negf %417 : vector<8x128xf32>
    %419 = math.exp %418 : vector<8x128xf32>
    %cst_139 = arith.constant 1.000000e+00 : f32
    %420 = vector.broadcast %cst_139 : f32 to vector<8x128xf32>
    %421 = arith.addf %420, %419 : vector<8x128xf32>
    %422 = arith.divf %420, %421 : vector<8x128xf32>
    %423 = vector.extract_strided_slice %410 {offsets = [0, 256], sizes = [8, 128], strides = [1, 1]} : vector<8x512xf32> to vector<8x128xf32>
    %424 = math.tanh %423 : vector<8x128xf32>
    %425 = vector.extract_strided_slice %410 {offsets = [0, 384], sizes = [8, 128], strides = [1, 1]} : vector<8x512xf32> to vector<8x128xf32>
    %426 = arith.negf %425 : vector<8x128xf32>
    %427 = math.exp %426 : vector<8x128xf32>
    %cst_140 = arith.constant 1.000000e+00 : f32
    %428 = vector.broadcast %cst_140 : f32 to vector<8x128xf32>
    %429 = arith.addf %428, %427 : vector<8x128xf32>
    %430 = arith.divf %428, %429 : vector<8x128xf32>
    %431 = arith.mulf %422, %368 : vector<8x128xf32>
    %432 = arith.mulf %416, %424 : vector<8x128xf32>
    %433 = arith.addf %431, %432 : vector<8x128xf32>
    %434 = math.tanh %433 : vector<8x128xf32>
    %435 = arith.mulf %430, %434 : vector<8x128xf32>
    %436 = arith.truncf %435 : vector<8x128xf32> to vector<8x128xbf16>
    %c0_141 = arith.constant 0 : index
    %c0_142 = arith.constant 0 : index
    %437 = vector.load %arg6[%c0_141, %c0_142] : memref<128x512xbf16, #tpu.memory_space<vmem>>, vector<128x512xbf16>
    %cst_143 = arith.constant dense<0.000000e+00> : vector<8x512xf32>
    %438 = tpu.matmul %436, %437, %cst_143 {dimension_numbers = #tpu.dot_dimension_numbers<[1], [0], [0], [1], [0, 0, 1, 1], [], []>} : vector<8x128xbf16>, vector<128x512xbf16>, vector<8x512xf32> -> vector<8x512xf32>
    %c0_144 = arith.constant 0 : index
    %c0_145 = arith.constant 0 : index
    %439 = vector.load %arg7[%c0_144, %c0_145] : memref<128x512xbf16, #tpu.memory_space<vmem>>, vector<128x512xbf16>
    %cst_146 = arith.constant dense<0.000000e+00> : vector<8x512xf32>
    %440 = tpu.matmul %405, %439, %cst_146 {dimension_numbers = #tpu.dot_dimension_numbers<[1], [0], [0], [1], [0, 0, 1, 1], [], []>} : vector<8x128xbf16>, vector<128x512xbf16>, vector<8x512xf32> -> vector<8x512xf32>
    %441 = arith.addf %438, %440 : vector<8x512xf32>
    %c0_147 = arith.constant 0 : index
    %c0_148 = arith.constant 0 : index
    %442 = vector.load %arg8[%c0_147, %c0_148] : memref<1x512xf32, #tpu.memory_space<vmem>>, vector<1x512xf32>
    %443 = vector.broadcast %442 : vector<1x512xf32> to vector<8x512xf32>
    %444 = arith.addf %441, %443 : vector<8x512xf32>
    %445 = vector.extract_strided_slice %444 {offsets = [0, 0], sizes = [8, 128], strides = [1, 1]} : vector<8x512xf32> to vector<8x128xf32>
    %446 = arith.negf %445 : vector<8x128xf32>
    %447 = math.exp %446 : vector<8x128xf32>
    %cst_149 = arith.constant 1.000000e+00 : f32
    %448 = vector.broadcast %cst_149 : f32 to vector<8x128xf32>
    %449 = arith.addf %448, %447 : vector<8x128xf32>
    %450 = arith.divf %448, %449 : vector<8x128xf32>
    %451 = vector.extract_strided_slice %444 {offsets = [0, 128], sizes = [8, 128], strides = [1, 1]} : vector<8x512xf32> to vector<8x128xf32>
    %452 = arith.negf %451 : vector<8x128xf32>
    %453 = math.exp %452 : vector<8x128xf32>
    %cst_150 = arith.constant 1.000000e+00 : f32
    %454 = vector.broadcast %cst_150 : f32 to vector<8x128xf32>
    %455 = arith.addf %454, %453 : vector<8x128xf32>
    %456 = arith.divf %454, %455 : vector<8x128xf32>
    %457 = vector.extract_strided_slice %444 {offsets = [0, 256], sizes = [8, 128], strides = [1, 1]} : vector<8x512xf32> to vector<8x128xf32>
    %458 = math.tanh %457 : vector<8x128xf32>
    %459 = vector.extract_strided_slice %444 {offsets = [0, 384], sizes = [8, 128], strides = [1, 1]} : vector<8x512xf32> to vector<8x128xf32>
    %460 = arith.negf %459 : vector<8x128xf32>
    %461 = math.exp %460 : vector<8x128xf32>
    %cst_151 = arith.constant 1.000000e+00 : f32
    %462 = vector.broadcast %cst_151 : f32 to vector<8x128xf32>
    %463 = arith.addf %462, %461 : vector<8x128xf32>
    %464 = arith.divf %462, %463 : vector<8x128xf32>
    %465 = arith.mulf %456, %402 : vector<8x128xf32>
    %466 = arith.mulf %450, %458 : vector<8x128xf32>
    %467 = arith.addf %465, %466 : vector<8x128xf32>
    %468 = math.tanh %467 : vector<8x128xf32>
    %469 = arith.mulf %464, %468 : vector<8x128xf32>
    %470 = arith.truncf %469 : vector<8x128xf32> to vector<8x128xbf16>
    %c7 = arith.constant 7 : index
    %c0_152 = arith.constant 0 : index
    %c0_153 = arith.constant 0 : index
    %471 = vector.load %arg10[%c7, %c0_152, %c0_153] : memref<8x8x512xf32, #tpu.memory_space<vmem>>, vector<1x8x512xf32>
    %472 = vector.shape_cast %471 : vector<1x8x512xf32> to vector<8x512xf32>
    %c0_154 = arith.constant 0 : index
    %c0_155 = arith.constant 0 : index
    %473 = vector.load %arg5[%c0_154, %c0_155] : memref<128x512xbf16, #tpu.memory_space<vmem>>, vector<128x512xbf16>
    %cst_156 = arith.constant dense<0.000000e+00> : vector<8x512xf32>
    %474 = tpu.matmul %436, %473, %cst_156 {dimension_numbers = #tpu.dot_dimension_numbers<[1], [0], [0], [1], [0, 0, 1, 1], [], []>} : vector<8x128xbf16>, vector<128x512xbf16>, vector<8x512xf32> -> vector<8x512xf32>
    %475 = arith.addf %472, %474 : vector<8x512xf32>
    %476 = vector.extract_strided_slice %475 {offsets = [0, 0], sizes = [8, 128], strides = [1, 1]} : vector<8x512xf32> to vector<8x128xf32>
    %477 = arith.negf %476 : vector<8x128xf32>
    %478 = math.exp %477 : vector<8x128xf32>
    %cst_157 = arith.constant 1.000000e+00 : f32
    %479 = vector.broadcast %cst_157 : f32 to vector<8x128xf32>
    %480 = arith.addf %479, %478 : vector<8x128xf32>
    %481 = arith.divf %479, %480 : vector<8x128xf32>
    %482 = vector.extract_strided_slice %475 {offsets = [0, 128], sizes = [8, 128], strides = [1, 1]} : vector<8x512xf32> to vector<8x128xf32>
    %483 = arith.negf %482 : vector<8x128xf32>
    %484 = math.exp %483 : vector<8x128xf32>
    %cst_158 = arith.constant 1.000000e+00 : f32
    %485 = vector.broadcast %cst_158 : f32 to vector<8x128xf32>
    %486 = arith.addf %485, %484 : vector<8x128xf32>
    %487 = arith.divf %485, %486 : vector<8x128xf32>
    %488 = vector.extract_strided_slice %475 {offsets = [0, 256], sizes = [8, 128], strides = [1, 1]} : vector<8x512xf32> to vector<8x128xf32>
    %489 = math.tanh %488 : vector<8x128xf32>
    %490 = vector.extract_strided_slice %475 {offsets = [0, 384], sizes = [8, 128], strides = [1, 1]} : vector<8x512xf32> to vector<8x128xf32>
    %491 = arith.negf %490 : vector<8x128xf32>
    %492 = math.exp %491 : vector<8x128xf32>
    %cst_159 = arith.constant 1.000000e+00 : f32
    %493 = vector.broadcast %cst_159 : f32 to vector<8x128xf32>
    %494 = arith.addf %493, %492 : vector<8x128xf32>
    %495 = arith.divf %493, %494 : vector<8x128xf32>
    %496 = arith.mulf %487, %433 : vector<8x128xf32>
    %497 = arith.mulf %481, %489 : vector<8x128xf32>
    %498 = arith.addf %496, %497 : vector<8x128xf32>
    %499 = math.tanh %498 : vector<8x128xf32>
    %500 = arith.mulf %495, %499 : vector<8x128xf32>
    %501 = arith.truncf %500 : vector<8x128xf32> to vector<8x128xbf16>
    %c0_160 = arith.constant 0 : index
    %c0_161 = arith.constant 0 : index
    %502 = vector.load %arg6[%c0_160, %c0_161] : memref<128x512xbf16, #tpu.memory_space<vmem>>, vector<128x512xbf16>
    %cst_162 = arith.constant dense<0.000000e+00> : vector<8x512xf32>
    %503 = tpu.matmul %501, %502, %cst_162 {dimension_numbers = #tpu.dot_dimension_numbers<[1], [0], [0], [1], [0, 0, 1, 1], [], []>} : vector<8x128xbf16>, vector<128x512xbf16>, vector<8x512xf32> -> vector<8x512xf32>
    %c0_163 = arith.constant 0 : index
    %c0_164 = arith.constant 0 : index
    %504 = vector.load %arg7[%c0_163, %c0_164] : memref<128x512xbf16, #tpu.memory_space<vmem>>, vector<128x512xbf16>
    %cst_165 = arith.constant dense<0.000000e+00> : vector<8x512xf32>
    %505 = tpu.matmul %470, %504, %cst_165 {dimension_numbers = #tpu.dot_dimension_numbers<[1], [0], [0], [1], [0, 0, 1, 1], [], []>} : vector<8x128xbf16>, vector<128x512xbf16>, vector<8x512xf32> -> vector<8x512xf32>
    %506 = arith.addf %503, %505 : vector<8x512xf32>
    %c0_166 = arith.constant 0 : index
    %c0_167 = arith.constant 0 : index
    %507 = vector.load %arg8[%c0_166, %c0_167] : memref<1x512xf32, #tpu.memory_space<vmem>>, vector<1x512xf32>
    %508 = vector.broadcast %507 : vector<1x512xf32> to vector<8x512xf32>
    %509 = arith.addf %506, %508 : vector<8x512xf32>
    %510 = vector.extract_strided_slice %509 {offsets = [0, 0], sizes = [8, 128], strides = [1, 1]} : vector<8x512xf32> to vector<8x128xf32>
    %511 = arith.negf %510 : vector<8x128xf32>
    %512 = math.exp %511 : vector<8x128xf32>
    %cst_168 = arith.constant 1.000000e+00 : f32
    %513 = vector.broadcast %cst_168 : f32 to vector<8x128xf32>
    %514 = arith.addf %513, %512 : vector<8x128xf32>
    %515 = arith.divf %513, %514 : vector<8x128xf32>
    %516 = vector.extract_strided_slice %509 {offsets = [0, 128], sizes = [8, 128], strides = [1, 1]} : vector<8x512xf32> to vector<8x128xf32>
    %517 = arith.negf %516 : vector<8x128xf32>
    %518 = math.exp %517 : vector<8x128xf32>
    %cst_169 = arith.constant 1.000000e+00 : f32
    %519 = vector.broadcast %cst_169 : f32 to vector<8x128xf32>
    %520 = arith.addf %519, %518 : vector<8x128xf32>
    %521 = arith.divf %519, %520 : vector<8x128xf32>
    %522 = vector.extract_strided_slice %509 {offsets = [0, 256], sizes = [8, 128], strides = [1, 1]} : vector<8x512xf32> to vector<8x128xf32>
    %523 = math.tanh %522 : vector<8x128xf32>
    %524 = vector.extract_strided_slice %509 {offsets = [0, 384], sizes = [8, 128], strides = [1, 1]} : vector<8x512xf32> to vector<8x128xf32>
    %525 = arith.negf %524 : vector<8x128xf32>
    %526 = math.exp %525 : vector<8x128xf32>
    %cst_170 = arith.constant 1.000000e+00 : f32
    %527 = vector.broadcast %cst_170 : f32 to vector<8x128xf32>
    %528 = arith.addf %527, %526 : vector<8x128xf32>
    %529 = arith.divf %527, %528 : vector<8x128xf32>
    %530 = arith.mulf %521, %467 : vector<8x128xf32>
    %531 = arith.mulf %515, %523 : vector<8x128xf32>
    %532 = arith.addf %530, %531 : vector<8x128xf32>
    %533 = math.tanh %532 : vector<8x128xf32>
    %534 = arith.mulf %529, %533 : vector<8x128xf32>
    %535 = arith.truncf %534 : vector<8x128xf32> to vector<8x128xbf16>
    %c0_171 = arith.constant 0 : index
    %c0_172 = arith.constant 0 : index
    %536 = vector.load %arg11[%c0_171, %c0_172] : memref<8x128xbf16, #tpu.memory_space<vmem>>, vector<8x128xbf16>
    tpu.vector_store %arg11[%c0_171, %c0_172], %501 {strides = array<i32>} : memref<8x128xbf16, #tpu.memory_space<vmem>>, vector<8x128xbf16>,
    %c0_173 = arith.constant 0 : index
    %c0_174 = arith.constant 0 : index
    %537 = vector.load %arg12[%c0_173, %c0_174] : memref<8x128xbf16, #tpu.memory_space<vmem>>, vector<8x128xbf16>
    tpu.vector_store %arg12[%c0_173, %c0_174], %535 {strides = array<i32>} : memref<8x128xbf16, #tpu.memory_space<vmem>>, vector<8x128xbf16>,
    %c0_175 = arith.constant 0 : index
    %c0_176 = arith.constant 0 : index
    %538 = vector.load %arg13[%c0_175, %c0_176] : memref<8x128xf32, #tpu.memory_space<vmem>>, vector<8x128xf32>
    tpu.vector_store %arg13[%c0_175, %c0_176], %498 {strides = array<i32>} : memref<8x128xf32, #tpu.memory_space<vmem>>, vector<8x128xf32>,
    %c0_177 = arith.constant 0 : index
    %c0_178 = arith.constant 0 : index
    %539 = vector.load %arg14[%c0_177, %c0_178] : memref<8x128xf32, #tpu.memory_space<vmem>>, vector<8x128xf32>
    tpu.vector_store %arg14[%c0_177, %c0_178], %532 {strides = array<i32>} : memref<8x128xf32, #tpu.memory_space<vmem>>, vector<8x128xf32>,
    %540 = arith.extf %535 : vector<8x128xbf16> to vector<8x128xf32>
    %c0_179 = arith.constant 0 : index
    %c0_180 = arith.constant 0 : index
    %541 = vector.load %arg9[%c0_179, %c0_180] : memref<8x128xf32, #tpu.memory_space<vmem>>, vector<8x128xf32>
    tpu.vector_store %arg9[%c0_179, %c0_180], %540 {strides = array<i32>} : memref<8x128xf32, #tpu.memory_space<vmem>>, vector<8x128xf32>,
    return
  }
  func.func @transform_0(%arg0: i32, %arg1: i32) -> (i32, i32, i32) {
    %c0_i32 = arith.constant 0 : i32
    %c0_i32_0 = arith.constant 0 : i32
    return %arg1, %arg0, %c0_i32 : i32, i32, i32
  }
  func.func @transform_1(%arg0: i32, %arg1: i32) -> (i32, i32) {
    %c0_i32 = arith.constant 0 : i32
    %c0_i32_0 = arith.constant 0 : i32
    %c0_i32_1 = arith.constant 0 : i32
    return %c0_i32, %c0_i32_0 : i32, i32
  }
  func.func @transform_2(%arg0: i32, %arg1: i32) -> (i32, i32) {
    %c0_i32 = arith.constant 0 : i32
    %c0_i32_0 = arith.constant 0 : i32
    %c0_i32_1 = arith.constant 0 : i32
    return %c0_i32, %c0_i32_0 : i32, i32
  }
  func.func @transform_3(%arg0: i32, %arg1: i32) -> (i32, i32) {
    %c0_i32 = arith.constant 0 : i32
    %c0_i32_0 = arith.constant 0 : i32
    %c0_i32_1 = arith.constant 0 : i32
    return %c0_i32, %c0_i32_0 : i32, i32
  }
  func.func @transform_4(%arg0: i32, %arg1: i32) -> (i32, i32) {
    %c0_i32 = arith.constant 0 : i32
    %c0_i32_0 = arith.constant 0 : i32
    %c0_i32_1 = arith.constant 0 : i32
    return %c0_i32, %c0_i32_0 : i32, i32
  }
  func.func @transform_5(%arg0: i32, %arg1: i32) -> (i32, i32) {
    %c0_i32 = arith.constant 0 : i32
    %c0_i32_0 = arith.constant 0 : i32
    %c0_i32_1 = arith.constant 0 : i32
    return %c0_i32, %c0_i32_0 : i32, i32
  }
  func.func @transform_6(%arg0: i32, %arg1: i32) -> (i32, i32) {
    %c0_i32 = arith.constant 0 : i32
    %c0_i32_0 = arith.constant 0 : i32
    %c0_i32_1 = arith.constant 0 : i32
    return %c0_i32, %c0_i32_0 : i32, i32
  }
  func.func @transform_7(%arg0: i32, %arg1: i32) -> (i32, i32) {
    %c0_i32 = arith.constant 0 : i32
    %c0_i32_0 = arith.constant 0 : i32
    return %arg0, %c0_i32 : i32, i32
  }
}

</mosaic_0001>

<llo_original>
// kernel: vqa_forward.3
$region0: #{vqa_forward.3}
  #allocation0 [shape = 'u32[]', space=smem, size = 0x4, offset = 0x4, fixed_abs, tag = 'smem constant byte address 0x4 - core index']
  #allocation1 [shape = 'u32[144,128]{1,0:T(1,128)}', space=vmem, size = 0x12000, scoped, tag = 'internal scratch']
  %s0 = inlined_call_operand.vmem [shape: f32[8,128], index: 0, kind: input, shape index: {}]
  %s1 = inlined_call_operand.vmem [shape: bf16[128,128], index: 1, kind: input, shape index: {}]
  %s2 = inlined_call_operand.vmem [shape: f32[1,128], index: 2, kind: input, shape index: {}]
  %s3 = inlined_call_operand.vmem [shape: f32[8,128], index: 3, kind: output, shape index: {}]
  %s4 = sld [smem:[#allocation0]]
  $region22: #{vqa_forward.3} parent=0
    _
  %s6 = ssub.s32 1, %s4
  %s7 = scalar_select 0, %s6, %s4
  // Predicated region
  $region2: #{vqa_forward.3} parent=0 // pred_check
    _
  $region3: #{vqa_forward.3} parent=0 // pred_check_branch
    %9 = sbr.rel (0) target = $region5
  $region4: #{vqa_forward.3} parent=0 // pred_region
    _
  $region5: #{vqa_forward.3} parent=0 // pred_fallthru
    _
  // Predicated region
  $region6: #{vqa_forward.3} parent=0 // pred_check
    _
  $region7: #{vqa_forward.3} parent=0 // pred_check_branch
    %11 = sbr.rel (0) target = $region9
  $region8: #{vqa_forward.3} parent=0 // pred_region
    _
  $region9: #{vqa_forward.3} parent=0 // pred_fallthru
    _
  // Predicated region
  $region10: #{vqa_forward.3} parent=0 // pred_check
    _
  $region11: #{vqa_forward.3} parent=0 // pred_check_branch
    %13 = sbr.rel (0) target = $region13
  $region12: #{vqa_forward.3} parent=0 // pred_region
    _
  $region13: #{vqa_forward.3} parent=0 // pred_fallthru
    _
  %v15 = vld [vmem:[%s0] sm:$0xff]
  %v16 = vpack.c.bf16 %v15, %v15
  %v17 = vld [vmem:[%s1] sm:$0xf]
  %v18 = vld [vmem:[%s1 + $0x4] sm:$0xf]
  %v19 = vld [vmem:[%s1 + $0x8] sm:$0xf]
  %v20 = vld [vmem:[%s1 + $0xc] sm:$0xf]
  %v21 = vld [vmem:[%s1 + $0x10] sm:$0xf]
  %v22 = vld [vmem:[%s1 + $0x14] sm:$0xf]
  %v23 = vld [vmem:[%s1 + $0x18] sm:$0xf]
  %v24 = vld [vmem:[%s1 + $0x1c] sm:$0xf]
  %v25 = vld [vmem:[%s1 + $0x20] sm:$0xf]
  %v26 = vld [vmem:[%s1 + $0x24] sm:$0xf]
  %v27 = vld [vmem:[%s1 + $0x28] sm:$0xf]
  %v28 = vld [vmem:[%s1 + $0x2c] sm:$0xf]
  %v29 = vld [vmem:[%s1 + $0x30] sm:$0xf]
  %v30 = vld [vmem:[%s1 + $0x34] sm:$0xf]
  %v31 = vld [vmem:[%s1 + $0x38] sm:$0xf]
  %v32 = vld [vmem:[%s1 + $0x3c] sm:$0xf]
  %v33 = vld [vmem:[%s2] sm:$0x1]
  %v35 = vlaneseq
  %v36 = vshrl.u32 %v35, 7
  %v37 = vsub.s32 0, %v36
  %v38 = vrot.slane %v33, %v37
  %v56 = vunpack.c.l.b16 %v17
  %v57 = vunpack.c.l.b16 %v18
  %v58 = vunpack.c.l.b16 %v19
  %v59 = vunpack.c.l.b16 %v20
  %v60 = vunpack.c.l.b16 %v21
  %v61 = vunpack.c.l.b16 %v22
  %v62 = vunpack.c.l.b16 %v23
  %v63 = vunpack.c.l.b16 %v24
  %v64 = vunpack.c.l.b16 %v25
  %v65 = vunpack.c.l.b16 %v26
  %v66 = vunpack.c.l.b16 %v27
  %v67 = vunpack.c.l.b16 %v28
  %v68 = vunpack.c.l.b16 %v29
  %v69 = vunpack.c.l.b16 %v30
  %v70 = vunpack.c.l.b16 %v31
  %v71 = vunpack.c.l.b16 %v32
  %v72 = vpack.c.b16 %v57, %v56
  %v73 = vpack.c.b16 %v59, %v58
  %v74 = vpack.c.b16 %v61, %v60
  %v75 = vpack.c.b16 %v63, %v62
  %v76 = vpack.c.b16 %v65, %v64
  %v77 = vpack.c.b16 %v67, %v66
  %v78 = vpack.c.b16 %v69, %v68
  %v79 = vpack.c.b16 %v71, %v70
  %88 = vmatprep.subr.bf16.mxu0 0
  %89 = vmatpush1.bf16.msra.mxu0 %v79
  %90 = vmatprep.subr.bf16.mxu0 0
  %91 = vmatpush1.bf16.msra.mxu0 %v78
  %92 = vmatprep.subr.bf16.mxu0 0
  %93 = vmatpush1.bf16.msra.mxu0 %v77
  %94 = vmatprep.subr.bf16.mxu0 0
  %95 = vmatpush1.bf16.msra.mxu0 %v76
  %96 = vmatprep.subr.bf16.mxu0 0
  %97 = vmatpush1.bf16.msra.mxu0 %v75
  %98 = vmatprep.subr.bf16.mxu0 0
  %99 = vmatpush1.bf16.msra.mxu0 %v74
  %100 = vmatprep.subr.bf16.mxu0 0
  %101 = vmatpush1.bf16.msra.mxu0 %v73
  %102 = vmatprep.subr.bf16.mxu0 0
  %103 = vmatpush1.bf16.msra.mxu0 %v72
  %104 = vmatprep.subr.bf16.mxu0 0
  %105 = vmatpush2.bf16.msra.mxu0 0
  %106 = vmatprep.subr.bf16.mxu0 0
  %107 = vmatpush2.bf16.msra.mxu0 0
  %108 = vmatprep.subr.bf16.mxu0 0
  %109 = vmatpush2.bf16.msra.mxu0 0
  %110 = vmatprep.subr.bf16.mxu0 0
  %111 = vmatpush2.bf16.msra.mxu0 0
  %112 = vmatprep.subr.bf16.mxu0 0
  %113 = vmatpush2.bf16.msra.mxu0 0
  %114 = vmatprep.subr.bf16.mxu0 0
  %115 = vmatpush2.bf16.msra.mxu0 0
  %116 = vmatprep.subr.bf16.mxu0 0
  %117 = vmatpush2.bf16.msra.mxu0 0
  %118 = vmatprep.subr.bf16.mxu0 0
  %119 = vmatpush2.bf16.msra.mxu0 0
  %120 = vmatprep.mubr.bf16.mxu0 0
  %121 = vmatmul.mubr.bf16.gmra.mxu0 %v16
  %v122 = vpop.f32.mrf.mxu0
  %v123 = vadd.f32 %v38, %v122
  %v124 = vpop.f32.mrf.mxu0
  %v125 = vpop.f32.mrf.mxu0
  %v126 = vpop.f32.mrf.mxu0
  %127 = vdwg.mxu0
  %128 = vmax.xlane.f32.xlu0 %v123
  %v129 = vpop.xlane.xlu0 %128
  %v130 = vsub.f32 %v123, %v129
  %v131 = vmul.f32 %v130, 1.442695
  %v132 = vpow.pop %v131
  %v133 = vlaneseq
  %v134 = vand.u32 %v133, 127
  %vm135 = vcmp.lt.s32.totalorder %v134, 16
  %v136 = vsel %vm135, %v132, 0.0
  %137 = vadd.xlane.f32.xlu0 %v136
  %v138 = vpop.xlane.xlu0 %137
  %v139 = vrcp.pop %v138
  %v140 = vmul.f32 %v138, %v139
  %v141 = vsub.f32 2.0, %v140
  %v142 = vmul.f32 %v139, %v141
  %v143 = vmul.f32 %v138, %v142
  %v144 = vsub.f32 2.0, %v143
  %v145 = vmul.f32 %v142, %v144
  %v146 = vmul.f32 %v136, %v145
  %147 = vst [vmem:[%s3] sm:$0xff] %v146
  // Predicated region
  $region14: #{vqa_forward.3} parent=0 // pred_check
    _
  $region15: #{vqa_forward.3} parent=0 // pred_check_branch
    %149 = sbr.rel (0) target = $region17
  $region16: #{vqa_forward.3} parent=0 // pred_region
    _
  $region17: #{vqa_forward.3} parent=0 // pred_fallthru
    _
  // Predicated region
  $region18: #{vqa_forward.3} parent=0 // pred_check
    _
  $region19: #{vqa_forward.3} parent=0 // pred_check_branch
    %151 = sbr.rel (0) target = $region21
  $region20: #{vqa_forward.3} parent=0 // pred_region
    _
  $region21: #{vqa_forward.3} parent=0 // pred_fallthru
    _

// kernel: vqa_forward.2
$region0: #{vqa_forward.2}
  #allocation0 [shape = 'u32[]', space=smem, size = 0x4, offset = 0x4, fixed_abs, tag = 'smem constant byte address 0x4 - core index']
  #allocation1 [shape = 'u32[144,128]{1,0:T(1,128)}', space=vmem, size = 0x12000, scoped, tag = 'internal scratch']
  #allocation2 [shape = 'f32[8,8,512]{2,1,0:T(8,128)}', space=vmem, size = 0x20000, scoped, tag = 'scratch operand']
  #allocation3 [shape = 'bf16[8,128]{1,0:T(8,128)(2,1)}', space=vmem, size = 0x800, scoped, tag = 'scratch operand']
  #allocation4 [shape = 'bf16[8,128]{1,0:T(8,128)(2,1)}', space=vmem, size = 0x800, scoped, tag = 'scratch operand']
  #allocation5 [shape = 'f32[8,128]{1,0:T(8,128)}', space=vmem, size = 0x1000, scoped, tag = 'scratch operand']
  #allocation6 [shape = 'f32[8,128]{1,0:T(8,128)}', space=vmem, size = 0x1000, scoped, tag = 'scratch operand']
  %s0 = inlined_call_operand.vmem [shape: bf16[8,8,128], index: 0, kind: input, shape index: {}]
  %s1 = inlined_call_operand.vmem [shape: bf16[128,512], index: 1, kind: input, shape index: {}]
  %s2 = inlined_call_operand.vmem [shape: f32[1,512], index: 2, kind: input, shape index: {}]
  %s3 = inlined_call_operand.vmem [shape: bf16[128,512], index: 3, kind: input, shape index: {}]
  %s4 = inlined_call_operand.vmem [shape: bf16[128,512], index: 4, kind: input, shape index: {}]
  %s5 = inlined_call_operand.vmem [shape: bf16[128,512], index: 5, kind: input, shape index: {}]
  %s6 = inlined_call_operand.vmem [shape: f32[1,512], index: 6, kind: input, shape index: {}]
  %s7 = inlined_call_operand.vmem [shape: f32[8,128], index: 7, kind: output, shape index: {}]
  %s8 = sld [smem:[#allocation0]]
  $region42: #{vqa_forward.2} parent=0
    _
  %s10 = ssub.s32 1, %s8
  %s11 = scalar_select 0, %s10, %s8
  // Predicated region
  $region2: #{vqa_forward.2} parent=0 // pred_check
    _
  $region3: #{vqa_forward.2} parent=0 // pred_check_branch
    %13 = sbr.rel (0) target = $region5
  $region4: #{vqa_forward.2} parent=0 // pred_region
    _
  $region5: #{vqa_forward.2} parent=0 // pred_fallthru
    _
  // Predicated region
  $region6: #{vqa_forward.2} parent=0 // pred_check
    _
  $region7: #{vqa_forward.2} parent=0 // pred_check_branch
    %15 = sbr.rel (0) target = $region9
  $region8: #{vqa_forward.2} parent=0 // pred_region
    _
  $region9: #{vqa_forward.2} parent=0 // pred_fallthru
    _
  // Predicated region
  $region10: #{vqa_forward.2} parent=0 // pred_check
    _
  $region11: #{vqa_forward.2} parent=0 // pred_check_branch
    %17 = sbr.rel (0) target = $region13
  $region12: #{vqa_forward.2} parent=0 // pred_region
    _
  $region13: #{vqa_forward.2} parent=0 // pred_fallthru
    _
  // Predicated region
  $region14: #{vqa_forward.2} parent=0 // pred_check
    _
  $region15: #{vqa_forward.2} parent=0 // pred_check_branch
    %19 = sbr.rel (0) target = $region17
  $region16: #{vqa_forward.2} parent=0 // pred_region
    _
  $region17: #{vqa_forward.2} parent=0 // pred_fallthru
    _
  // Predicated region
  $region18: #{vqa_forward.2} parent=0 // pred_check
    _
  $region19: #{vqa_forward.2} parent=0 // pred_check_branch
    %21 = sbr.rel (0) target = $region21
  $region20: #{vqa_forward.2} parent=0 // pred_region
    _
  $region21: #{vqa_forward.2} parent=0 // pred_fallthru
    _
  // Predicated region
  $region22: #{vqa_forward.2} parent=0 // pred_check
    _
  $region23: #{vqa_forward.2} parent=0 // pred_check_branch
    %23 = sbr.rel (0) target = $region25
  $region24: #{vqa_forward.2} parent=0 // pred_region
    _
  $region25: #{vqa_forward.2} parent=0 // pred_fallthru
    _
  // Predicated region
  $region26: #{vqa_forward.2} parent=0 // pred_check
    _
  $region27: #{vqa_forward.2} parent=0 // pred_check_branch
    %25 = sbr.rel (0) target = $region29
  $region28: #{vqa_forward.2} parent=0 // pred_region
    _
  $region29: #{vqa_forward.2} parent=0 // pred_fallthru
    _
  %p27 = scmp.eq.s32.totalorder 0, 0
  // Predicated region
  $region30: #{vqa_forward.2} parent=0 // pred_check
    %p28 = pneg %p27
  $region31: #{vqa_forward.2} parent=0 // pred_check_branch
    %30 = sbr.rel (%p28) target = $region33
  $region32: #{vqa_forward.2} parent=0 // pred_region
    %31 = vst [vmem:[#allocation3] sm:$0xf] 0
    %32 = vst [vmem:[#allocation4] sm:$0xf] 0
    %33 = vst [vmem:[#allocation5] sm:$0xff] 0.0
    %34 = vst [vmem:[#allocation6] sm:$0xff] 0.0
  $region33: #{vqa_forward.2} parent=0 // pred_fallthru
    _
  %v35 = vld [vmem:[%s0] sm:$0xf]
  %v36 = vld [vmem:[%s0 + $0x4] sm:$0xf]
  %v37 = vld [vmem:[%s0 + $0x8] sm:$0xf]
  %v38 = vld [vmem:[%s0 + $0xc] sm:$0xf]
  %v39 = vld [vmem:[%s0 + $0x10] sm:$0xf]
  %v40 = vld [vmem:[%s0 + $0x14] sm:$0xf]
  %v41 = vld [vmem:[%s0 + $0x18] sm:$0xf]
  %v42 = vld [vmem:[%s0 + $0x1c] sm:$0xf]
  %v43 = vld [vmem:[%s1] sm:$0xff]
  %v44 = vld [vmem:[%s1 + $0x8] sm:$0xff]
  %v45 = vld [vmem:[%s1 + $0x10] sm:$0xff]
  %v46 = vld [vmem:[%s1 + $0x18] sm:$0xff]
  %v47 = vld [vmem:[%s1 + $0x20] sm:$0xff]
  %v48 = vld [vmem:[%s1 + $0x28] sm:$0xff]
  %v49 = vld [vmem:[%s1 + $0x30] sm:$0xff]
  %v50 = vld [vmem:[%s1 + $0x38] sm:$0xff]
  %v51 = vld [vmem:[%s1 + $0x40] sm:$0xff]
  %v52 = vld [vmem:[%s1 + $0x48] sm:$0xff]
  %v53 = vld [vmem:[%s1 + $0x50] sm:$0xff]
  %v54 = vld [vmem:[%s1 + $0x58] sm:$0xff]
  %v55 = vld [vmem:[%s1 + $0x60] sm:$0xff]
  %v56 = vld [vmem:[%s1 + $0x68] sm:$0xff]
  %v57 = vld [vmem:[%s1 + $0x70] sm:$0xff]
  %v58 = vld [vmem:[%s1 + $0x78] sm:$0xff]
  %v59 = vld [vmem:[%s1 + $0x80] sm:$0xff]
  %v60 = vld [vmem:[%s1 + $0x88] sm:$0xff]
  %v61 = vld [vmem:[%s1 + $0x90] sm:$0xff]
  %v62 = vld [vmem:[%s1 + $0x98] sm:$0xff]
  %v63 = vld [vmem:[%s1 + $0xa0] sm:$0xff]
  %v64 = vld [vmem:[%s1 + $0xa8] sm:$0xff]
  %v65 = vld [vmem:[%s1 + $0xb0] sm:$0xff]
  %v66 = vld [vmem:[%s1 + $0xb8] sm:$0xff]
  %v67 = vld [vmem:[%s1 + $0xc0] sm:$0xff]
  %v68 = vld [vmem:[%s1 + $0xc8] sm:$0xff]
  %v69 = vld [vmem:[%s1 + $0xd0] sm:$0xff]
  %v70 = vld [vmem:[%s1 + $0xd8] sm:$0xff]
  %v71 = vld [vmem:[%s1 + $0xe0] sm:$0xff]
  %v72 = vld [vmem:[%s1 + $0xe8] sm:$0xff]
  %v73 = vld [vmem:[%s1 + $0xf0] sm:$0xff]
  %v74 = vld [vmem:[%s1 + $0xf8] sm:$0xff]
  %v75 = vld [vmem:[%s2] sm:$0xf]
  %v77 = vlaneseq
  %v78 = vshrl.u32 %v77, 7
  %v79 = vsub.s32 0, %v78
  %v80 = vrot.slane %v75, %v79
  %v81 = vlaneseq
  %v82 = vshrl.u32 %v81, 7
  %v83 = vsub.s32 1, %v82
  %v84 = vrot.slane %v75, %v83
  %v85 = vlaneseq
  %v86 = vshrl.u32 %v85, 7
  %v87 = vsub.s32 2, %v86
  %v88 = vrot.slane %v75, %v87
  %v89 = vlaneseq
  %v90 = vshrl.u32 %v89, 7
  %v91 = vsub.s32 3, %v90
  %v92 = vrot.slane %v75, %v91
  %v105 = vunpack.c.l.b16 %v35
  %v106 = vunpack.c.l.b16 %v36
  %v107 = vunpack.c.l.b16 %v37
  %v108 = vunpack.c.l.b16 %v38
  %v109 = vunpack.c.l.b16 %v39
  %v110 = vunpack.c.l.b16 %v40
  %v111 = vunpack.c.l.b16 %v41
  %v112 = vunpack.c.l.b16 %v42
  %v113 = vpack.c.b16 %v106, %v105
  %v114 = vpack.c.b16 %v108, %v107
  %v115 = vpack.c.b16 %v110, %v109
  %v116 = vpack.c.b16 %v112, %v111
  %v153 = vunpack.c.l.b16 %v43
  %v154 = vunpack.c.h.b16 %v43
  %v155 = vunpack.c.l.b16 %v44
  %v156 = vunpack.c.h.b16 %v44
  %v157 = vunpack.c.l.b16 %v45
  %v158 = vunpack.c.h.b16 %v45
  %v159 = vunpack.c.l.b16 %v46
  %v160 = vunpack.c.h.b16 %v46
  %v161 = vunpack.c.l.b16 %v47
  %v162 = vunpack.c.h.b16 %v47
  %v163 = vunpack.c.l.b16 %v48
  %v164 = vunpack.c.h.b16 %v48
  %v165 = vunpack.c.l.b16 %v49
  %v166 = vunpack.c.h.b16 %v49
  %v167 = vunpack.c.l.b16 %v50
  %v168 = vunpack.c.h.b16 %v50
  %v169 = vunpack.c.l.b16 %v51
  %v170 = vunpack.c.h.b16 %v51
  %v171 = vunpack.c.l.b16 %v52
  %v172 = vunpack.c.h.b16 %v52
  %v173 = vunpack.c.l.b16 %v53
  %v174 = vunpack.c.h.b16 %v53
  %v175 = vunpack.c.l.b16 %v54
  %v176 = vunpack.c.h.b16 %v54
  %v177 = vunpack.c.l.b16 %v55
  %v178 = vunpack.c.h.b16 %v55
  %v179 = vunpack.c.l.b16 %v56
  %v180 = vunpack.c.h.b16 %v56
  %v181 = vunpack.c.l.b16 %v57
  %v182 = vunpack.c.h.b16 %v57
  %v183 = vunpack.c.l.b16 %v58
  %v184 = vunpack.c.h.b16 %v58
  %v185 = vunpack.c.l.b16 %v59
  %v186 = vunpack.c.h.b16 %v59
  %v187 = vunpack.c.l.b16 %v60
  %v188 = vunpack.c.h.b16 %v60
  %v189 = vunpack.c.l.b16 %v61
  %v190 = vunpack.c.h.b16 %v61
  %v191 = vunpack.c.l.b16 %v62
  %v192 = vunpack.c.h.b16 %v62
  %v193 = vunpack.c.l.b16 %v63
  %v194 = vunpack.c.h.b16 %v63
  %v195 = vunpack.c.l.b16 %v64
  %v196 = vunpack.c.h.b16 %v64
  %v197 = vunpack.c.l.b16 %v65
  %v198 = vunpack.c.h.b16 %v65
  %v199 = vunpack.c.l.b16 %v66
  %v200 = vunpack.c.h.b16 %v66
  %v201 = vunpack.c.l.b16 %v67
  %v202 = vunpack.c.h.b16 %v67
  %v203 = vunpack.c.l.b16 %v68
  %v204 = vunpack.c.h.b16 %v68
  %v205 = vunpack.c.l.b16 %v69
  %v206 = vunpack.c.h.b16 %v69
  %v207 = vunpack.c.l.b16 %v70
  %v208 = vunpack.c.h.b16 %v70
  %v209 = vunpack.c.l.b16 %v71
  %v210 = vunpack.c.h.b16 %v71
  %v211 = vunpack.c.l.b16 %v72
  %v212 = vunpack.c.h.b16 %v72
  %v213 = vunpack.c.l.b16 %v73
  %v214 = vunpack.c.h.b16 %v73
  %v215 = vunpack.c.l.b16 %v74
  %v216 = vunpack.c.h.b16 %v74
  %v217 = vpack.c.b16 %v157, %v153
  %v218 = vpack.c.b16 %v158, %v154
  %v219 = vpack.c.b16 %v159, %v155
  %v220 = vpack.c.b16 %v160, %v156
  %v221 = vpack.c.b16 %v165, %v161
  %v222 = vpack.c.b16 %v166, %v162
  %v223 = vpack.c.b16 %v167, %v163
  %v224 = vpack.c.b16 %v168, %v164
  %v225 = vpack.c.b16 %v173, %v169
  %v226 = vpack.c.b16 %v174, %v170
  %v227 = vpack.c.b16 %v175, %v171
  %v228 = vpack.c.b16 %v176, %v172
  %v229 = vpack.c.b16 %v181, %v177
  %v230 = vpack.c.b16 %v182, %v178
  %v231 = vpack.c.b16 %v183, %v179
  %v232 = vpack.c.b16 %v184, %v180
  %v233 = vpack.c.b16 %v189, %v185
  %v234 = vpack.c.b16 %v190, %v186
  %v235 = vpack.c.b16 %v191, %v187
  %v236 = vpack.c.b16 %v192, %v188
  %v237 = vpack.c.b16 %v197, %v193
  %v238 = vpack.c.b16 %v198, %v194
  %v239 = vpack.c.b16 %v199, %v195
  %v240 = vpack.c.b16 %v200, %v196
  %v241 = vpack.c.b16 %v205, %v201
  %v242 = vpack.c.b16 %v206, %v202
  %v243 = vpack.c.b16 %v207, %v203
  %v244 = vpack.c.b16 %v208, %v204
  %v245 = vpack.c.b16 %v213, %v209
  %v246 = vpack.c.b16 %v214, %v210
  %v247 = vpack.c.b16 %v215, %v211
  %v248 = vpack.c.b16 %v216, %v212
  %281 = vmatprep.subr.bf16.mxu0 %v246
  %282 = vmatpush1.bf16.msra.mxu0 %v245
  %283 = vmatprep.subr.bf16.mxu0 %v242
  %284 = vmatpush1.bf16.msra.mxu0 %v241
  %285 = vmatprep.subr.bf16.mxu0 %v238
  %286 = vmatpush1.bf16.msra.mxu0 %v237
  %287 = vmatprep.subr.bf16.mxu0 %v234
  %288 = vmatpush1.bf16.msra.mxu0 %v233
  %289 = vmatprep.subr.bf16.mxu0 %v230
  %290 = vmatpush1.bf16.msra.mxu0 %v229
  %291 = vmatprep.subr.bf16.mxu0 %v226
  %292 = vmatpush1.bf16.msra.mxu0 %v225
  %293 = vmatprep.subr.bf16.mxu0 %v222
  %294 = vmatpush1.bf16.msra.mxu0 %v221
  %295 = vmatprep.subr.bf16.mxu0 %v218
  %296 = vmatpush1.bf16.msra.mxu0 %v217
  %297 = vmatprep.subr.bf16.mxu0 0
  %298 = vmatpush2.bf16.msra.mxu0 0
  %299 = vmatprep.subr.bf16.mxu0 0
  %300 = vmatpush2.bf16.msra.mxu0 0
  %301 = vmatprep.subr.bf16.mxu0 0
  %302 = vmatpush2.bf16.msra.mxu0 0
  %303 = vmatprep.subr.bf16.mxu0 0
  %304 = vmatpush2.bf16.msra.mxu0 0
  %305 = vmatprep.subr.bf16.mxu0 0
  %306 = vmatpush2.bf16.msra.mxu0 0
  %307 = vmatprep.subr.bf16.mxu0 0
  %308 = vmatpush2.bf16.msra.mxu0 0
  %309 = vmatprep.subr.bf16.mxu0 0
  %310 = vmatpush2.bf16.msra.mxu0 0
  %311 = vmatprep.subr.bf16.mxu0 0
  %312 = vmatpush2.bf16.msra.mxu0 0
  %313 = vmatprep.mubr.bf16.mxu0 0
  %314 = vmatmul.mubr.bf16.gmra.mxu0 %v113
  %v315 = vpop.f32.mrf.mxu0
  %v316 = vadd.f32 %v80, %v315
  %v317 = vpop.f32.mrf.mxu0
  %v318 = vadd.f32 %v84, %v317
  %v319 = vpop.f32.mrf.mxu0
  %v320 = vadd.f32 %v80, %v319
  %v321 = vpop.f32.mrf.mxu0
  %v322 = vadd.f32 %v84, %v321
  %323 = vmatprep.mubr.bf16.mxu0 0
  %324 = vmatmul.mubr.bf16.gmra.mxu0 %v114
  %v325 = vpop.f32.mrf.mxu0
  %v326 = vadd.f32 %v80, %v325
  %v327 = vpop.f32.mrf.mxu0
  %v328 = vadd.f32 %v84, %v327
  %v329 = vpop.f32.mrf.mxu0
  %v330 = vadd.f32 %v80, %v329
  %v331 = vpop.f32.mrf.mxu0
  %v332 = vadd.f32 %v84, %v331
  %333 = vmatprep.mubr.bf16.mxu0 0
  %334 = vmatmul.mubr.bf16.gmra.mxu0 %v115
  %v335 = vpop.f32.mrf.mxu0
  %v336 = vadd.f32 %v80, %v335
  %v337 = vpop.f32.mrf.mxu0
  %v338 = vadd.f32 %v84, %v337
  %v339 = vpop.f32.mrf.mxu0
  %v340 = vadd.f32 %v80, %v339
  %v341 = vpop.f32.mrf.mxu0
  %v342 = vadd.f32 %v84, %v341
  %343 = vmatprep.mubr.bf16.mxu0 0
  %344 = vmatmul.mubr.bf16.gmra.mxu0 %v116
  %v345 = vpop.f32.mrf.mxu0
  %v346 = vadd.f32 %v80, %v345
  %v347 = vpop.f32.mrf.mxu0
  %v348 = vadd.f32 %v84, %v347
  %v349 = vpop.f32.mrf.mxu0
  %v350 = vadd.f32 %v80, %v349
  %v351 = vpop.f32.mrf.mxu0
  %v352 = vadd.f32 %v84, %v351
  %353 = vdwg.mxu0
  %354 = vmatprep.subr.bf16.mxu0 %v248
  %355 = vmatpush1.bf16.msra.mxu0 %v247
  %356 = vmatprep.subr.bf16.mxu0 %v244
  %357 = vmatpush1.bf16.msra.mxu0 %v243
  %358 = vmatprep.subr.bf16.mxu0 %v240
  %359 = vmatpush1.bf16.msra.mxu0 %v239
  %360 = vmatprep.subr.bf16.mxu0 %v236
  %361 = vmatpush1.bf16.msra.mxu0 %v235
  %362 = vmatprep.subr.bf16.mxu0 %v232
  %363 = vmatpush1.bf16.msra.mxu0 %v231
  %364 = vmatprep.subr.bf16.mxu0 %v228
  %365 = vmatpush1.bf16.msra.mxu0 %v227
  %366 = vmatprep.subr.bf16.mxu0 %v224
  %367 = vmatpush1.bf16.msra.mxu0 %v223
  %368 = vmatprep.subr.bf16.mxu0 %v220
  %369 = vmatpush1.bf16.msra.mxu0 %v219
  %370 = vmatprep.subr.bf16.mxu0 0
  %371 = vmatpush2.bf16.msra.mxu0 0
  %372 = vmatprep.subr.bf16.mxu0 0
  %373 = vmatpush2.bf16.msra.mxu0 0
  %374 = vmatprep.subr.bf16.mxu0 0
  %375 = vmatpush2.bf16.msra.mxu0 0
  %376 = vmatprep.subr.bf16.mxu0 0
  %377 = vmatpush2.bf16.msra.mxu0 0
  %378 = vmatprep.subr.bf16.mxu0 0
  %379 = vmatpush2.bf16.msra.mxu0 0
  %380 = vmatprep.subr.bf16.mxu0 0
  %381 = vmatpush2.bf16.msra.mxu0 0
  %382 = vmatprep.subr.bf16.mxu0 0
  %383 = vmatpush2.bf16.msra.mxu0 0
  %384 = vmatprep.subr.bf16.mxu0 0
  %385 = vmatpush2.bf16.msra.mxu0 0
  %386 = vmatprep.mubr.bf16.mxu0 0
  %387 = vmatmul.mubr.bf16.gmra.mxu0 %v113
  %v388 = vpop.f32.mrf.mxu0
  %v389 = vadd.f32 %v88, %v388
  %v390 = vpop.f32.mrf.mxu0
  %v391 = vadd.f32 %v92, %v390
  %v392 = vpop.f32.mrf.mxu0
  %v393 = vadd.f32 %v88, %v392
  %v394 = vpop.f32.mrf.mxu0
  %v395 = vadd.f32 %v92, %v394
  %396 = vmatprep.mubr.bf16.mxu0 0
  %397 = vmatmul.mubr.bf16.gmra.mxu0 %v114
  %v398 = vpop.f32.mrf.mxu0
  %v399 = vadd.f32 %v88, %v398
  %v400 = vpop.f32.mrf.mxu0
  %v401 = vadd.f32 %v92, %v400
  %v402 = vpop.f32.mrf.mxu0
  %v403 = vadd.f32 %v88, %v402
  %v404 = vpop.f32.mrf.mxu0
  %v405 = vadd.f32 %v92, %v404
  %406 = vmatprep.mubr.bf16.mxu0 0
  %407 = vmatmul.mubr.bf16.gmra.mxu0 %v115
  %v408 = vpop.f32.mrf.mxu0
  %v409 = vadd.f32 %v88, %v408
  %v410 = vpop.f32.mrf.mxu0
  %v411 = vadd.f32 %v92, %v410
  %v412 = vpop.f32.mrf.mxu0
  %v413 = vadd.f32 %v88, %v412
  %v414 = vpop.f32.mrf.mxu0
  %v415 = vadd.f32 %v92, %v414
  %416 = vmatprep.mubr.bf16.mxu0 0
  %417 = vmatmul.mubr.bf16.gmra.mxu0 %v116
  %v418 = vpop.f32.mrf.mxu0
  %v419 = vadd.f32 %v88, %v418
  %v420 = vpop.f32.mrf.mxu0
  %v421 = vadd.f32 %v92, %v420
  %v422 = vpop.f32.mrf.mxu0
  %v423 = vadd.f32 %v88, %v422
  %v424 = vpop.f32.mrf.mxu0
  %v425 = vadd.f32 %v92, %v424
  %426 = vdwg.mxu0
  %427 = vst [vmem:[#allocation2] sm:$0xff] %v316
  %428 = vst [vmem:[#allocation2 + $0x8] sm:$0xff] %v318
  %429 = vst [vmem:[#allocation2 + $0x10] sm:$0xff] %v389
  %430 = vst [vmem:[#allocation2 + $0x18] sm:$0xff] %v391
  %431 = vst [vmem:[#allocation2 + $0x20] sm:$0xff] %v320
  %432 = vst [vmem:[#allocation2 + $0x28] sm:$0xff] %v322
  %433 = vst [vmem:[#allocation2 + $0x30] sm:$0xff] %v393
  %434 = vst [vmem:[#allocation2 + $0x38] sm:$0xff] %v395
  %435 = vst [vmem:[#allocation2 + $0x40] sm:$0xff] %v326
  %436 = vst [vmem:[#allocation2 + $0x48] sm:$0xff] %v328
  %437 = vst [vmem:[#allocation2 + $0x50] sm:$0xff] %v399
  %438 = vst [vmem:[#allocation2 + $0x58] sm:$0xff] %v401
  %439 = vst [vmem:[#allocation2 + $0x60] sm:$0xff] %v330
  %440 = vst [vmem:[#allocation2 + $0x68] sm:$0xff] %v332
  %441 = vst [vmem:[#allocation2 + $0x70] sm:$0xff] %v403
  %442 = vst [vmem:[#allocation2 + $0x78] sm:$0xff] %v405
  %443 = vst [vmem:[#allocation2 + $0x80] sm:$0xff] %v336
  %444 = vst [vmem:[#allocation2 + $0x88] sm:$0xff] %v338
  %445 = vst [vmem:[#allocation2 + $0x90] sm:$0xff] %v409
  %446 = vst [vmem:[#allocation2 + $0x98] sm:$0xff] %v411
  %447 = vst [vmem:[#allocation2 + $0xa0] sm:$0xff] %v340
  %448 = vst [vmem:[#allocation2 + $0xa8] sm:$0xff] %v342
  %449 = vst [vmem:[#allocation2 + $0xb0] sm:$0xff] %v413
  %450 = vst [vmem:[#allocation2 + $0xb8] sm:$0xff] %v415
  %451 = vst [vmem:[#allocation2 + $0xc0] sm:$0xff] %v346
  %452 = vst [vmem:[#allocation2 + $0xc8] sm:$0xff] %v348
  %453 = vst [vmem:[#allocation2 + $0xd0] sm:$0xff] %v419
  %454 = vst [vmem:[#allocation2 + $0xd8] sm:$0xff] %v421
  %455 = vst [vmem:[#allocation2 + $0xe0] sm:$0xff] %v350
  %456 = vst [vmem:[#allocation2 + $0xe8] sm:$0xff] %v352
  %457 = vst [vmem:[#allocation2 + $0xf0] sm:$0xff] %v423
  %458 = vst [vmem:[#allocation2 + $0xf8] sm:$0xff] %v425
  %v459 = vld [vmem:[#allocation3] sm:$0xf]
  %v460 = vld [vmem:[#allocation4] sm:$0xf]
  %v461 = vld [vmem:[#allocation5] sm:$0xff]
  %v462 = vld [vmem:[#allocation6] sm:$0xff]
  %v463 = vld [vmem:[#allocation2] sm:$0xff]
  %v464 = vld [vmem:[#allocation2 + $0x8] sm:$0xff]
  %v465 = vld [vmem:[#allocation2 + $0x10] sm:$0xff]
  %v466 = vld [vmem:[#allocation2 + $0x18] sm:$0xff]
  %v467 = vld [vmem:[%s3] sm:$0xff]
  %v468 = vld [vmem:[%s3 + $0x8] sm:$0xff]
  %v469 = vld [vmem:[%s3 + $0x10] sm:$0xff]
  %v470 = vld [vmem:[%s3 + $0x18] sm:$0xff]
  %v471 = vld [vmem:[%s3 + $0x20] sm:$0xff]
  %v472 = vld [vmem:[%s3 + $0x28] sm:$0xff]
  %v473 = vld [vmem:[%s3 + $0x30] sm:$0xff]
  %v474 = vld [vmem:[%s3 + $0x38] sm:$0xff]
  %v475 = vld [vmem:[%s3 + $0x40] sm:$0xff]
  %v476 = vld [vmem:[%s3 + $0x48] sm:$0xff]
  %v477 = vld [vmem:[%s3 + $0x50] sm:$0xff]
  %v478 = vld [vmem:[%s3 + $0x58] sm:$0xff]
  %v479 = vld [vmem:[%s3 + $0x60] sm:$0xff]
  %v480 = vld [vmem:[%s3 + $0x68] sm:$0xff]
  %v481 = vld [vmem:[%s3 + $0x70] sm:$0xff]
  %v482 = vld [vmem:[%s3 + $0x78] sm:$0xff]
  %v483 = vld [vmem:[%s3 + $0x80] sm:$0xff]
  %v484 = vld [vmem:[%s3 + $0x88] sm:$0xff]
  %v485 = vld [vmem:[%s3 + $0x90] sm:$0xff]
  %v486 = vld [vmem:[%s3 + $0x98] sm:$0xff]
  %v487 = vld [vmem:[%s3 + $0xa0] sm:$0xff]
  %v488 = vld [vmem:[%s3 + $0xa8] sm:$0xff]
  %v489 = vld [vmem:[%s3 + $0xb0] sm:$0xff]
  %v490 = vld [vmem:[%s3 + $0xb8] sm:$0xff]
  %v491 = vld [vmem:[%s3 + $0xc0] sm:$0xff]
  %v492 = vld [vmem:[%s3 + $0xc8] sm:$0xff]
  %v493 = vld [vmem:[%s3 + $0xd0] sm:$0xff]
  %v494 = vld [vmem:[%s3 + $0xd8] sm:$0xff]
  %v495 = vld [vmem:[%s3 + $0xe0] sm:$0xff]
  %v496 = vld [vmem:[%s3 + $0xe8] sm:$0xff]
  %v497 = vld [vmem:[%s3 + $0xf0] sm:$0xff]
  %v498 = vld [vmem:[%s3 + $0xf8] sm:$0xff]
  %v531 = vunpack.c.l.b16 %v467
  %v532 = vunpack.c.h.b16 %v467
  %v533 = vunpack.c.l.b16 %v468
  %v534 = vunpack.c.h.b16 %v468
  %v535 = vunpack.c.l.b16 %v469
  %v536 = vunpack.c.h.b16 %v469
  %v537 = vunpack.c.l.b16 %v470
  %v538 = vunpack.c.h.b16 %v470
  %v539 = vunpack.c.l.b16 %v471
  %v540 = vunpack.c.h.b16 %v471
  %v541 = vunpack.c.l.b16 %v472
  %v542 = vunpack.c.h.b16 %v472
  %v543 = vunpack.c.l.b16 %v473
  %v544 = vunpack.c.h.b16 %v473
  %v545 = vunpack.c.l.b16 %v474
  %v546 = vunpack.c.h.b16 %v474
  %v547 = vunpack.c.l.b16 %v475
  %v548 = vunpack.c.h.b16 %v475
  %v549 = vunpack.c.l.b16 %v476
  %v550 = vunpack.c.h.b16 %v476
  %v551 = vunpack.c.l.b16 %v477
  %v552 = vunpack.c.h.b16 %v477
  %v553 = vunpack.c.l.b16 %v478
  %v554 = vunpack.c.h.b16 %v478
  %v555 = vunpack.c.l.b16 %v479
  %v556 = vunpack.c.h.b16 %v479
  %v557 = vunpack.c.l.b16 %v480
  %v558 = vunpack.c.h.b16 %v480
  %v559 = vunpack.c.l.b16 %v481
  %v560 = vunpack.c.h.b16 %v481
  %v561 = vunpack.c.l.b16 %v482
  %v562 = vunpack.c.h.b16 %v482
  %v563 = vunpack.c.l.b16 %v483
  %v564 = vunpack.c.h.b16 %v483
  %v565 = vunpack.c.l.b16 %v484
  %v566 = vunpack.c.h.b16 %v484
  %v567 = vunpack.c.l.b16 %v485
  %v568 = vunpack.c.h.b16 %v485
  %v569 = vunpack.c.l.b16 %v486
  %v570 = vunpack.c.h.b16 %v486
  %v571 = vunpack.c.l.b16 %v487
  %v572 = vunpack.c.h.b16 %v487
  %v573 = vunpack.c.l.b16 %v488
  %v574 = vunpack.c.h.b16 %v488
  %v575 = vunpack.c.l.b16 %v489
  %v576 = vunpack.c.h.b16 %v489
  %v577 = vunpack.c.l.b16 %v490
  %v578 = vunpack.c.h.b16 %v490
  %v579 = vunpack.c.l.b16 %v491
  %v580 = vunpack.c.h.b16 %v491
  %v581 = vunpack.c.l.b16 %v492
  %v582 = vunpack.c.h.b16 %v492
  %v583 = vunpack.c.l.b16 %v493
  %v584 = vunpack.c.h.b16 %v493
  %v585 = vunpack.c.l.b16 %v494
  %v586 = vunpack.c.h.b16 %v494
  %v587 = vunpack.c.l.b16 %v495
  %v588 = vunpack.c.h.b16 %v495
  %v589 = vunpack.c.l.b16 %v496
  %v590 = vunpack.c.h.b16 %v496
  %v591 = vunpack.c.l.b16 %v497
  %v592 = vunpack.c.h.b16 %v497
  %v593 = vunpack.c.l.b16 %v498
  %v594 = vunpack.c.h.b16 %v498
  %v595 = vpack.c.b16 %v535, %v531
  %v596 = vpack.c.b16 %v536, %v532
  %v597 = vpack.c.b16 %v537, %v533
  %v598 = vpack.c.b16 %v538, %v534
  %v599 = vpack.c.b16 %v543, %v539
  %v600 = vpack.c.b16 %v544, %v540
  %v601 = vpack.c.b16 %v545, %v541
  %v602 = vpack.c.b16 %v546, %v542
  %v603 = vpack.c.b16 %v551, %v547
  %v604 = vpack.c.b16 %v552, %v548
  %v605 = vpack.c.b16 %v553, %v549
  %v606 = vpack.c.b16 %v554, %v550
  %v607 = vpack.c.b16 %v559, %v555
  %v608 = vpack.c.b16 %v560, %v556
  %v609 = vpack.c.b16 %v561, %v557
  %v610 = vpack.c.b16 %v562, %v558
  %v611 = vpack.c.b16 %v567, %v563
  %v612 = vpack.c.b16 %v568, %v564
  %v613 = vpack.c.b16 %v569, %v565
  %v614 = vpack.c.b16 %v570, %v566
  %v615 = vpack.c.b16 %v575, %v571
  %v616 = vpack.c.b16 %v576, %v572
  %v617 = vpack.c.b16 %v577, %v573
  %v618 = vpack.c.b16 %v578, %v574
  %v619 = vpack.c.b16 %v583, %v579
  %v620 = vpack.c.b16 %v584, %v580
  %v621 = vpack.c.b16 %v585, %v581
  %v622 = vpack.c.b16 %v586, %v582
  %v623 = vpack.c.b16 %v591, %v587
  %v624 = vpack.c.b16 %v592, %v588
  %v625 = vpack.c.b16 %v593, %v589
  %v626 = vpack.c.b16 %v594, %v590
  %659 = vmatprep.subr.bf16.mxu0 %v624
  %660 = vmatpush1.bf16.msra.mxu0 %v623
  %661 = vmatprep.subr.bf16.mxu0 %v620
  %662 = vmatpush1.bf16.msra.mxu0 %v619
  %663 = vmatprep.subr.bf16.mxu0 %v616
  %664 = vmatpush1.bf16.msra.mxu0 %v615
  %665 = vmatprep.subr.bf16.mxu0 %v612
  %666 = vmatpush1.bf16.msra.mxu0 %v611
  %667 = vmatprep.subr.bf16.mxu0 %v608
  %668 = vmatpush1.bf16.msra.mxu0 %v607
  %669 = vmatprep.subr.bf16.mxu0 %v604
  %670 = vmatpush1.bf16.msra.mxu0 %v603
  %671 = vmatprep.subr.bf16.mxu0 %v600
  %672 = vmatpush1.bf16.msra.mxu0 %v599
  %673 = vmatprep.subr.bf16.mxu0 %v596
  %674 = vmatpush1.bf16.msra.mxu0 %v595
  %675 = vmatprep.subr.bf16.mxu0 0
  %676 = vmatpush2.bf16.msra.mxu0 0
  %677 = vmatprep.subr.bf16.mxu0 0
  %678 = vmatpush2.bf16.msra.mxu0 0
  %679 = vmatprep.subr.bf16.mxu0 0
  %680 = vmatpush2.bf16.msra.mxu0 0
  %681 = vmatprep.subr.bf16.mxu0 0
  %682 = vmatpush2.bf16.msra.mxu0 0
  %683 = vmatprep.subr.bf16.mxu0 0
  %684 = vmatpush2.bf16.msra.mxu0 0
  %685 = vmatprep.subr.bf16.mxu0 0
  %686 = vmatpush2.bf16.msra.mxu0 0
  %687 = vmatprep.subr.bf16.mxu0 0
  %688 = vmatpush2.bf16.msra.mxu0 0
  %689 = vmatprep.subr.bf16.mxu0 0
  %690 = vmatpush2.bf16.msra.mxu0 0
  %691 = vmatprep.mubr.bf16.mxu0 0
  %692 = vmatmul.mubr.bf16.gmra.mxu0 %v459
  %v693 = vpop.f32.mrf.mxu0
  %v694 = vadd.f32 0.0, %v693
  %v695 = vpop.f32.mrf.mxu0
  %v696 = vadd.f32 0.0, %v695
  %v697 = vpop.f32.mrf.mxu0
  %v698 = vpop.f32.mrf.mxu0
  %699 = vdwg.mxu0
  %700 = vmatprep.subr.bf16.mxu0 %v626
  %701 = vmatpush1.bf16.msra.mxu0 %v625
  %702 = vmatprep.subr.bf16.mxu0 %v622
  %703 = vmatpush1.bf16.msra.mxu0 %v621
  %704 = vmatprep.subr.bf16.mxu0 %v618
  %705 = vmatpush1.bf16.msra.mxu0 %v617
  %706 = vmatprep.subr.bf16.mxu0 %v614
  %707 = vmatpush1.bf16.msra.mxu0 %v613
  %708 = vmatprep.subr.bf16.mxu0 %v610
  %709 = vmatpush1.bf16.msra.mxu0 %v609
  %710 = vmatprep.subr.bf16.mxu0 %v606
  %711 = vmatpush1.bf16.msra.mxu0 %v605
  %712 = vmatprep.subr.bf16.mxu0 %v602
  %713 = vmatpush1.bf16.msra.mxu0 %v601
  %714 = vmatprep.subr.bf16.mxu0 %v598
  %715 = vmatpush1.bf16.msra.mxu0 %v597
  %716 = vmatprep.subr.bf16.mxu0 0
  %717 = vmatpush2.bf16.msra.mxu0 0
  %718 = vmatprep.subr.bf16.mxu0 0
  %719 = vmatpush2.bf16.msra.mxu0 0
  %720 = vmatprep.subr.bf16.mxu0 0
  %721 = vmatpush2.bf16.msra.mxu0 0
  %722 = vmatprep.subr.bf16.mxu0 0
  %723 = vmatpush2.bf16.msra.mxu0 0
  %724 = vmatprep.subr.bf16.mxu0 0
  %725 = vmatpush2.bf16.msra.mxu0 0
  %726 = vmatprep.subr.bf16.mxu0 0
  %727 = vmatpush2.bf16.msra.mxu0 0
  %728 = vmatprep.subr.bf16.mxu0 0
  %729 = vmatpush2.bf16.msra.mxu0 0
  %730 = vmatprep.subr.bf16.mxu0 0
  %731 = vmatpush2.bf16.msra.mxu0 0
  %732 = vmatprep.mubr.bf16.mxu0 0
  %733 = vmatmul.mubr.bf16.gmra.mxu0 %v459
  %v734 = vpop.f32.mrf.mxu0
  %v735 = vadd.f32 0.0, %v734
  %v736 = vpop.f32.mrf.mxu0
  %v737 = vadd.f32 0.0, %v736
  %v738 = vpop.f32.mrf.mxu0
  %v739 = vpop.f32.mrf.mxu0
  %740 = vdwg.mxu0
  %v741 = vadd.f32 %v463, %v694
  %v742 = vadd.f32 %v464, %v696
  %v743 = vadd.f32 %v465, %v735
  %v744 = vadd.f32 %v466, %v737
  %v745 = vxor.u32 %v741, 2147483648
  %v746 = vmul.f32 %v745, 1.442695
  %v747 = vpow.pop %v746
  %v748 = vadd.f32 %v747, 1.0
  %v749 = vrcp.pop %v748
  %v750 = vmul.f32 1.0, %v749
  %v751 = vxor.u32 %v742, 2147483648
  %v752 = vmul.f32 %v751, 1.442695
  %v753 = vpow.pop %v752
  %v754 = vadd.f32 %v753, 1.0
  %v755 = vrcp.pop %v754
  %v756 = vmul.f32 1.0, %v755
  %v757 = vtanh.pop %v743
  %v758 = vxor.u32 %v744, 2147483648
  %v759 = vmul.f32 %v758, 1.442695
  %v760 = vpow.pop %v759
  %v761 = vadd.f32 %v760, 1.0
  %v762 = vrcp.pop %v761
  %v763 = vmul.f32 1.0, %v762
  %v764 = vmul.f32 %v756, %v461
  %v765 = vmul.f32 %v750, %v757
  %v766 = vadd.f32 %v764, %v765
  %v767 = vtanh.pop %v766
  %v768 = vmul.f32 %v763, %v767
  %v769 = vpack.c.bf16 %v768, %v768
  %v770 = vld [vmem:[%s4] sm:$0xff]
  %v771 = vld [vmem:[%s4 + $0x8] sm:$0xff]
  %v772 = vld [vmem:[%s4 + $0x10] sm:$0xff]
  %v773 = vld [vmem:[%s4 + $0x18] sm:$0xff]
  %v774 = vld [vmem:[%s4 + $0x20] sm:$0xff]
  %v775 = vld [vmem:[%s4 + $0x28] sm:$0xff]
  %v776 = vld [vmem:[%s4 + $0x30] sm:$0xff]
  %v777 = vld [vmem:[%s4 + $0x38] sm:$0xff]
  %v778 = vld [vmem:[%s4 + $0x40] sm:$0xff]
  %v779 = vld [vmem:[%s4 + $0x48] sm:$0xff]
  %v780 = vld [vmem:[%s4 + $0x50] sm:$0xff]
  %v781 = vld [vmem:[%s4 + $0x58] sm:$0xff]
  %v782 = vld [vmem:[%s4 + $0x60] sm:$0xff]
  %v783 = vld [vmem:[%s4 + $0x68] sm:$0xff]
  %v784 = vld [vmem:[%s4 + $0x70] sm:$0xff]
  %v785 = vld [vmem:[%s4 + $0x78] sm:$0xff]
  %v786 = vld [vmem:[%s4 + $0x80] sm:$0xff]
  %v787 = vld [vmem:[%s4 + $0x88] sm:$0xff]
  %v788 = vld [vmem:[%s4 + $0x90] sm:$0xff]
  %v789 = vld [vmem:[%s4 + $0x98] sm:$0xff]
  %v790 = vld [vmem:[%s4 + $0xa0] sm:$0xff]
  %v791 = vld [vmem:[%s4 + $0xa8] sm:$0xff]
  %v792 = vld [vmem:[%s4 + $0xb0] sm:$0xff]
  %v793 = vld [vmem:[%s4 + $0xb8] sm:$0xff]
  %v794 = vld [vmem:[%s4 + $0xc0] sm:$0xff]
  %v795 = vld [vmem:[%s4 + $0xc8] sm:$0xff]
  %v796 = vld [vmem:[%s4 + $0xd0] sm:$0xff]
  %v797 = vld [vmem:[%s4 + $0xd8] sm:$0xff]
  %v798 = vld [vmem:[%s4 + $0xe0] sm:$0xff]
  %v799 = vld [vmem:[%s4 + $0xe8] sm:$0xff]
  %v800 = vld [vmem:[%s4 + $0xf0] sm:$0xff]
  %v801 = vld [vmem:[%s4 + $0xf8] sm:$0xff]
  %v802 = vld [vmem:[%s5] sm:$0xff]
  %v803 = vld [vmem:[%s5 + $0x8] sm:$0xff]
  %v804 = vld [vmem:[%s5 + $0x10] sm:$0xff]
  %v805 = vld [vmem:[%s5 + $0x18] sm:$0xff]
  %v806 = vld [vmem:[%s5 + $0x20] sm:$0xff]
  %v807 = vld [vmem:[%s5 + $0x28] sm:$0xff]
  %v808 = vld [vmem:[%s5 + $0x30] sm:$0xff]
  %v809 = vld [vmem:[%s5 + $0x38] sm:$0xff]
  %v810 = vld [vmem:[%s5 + $0x40] sm:$0xff]
  %v811 = vld [vmem:[%s5 + $0x48] sm:$0xff]
  %v812 = vld [vmem:[%s5 + $0x50] sm:$0xff]
  %v813 = vld [vmem:[%s5 + $0x58] sm:$0xff]
  %v814 = vld [vmem:[%s5 + $0x60] sm:$0xff]
  %v815 = vld [vmem:[%s5 + $0x68] sm:$0xff]
  %v816 = vld [vmem:[%s5 + $0x70] sm:$0xff]
  %v817 = vld [vmem:[%s5 + $0x78] sm:$0xff]
  %v818 = vld [vmem:[%s5 + $0x80] sm:$0xff]
  %v819 = vld [vmem:[%s5 + $0x88] sm:$0xff]
  %v820 = vld [vmem:[%s5 + $0x90] sm:$0xff]
  %v821 = vld [vmem:[%s5 + $0x98] sm:$0xff]
  %v822 = vld [vmem:[%s5 + $0xa0] sm:$0xff]
  %v823 = vld [vmem:[%s5 + $0xa8] sm:$0xff]
  %v824 = vld [vmem:[%s5 + $0xb0] sm:$0xff]
  %v825 = vld [vmem:[%s5 + $0xb8] sm:$0xff]
  %v826 = vld [vmem:[%s5 + $0xc0] sm:$0xff]
  %v827 = vld [vmem:[%s5 + $0xc8] sm:$0xff]
  %v828 = vld [vmem:[%s5 + $0xd0] sm:$0xff]
  %v829 = vld [vmem:[%s5 + $0xd8] sm:$0xff]
  %v830 = vld [vmem:[%s5 + $0xe0] sm:$0xff]
  %v831 = vld [vmem:[%s5 + $0xe8] sm:$0xff]
  %v832 = vld [vmem:[%s5 + $0xf0] sm:$0xff]
  %v833 = vld [vmem:[%s5 + $0xf8] sm:$0xff]
  %v866 = vunpack.c.l.b16 %v802
  %v867 = vunpack.c.h.b16 %v802
  %v868 = vunpack.c.l.b16 %v803
  %v869 = vunpack.c.h.b16 %v803
  %v870 = vunpack.c.l.b16 %v804
  %v871 = vunpack.c.h.b16 %v804
  %v872 = vunpack.c.l.b16 %v805
  %v873 = vunpack.c.h.b16 %v805
  %v874 = vunpack.c.l.b16 %v806
  %v875 = vunpack.c.h.b16 %v806
  %v876 = vunpack.c.l.b16 %v807
  %v877 = vunpack.c.h.b16 %v807
  %v878 = vunpack.c.l.b16 %v808
  %v879 = vunpack.c.h.b16 %v808
  %v880 = vunpack.c.l.b16 %v809
  %v881 = vunpack.c.h.b16 %v809
  %v882 = vunpack.c.l.b16 %v810
  %v883 = vunpack.c.h.b16 %v810
  %v884 = vunpack.c.l.b16 %v811
  %v885 = vunpack.c.h.b16 %v811
  %v886 = vunpack.c.l.b16 %v812
  %v887 = vunpack.c.h.b16 %v812
  %v888 = vunpack.c.l.b16 %v813
  %v889 = vunpack.c.h.b16 %v813
  %v890 = vunpack.c.l.b16 %v814
  %v891 = vunpack.c.h.b16 %v814
  %v892 = vunpack.c.l.b16 %v815
  %v893 = vunpack.c.h.b16 %v815
  %v894 = vunpack.c.l.b16 %v816
  %v895 = vunpack.c.h.b16 %v816
  %v896 = vunpack.c.l.b16 %v817
  %v897 = vunpack.c.h.b16 %v817
  %v898 = vunpack.c.l.b16 %v818
  %v899 = vunpack.c.h.b16 %v818
  %v900 = vunpack.c.l.b16 %v819
  %v901 = vunpack.c.h.b16 %v819
  %v902 = vunpack.c.l.b16 %v820
  %v903 = vunpack.c.h.b16 %v820
  %v904 = vunpack.c.l.b16 %v821
  %v905 = vunpack.c.h.b16 %v821
  %v906 = vunpack.c.l.b16 %v822
  %v907 = vunpack.c.h.b16 %v822
  %v908 = vunpack.c.l.b16 %v823
  %v909 = vunpack.c.h.b16 %v823
  %v910 = vunpack.c.l.b16 %v824
  %v911 = vunpack.c.h.b16 %v824
  %v912 = vunpack.c.l.b16 %v825
  %v913 = vunpack.c.h.b16 %v825
  %v914 = vunpack.c.l.b16 %v826
  %v915 = vunpack.c.h.b16 %v826
  %v916 = vunpack.c.l.b16 %v827
  %v917 = vunpack.c.h.b16 %v827
  %v918 = vunpack.c.l.b16 %v828
  %v919 = vunpack.c.h.b16 %v828
  %v920 = vunpack.c.l.b16 %v829
  %v921 = vunpack.c.h.b16 %v829
  %v922 = vunpack.c.l.b16 %v830
  %v923 = vunpack.c.h.b16 %v830
  %v924 = vunpack.c.l.b16 %v831
  %v925 = vunpack.c.h.b16 %v831
  %v926 = vunpack.c.l.b16 %v832
  %v927 = vunpack.c.h.b16 %v832
  %v928 = vunpack.c.l.b16 %v833
  %v929 = vunpack.c.h.b16 %v833
  %v930 = vpack.c.b16 %v870, %v866
  %v931 = vpack.c.b16 %v871, %v867
  %v932 = vpack.c.b16 %v872, %v868
  %v933 = vpack.c.b16 %v873, %v869
  %v934 = vpack.c.b16 %v878, %v874
  %v935 = vpack.c.b16 %v879, %v875
  %v936 = vpack.c.b16 %v880, %v876
  %v937 = vpack.c.b16 %v881, %v877
  %v938 = vpack.c.b16 %v886, %v882
  %v939 = vpack.c.b16 %v887, %v883
  %v940 = vpack.c.b16 %v888, %v884
  %v941 = vpack.c.b16 %v889, %v885
  %v942 = vpack.c.b16 %v894, %v890
  %v943 = vpack.c.b16 %v895, %v891
  %v944 = vpack.c.b16 %v896, %v892
  %v945 = vpack.c.b16 %v897, %v893
  %v946 = vpack.c.b16 %v902, %v898
  %v947 = vpack.c.b16 %v903, %v899
  %v948 = vpack.c.b16 %v904, %v900
  %v949 = vpack.c.b16 %v905, %v901
  %v950 = vpack.c.b16 %v910, %v906
  %v951 = vpack.c.b16 %v911, %v907
  %v952 = vpack.c.b16 %v912, %v908
  %v953 = vpack.c.b16 %v913, %v909
  %v954 = vpack.c.b16 %v918, %v914
  %v955 = vpack.c.b16 %v919, %v915
  %v956 = vpack.c.b16 %v920, %v916
  %v957 = vpack.c.b16 %v921, %v917
  %v958 = vpack.c.b16 %v926, %v922
  %v959 = vpack.c.b16 %v927, %v923
  %v960 = vpack.c.b16 %v928, %v924
  %v961 = vpack.c.b16 %v929, %v925
  %994 = vmatprep.subr.bf16.mxu0 %v959
  %995 = vmatpush1.bf16.msra.mxu0 %v958
  %996 = vmatprep.subr.bf16.mxu0 %v955
  %997 = vmatpush1.bf16.msra.mxu0 %v954
  %998 = vmatprep.subr.bf16.mxu0 %v951
  %999 = vmatpush1.bf16.msra.mxu0 %v950
  %1000 = vmatprep.subr.bf16.mxu0 %v947
  %1001 = vmatpush1.bf16.msra.mxu0 %v946
  %1002 = vmatprep.subr.bf16.mxu0 %v943
  %1003 = vmatpush1.bf16.msra.mxu0 %v942
  %1004 = vmatprep.subr.bf16.mxu0 %v939
  %1005 = vmatpush1.bf16.msra.mxu0 %v938
  %1006 = vmatprep.subr.bf16.mxu0 %v935
  %1007 = vmatpush1.bf16.msra.mxu0 %v934
  %1008 = vmatprep.subr.bf16.mxu0 %v931
  %1009 = vmatpush1.bf16.msra.mxu0 %v930
  %1010 = vmatprep.subr.bf16.mxu0 0
  %1011 = vmatpush2.bf16.msra.mxu0 0
  %1012 = vmatprep.subr.bf16.mxu0 0
  %1013 = vmatpush2.bf16.msra.mxu0 0
  %1014 = vmatprep.subr.bf16.mxu0 0
  %1015 = vmatpush2.bf16.msra.mxu0 0
  %1016 = vmatprep.subr.bf16.mxu0 0
  %1017 = vmatpush2.bf16.msra.mxu0 0
  %1018 = vmatprep.subr.bf16.mxu0 0
  %1019 = vmatpush2.bf16.msra.mxu0 0
  %1020 = vmatprep.subr.bf16.mxu0 0
  %1021 = vmatpush2.bf16.msra.mxu0 0
  %1022 = vmatprep.subr.bf16.mxu0 0
  %1023 = vmatpush2.bf16.msra.mxu0 0
  %1024 = vmatprep.subr.bf16.mxu0 0
  %1025 = vmatpush2.bf16.msra.mxu0 0
  %1026 = vmatprep.mubr.bf16.mxu0 0
  %1027 = vmatmul.mubr.bf16.gmra.mxu0 %v460
  %v1028 = vpop.f32.mrf.mxu0
  %v1029 = vadd.f32 0.0, %v1028
  %v1030 = vpop.f32.mrf.mxu0
  %v1031 = vadd.f32 0.0, %v1030
  %v1032 = vpop.f32.mrf.mxu0
  %v1033 = vpop.f32.mrf.mxu0
  %1034 = vdwg.mxu0
  %1035 = vmatprep.subr.bf16.mxu0 %v961
  %1036 = vmatpush1.bf16.msra.mxu0 %v960
  %1037 = vmatprep.subr.bf16.mxu0 %v957
  %1038 = vmatpush1.bf16.msra.mxu0 %v956
  %1039 = vmatprep.subr.bf16.mxu0 %v953
  %1040 = vmatpush1.bf16.msra.mxu0 %v952
  %1041 = vmatprep.subr.bf16.mxu0 %v949
  %1042 = vmatpush1.bf16.msra.mxu0 %v948
  %1043 = vmatprep.subr.bf16.mxu0 %v945
  %1044 = vmatpush1.bf16.msra.mxu0 %v944
  %1045 = vmatprep.subr.bf16.mxu0 %v941
  %1046 = vmatpush1.bf16.msra.mxu0 %v940
  %1047 = vmatprep.subr.bf16.mxu0 %v937
  %1048 = vmatpush1.bf16.msra.mxu0 %v936
  %1049 = vmatprep.subr.bf16.mxu0 %v933
  %1050 = vmatpush1.bf16.msra.mxu0 %v932
  %1051 = vmatprep.subr.bf16.mxu0 0
  %1052 = vmatpush2.bf16.msra.mxu0 0
  %1053 = vmatprep.subr.bf16.mxu0 0
  %1054 = vmatpush2.bf16.msra.mxu0 0
  %1055 = vmatprep.subr.bf16.mxu0 0
  %1056 = vmatpush2.bf16.msra.mxu0 0
  %1057 = vmatprep.subr.bf16.mxu0 0
  %1058 = vmatpush2.bf16.msra.mxu0 0
  %1059 = vmatprep.subr.bf16.mxu0 0
  %1060 = vmatpush2.bf16.msra.mxu0 0
  %1061 = vmatprep.subr.bf16.mxu0 0
  %1062 = vmatpush2.bf16.msra.mxu0 0
  %1063 = vmatprep.subr.bf16.mxu0 0
  %1064 = vmatpush2.bf16.msra.mxu0 0
  %1065 = vmatprep.subr.bf16.mxu0 0
  %1066 = vmatpush2.bf16.msra.mxu0 0
  %1067 = vmatprep.mubr.bf16.mxu0 0
  %1068 = vmatmul.mubr.bf16.gmra.mxu0 %v460
  %v1069 = vpop.f32.mrf.mxu0
  %v1070 = vadd.f32 0.0, %v1069
  %v1071 = vpop.f32.mrf.mxu0
  %v1072 = vadd.f32 0.0, %v1071
  %v1073 = vpop.f32.mrf.mxu0
  %v1074 = vpop.f32.mrf.mxu0
  %1075 = vdwg.mxu0
  %v1108 = vunpack.c.l.b16 %v770
  %v1109 = vunpack.c.h.b16 %v770
  %v1110 = vunpack.c.l.b16 %v771
  %v1111 = vunpack.c.h.b16 %v771
  %v1112 = vunpack.c.l.b16 %v772
  %v1113 = vunpack.c.h.b16 %v772
  %v1114 = vunpack.c.l.b16 %v773
  %v1115 = vunpack.c.h.b16 %v773
  %v1116 = vunpack.c.l.b16 %v774
  %v1117 = vunpack.c.h.b16 %v774
  %v1118 = vunpack.c.l.b16 %v775
  %v1119 = vunpack.c.h.b16 %v775
  %v1120 = vunpack.c.l.b16 %v776
  %v1121 = vunpack.c.h.b16 %v776
  %v1122 = vunpack.c.l.b16 %v777
  %v1123 = vunpack.c.h.b16 %v777
  %v1124 = vunpack.c.l.b16 %v778
  %v1125 = vunpack.c.h.b16 %v778
  %v1126 = vunpack.c.l.b16 %v779
  %v1127 = vunpack.c.h.b16 %v779
  %v1128 = vunpack.c.l.b16 %v780
  %v1129 = vunpack.c.h.b16 %v780
  %v1130 = vunpack.c.l.b16 %v781
  %v1131 = vunpack.c.h.b16 %v781
  %v1132 = vunpack.c.l.b16 %v782
  %v1133 = vunpack.c.h.b16 %v782
  %v1134 = vunpack.c.l.b16 %v783
  %v1135 = vunpack.c.h.b16 %v783
  %v1136 = vunpack.c.l.b16 %v784
  %v1137 = vunpack.c.h.b16 %v784
  %v1138 = vunpack.c.l.b16 %v785
  %v1139 = vunpack.c.h.b16 %v785
  %v1140 = vunpack.c.l.b16 %v786
  %v1141 = vunpack.c.h.b16 %v786
  %v1142 = vunpack.c.l.b16 %v787
  %v1143 = vunpack.c.h.b16 %v787
  %v1144 = vunpack.c.l.b16 %v788
  %v1145 = vunpack.c.h.b16 %v788
  %v1146 = vunpack.c.l.b16 %v789
  %v1147 = vunpack.c.h.b16 %v789
  %v1148 = vunpack.c.l.b16 %v790
  %v1149 = vunpack.c.h.b16 %v790
  %v1150 = vunpack.c.l.b16 %v791
  %v1151 = vunpack.c.h.b16 %v791
  %v1152 = vunpack.c.l.b16 %v792
  %v1153 = vunpack.c.h.b16 %v792
  %v1154 = vunpack.c.l.b16 %v793
  %v1155 = vunpack.c.h.b16 %v793
  %v1156 = vunpack.c.l.b16 %v794
  %v1157 = vunpack.c.h.b16 %v794
  %v1158 = vunpack.c.l.b16 %v795
  %v1159 = vunpack.c.h.b16 %v795
  %v1160 = vunpack.c.l.b16 %v796
  %v1161 = vunpack.c.h.b16 %v796
  %v1162 = vunpack.c.l.b16 %v797
  %v1163 = vunpack.c.h.b16 %v797
  %v1164 = vunpack.c.l.b16 %v798
  %v1165 = vunpack.c.h.b16 %v798
  %v1166 = vunpack.c.l.b16 %v799
  %v1167 = vunpack.c.h.b16 %v799
  %v1168 = vunpack.c.l.b16 %v800
  %v1169 = vunpack.c.h.b16 %v800
  %v1170 = vunpack.c.l.b16 %v801
  %v1171 = vunpack.c.h.b16 %v801
  %v1172 = vpack.c.b16 %v1112, %v1108
  %v1173 = vpack.c.b16 %v1113, %v1109
  %v1174 = vpack.c.b16 %v1114, %v1110
  %v1175 = vpack.c.b16 %v1115, %v1111
  %v1176 = vpack.c.b16 %v1120, %v1116
  %v1177 = vpack.c.b16 %v1121, %v1117
  %v1178 = vpack.c.b16 %v1122, %v1118
  %v1179 = vpack.c.b16 %v1123, %v1119
  %v1180 = vpack.c.b16 %v1128, %v1124
  %v1181 = vpack.c.b16 %v1129, %v1125
  %v1182 = vpack.c.b16 %v1130, %v1126
  %v1183 = vpack.c.b16 %v1131, %v1127
  %v1184 = vpack.c.b16 %v1136, %v1132
  %v1185 = vpack.c.b16 %v1137, %v1133
  %v1186 = vpack.c.b16 %v1138, %v1134
  %v1187 = vpack.c.b16 %v1139, %v1135
  %v1188 = vpack.c.b16 %v1144, %v1140
  %v1189 = vpack.c.b16 %v1145, %v1141
  %v1190 = vpack.c.b16 %v1146, %v1142
  %v1191 = vpack.c.b16 %v1147, %v1143
  %v1192 = vpack.c.b16 %v1152, %v1148
  %v1193 = vpack.c.b16 %v1153, %v1149
  %v1194 = vpack.c.b16 %v1154, %v1150
  %v1195 = vpack.c.b16 %v1155, %v1151
  %v1196 = vpack.c.b16 %v1160, %v1156
  %v1197 = vpack.c.b16 %v1161, %v1157
  %v1198 = vpack.c.b16 %v1162, %v1158
  %v1199 = vpack.c.b16 %v1163, %v1159
  %v1200 = vpack.c.b16 %v1168, %v1164
  %v1201 = vpack.c.b16 %v1169, %v1165
  %v1202 = vpack.c.b16 %v1170, %v1166
  %v1203 = vpack.c.b16 %v1171, %v1167
  %1236 = vmatprep.subr.bf16.mxu0 %v1201
  %1237 = vmatpush1.bf16.msra.mxu0 %v1200
  %1238 = vmatprep.subr.bf16.mxu0 %v1197
  %1239 = vmatpush1.bf16.msra.mxu0 %v1196
  %1240 = vmatprep.subr.bf16.mxu0 %v1193
  %1241 = vmatpush1.bf16.msra.mxu0 %v1192
  %1242 = vmatprep.subr.bf16.mxu0 %v1189
  %1243 = vmatpush1.bf16.msra.mxu0 %v1188
  %1244 = vmatprep.subr.bf16.mxu0 %v1185
  %1245 = vmatpush1.bf16.msra.mxu0 %v1184
  %1246 = vmatprep.subr.bf16.mxu0 %v1181
  %1247 = vmatpush1.bf16.msra.mxu0 %v1180
  %1248 = vmatprep.subr.bf16.mxu0 %v1177
  %1249 = vmatpush1.bf16.msra.mxu0 %v1176
  %1250 = vmatprep.subr.bf16.mxu0 %v1173
  %1251 = vmatpush1.bf16.msra.mxu0 %v1172
  %1252 = vmatprep.subr.bf16.mxu0 0
  %1253 = vmatpush2.bf16.msra.mxu0 0
  %1254 = vmatprep.subr.bf16.mxu0 0
  %1255 = vmatpush2.bf16.msra.mxu0 0
  %1256 = vmatprep.subr.bf16.mxu0 0
  %1257 = vmatpush2.bf16.msra.mxu0 0
  %1258 = vmatprep.subr.bf16.mxu0 0
  %1259 = vmatpush2.bf16.msra.mxu0 0
  %1260 = vmatprep.subr.bf16.mxu0 0
  %1261 = vmatpush2.bf16.msra.mxu0 0
  %1262 = vmatprep.subr.bf16.mxu0 0
  %1263 = vmatpush2.bf16.msra.mxu0 0
  %1264 = vmatprep.subr.bf16.mxu0 0
  %1265 = vmatpush2.bf16.msra.mxu0 0
  %1266 = vmatprep.subr.bf16.mxu0 0
  %1267 = vmatpush2.bf16.msra.mxu0 0
  %1268 = vmatprep.mubr.bf16.mxu0 0
  %1269 = vmatmul.mubr.bf16.gmra.mxu0 %v769
  %v1270 = vpop.f32.mrf.mxu0
  %v1271 = vadd.f32 %v1029, %v1270
  %v1272 = vpop.f32.mrf.mxu0
  %v1273 = vadd.f32 %v1031, %v1272
  %v1274 = vpop.f32.mrf.mxu0
  %v1275 = vpop.f32.mrf.mxu0
  %1276 = vdwg.mxu0
  %1277 = vmatprep.subr.bf16.mxu0 %v1203
  %1278 = vmatpush1.bf16.msra.mxu0 %v1202
  %1279 = vmatprep.subr.bf16.mxu0 %v1199
  %1280 = vmatpush1.bf16.msra.mxu0 %v1198
  %1281 = vmatprep.subr.bf16.mxu0 %v1195
  %1282 = vmatpush1.bf16.msra.mxu0 %v1194
  %1283 = vmatprep.subr.bf16.mxu0 %v1191
  %1284 = vmatpush1.bf16.msra.mxu0 %v1190
  %1285 = vmatprep.subr.bf16.mxu0 %v1187
  %1286 = vmatpush1.bf16.msra.mxu0 %v1186
  %1287 = vmatprep.subr.bf16.mxu0 %v1183
  %1288 = vmatpush1.bf16.msra.mxu0 %v1182
  %1289 = vmatprep.subr.bf16.mxu0 %v1179
  %1290 = vmatpush1.bf16.msra.mxu0 %v1178
  %1291 = vmatprep.subr.bf16.mxu0 %v1175
  %1292 = vmatpush1.bf16.msra.mxu0 %v1174
  %1293 = vmatprep.subr.bf16.mxu0 0
  %1294 = vmatpush2.bf16.msra.mxu0 0
  %1295 = vmatprep.subr.bf16.mxu0 0
  %1296 = vmatpush2.bf16.msra.mxu0 0
  %1297 = vmatprep.subr.bf16.mxu0 0
  %1298 = vmatpush2.bf16.msra.mxu0 0
  %1299 = vmatprep.subr.bf16.mxu0 0
  %1300 = vmatpush2.bf16.msra.mxu0 0
  %1301 = vmatprep.subr.bf16.mxu0 0
  %1302 = vmatpush2.bf16.msra.mxu0 0
  %1303 = vmatprep.subr.bf16.mxu0 0
  %1304 = vmatpush2.bf16.msra.mxu0 0
  %1305 = vmatprep.subr.bf16.mxu0 0
  %1306 = vmatpush2.bf16.msra.mxu0 0
  %1307 = vmatprep.subr.bf16.mxu0 0
  %1308 = vmatpush2.bf16.msra.mxu0 0
  %1309 = vmatprep.mubr.bf16.mxu0 0
  %1310 = vmatmul.mubr.bf16.gmra.mxu0 %v769
  %v1311 = vpop.f32.mrf.mxu0
  %v1312 = vadd.f32 %v1070, %v1311
  %v1313 = vpop.f32.mrf.mxu0
  %v1314 = vadd.f32 %v1072, %v1313
  %v1315 = vpop.f32.mrf.mxu0
  %v1316 = vpop.f32.mrf.mxu0
  %1317 = vdwg.mxu0
  %v1318 = vld [vmem:[%s6] sm:$0xf]
  %v1320 = vlaneseq
  %v1321 = vshrl.u32 %v1320, 7
  %v1322 = vsub.s32 0, %v1321
  %v1323 = vrot.slane %v1318, %v1322
  %v1324 = vlaneseq
  %v1325 = vshrl.u32 %v1324, 7
  %v1326 = vsub.s32 1, %v1325
  %v1327 = vrot.slane %v1318, %v1326
  %v1328 = vlaneseq
  %v1329 = vshrl.u32 %v1328, 7
  %v1330 = vsub.s32 2, %v1329
  %v1331 = vrot.slane %v1318, %v1330
  %v1332 = vlaneseq
  %v1333 = vshrl.u32 %v1332, 7
  %v1334 = vsub.s32 3, %v1333
  %v1335 = vrot.slane %v1318, %v1334
  %v1340 = vadd.f32 %v1271, %v1323
  %v1341 = vadd.f32 %v1273, %v1327
  %v1342 = vadd.f32 %v1312, %v1331
  %v1343 = vadd.f32 %v1314, %v1335
  %v1344 = vxor.u32 %v1340, 2147483648
  %v1345 = vmul.f32 %v1344, 1.442695
  %v1346 = vpow.pop %v1345
  %v1347 = vadd.f32 %v1346, 1.0
  %v1348 = vrcp.pop %v1347
  %v1349 = vmul.f32 1.0, %v1348
  %v1350 = vxor.u32 %v1341, 2147483648
  %v1351 = vmul.f32 %v1350, 1.442695
  %v1352 = vpow.pop %v1351
  %v1353 = vadd.f32 %v1352, 1.0
  %v1354 = vrcp.pop %v1353
  %v1355 = vmul.f32 1.0, %v1354
  %v1356 = vtanh.pop %v1342
  %v1357 = vxor.u32 %v1343, 2147483648
  %v1358 = vmul.f32 %v1357, 1.442695
  %v1359 = vpow.pop %v1358
  %v1360 = vadd.f32 %v1359, 1.0
  %v1361 = vrcp.pop %v1360
  %v1362 = vmul.f32 1.0, %v1361
  %v1363 = vmul.f32 %v1355, %v462
  %v1364 = vmul.f32 %v1349, %v1356
  %v1365 = vadd.f32 %v1363, %v1364
  %v1366 = vtanh.pop %v1365
  %v1367 = vmul.f32 %v1362, %v1366
  %v1368 = vpack.c.bf16 %v1367, %v1367
  %s1369 = scalar_lea.vmem [#allocation2], 32
  %v1370 = vld [vmem:[%s1369] sm:$0xff]
  %v1371 = vld [vmem:[%s1369 + $0x8] sm:$0xff]
  %v1372 = vld [vmem:[%s1369 + $0x10] sm:$0xff]
  %v1373 = vld [vmem:[%s1369 + $0x18] sm:$0xff]
  %1374 = vmatprep.subr.bf16.mxu0 %v624
  %1375 = vmatpush1.bf16.msra.mxu0 %v623
  %1376 = vmatprep.subr.bf16.mxu0 %v620
  %1377 = vmatpush1.bf16.msra.mxu0 %v619
  %1378 = vmatprep.subr.bf16.mxu0 %v616
  %1379 = vmatpush1.bf16.msra.mxu0 %v615
  %1380 = vmatprep.subr.bf16.mxu0 %v612
  %1381 = vmatpush1.bf16.msra.mxu0 %v611
  %1382 = vmatprep.subr.bf16.mxu0 %v608
  %1383 = vmatpush1.bf16.msra.mxu0 %v607
  %1384 = vmatprep.subr.bf16.mxu0 %v604
  %1385 = vmatpush1.bf16.msra.mxu0 %v603
  %1386 = vmatprep.subr.bf16.mxu0 %v600
  %1387 = vmatpush1.bf16.msra.mxu0 %v599
  %1388 = vmatprep.subr.bf16.mxu0 %v596
  %1389 = vmatpush1.bf16.msra.mxu0 %v595
  %1390 = vmatprep.subr.bf16.mxu0 0
  %1391 = vmatpush2.bf16.msra.mxu0 0
  %1392 = vmatprep.subr.bf16.mxu0 0
  %1393 = vmatpush2.bf16.msra.mxu0 0
  %1394 = vmatprep.subr.bf16.mxu0 0
  %1395 = vmatpush2.bf16.msra.mxu0 0
  %1396 = vmatprep.subr.bf16.mxu0 0
  %1397 = vmatpush2.bf16.msra.mxu0 0
  %1398 = vmatprep.subr.bf16.mxu0 0
  %1399 = vmatpush2.bf16.msra.mxu0 0
  %1400 = vmatprep.subr.bf16.mxu0 0
  %1401 = vmatpush2.bf16.msra.mxu0 0
  %1402 = vmatprep.subr.bf16.mxu0 0
  %1403 = vmatpush2.bf16.msra.mxu0 0
  %1404 = vmatprep.subr.bf16.mxu0 0
  %1405 = vmatpush2.bf16.msra.mxu0 0
  %1406 = vmatprep.mubr.bf16.mxu0 0
  %1407 = vmatmul.mubr.bf16.gmra.mxu0 %v769
  %v1408 = vpop.f32.mrf.mxu0
  %v1409 = vadd.f32 0.0, %v1408
  %v1410 = vpop.f32.mrf.mxu0
  %v1411 = vadd.f32 0.0, %v1410
  %v1412 = vpop.f32.mrf.mxu0
  %v1413 = vpop.f32.mrf.mxu0
  %1414 = vdwg.mxu0
  %1415 = vmatprep.subr.bf16.mxu0 %v626
  %1416 = vmatpush1.bf16.msra.mxu0 %v625
  %1417 = vmatprep.subr.bf16.mxu0 %v622
  %1418 = vmatpush1.bf16.msra.mxu0 %v621
  %1419 = vmatprep.subr.bf16.mxu0 %v618
  %1420 = vmatpush1.bf16.msra.mxu0 %v617
  %1421 = vmatprep.subr.bf16.mxu0 %v614
  %1422 = vmatpush1.bf16.msra.mxu0 %v613
  %1423 = vmatprep.subr.bf16.mxu0 %v610
  %1424 = vmatpush1.bf16.msra.mxu0 %v609
  %1425 = vmatprep.subr.bf16.mxu0 %v606
  %1426 = vmatpush1.bf16.msra.mxu0 %v605
  %1427 = vmatprep.subr.bf16.mxu0 %v602
  %1428 = vmatpush1.bf16.msra.mxu0 %v601
  %1429 = vmatprep.subr.bf16.mxu0 %v598
  %1430 = vmatpush1.bf16.msra.mxu0 %v597
  %1431 = vmatprep.subr.bf16.mxu0 0
  %1432 = vmatpush2.bf16.msra.mxu0 0
  %1433 = vmatprep.subr.bf16.mxu0 0
  %1434 = vmatpush2.bf16.msra.mxu0 0
  %1435 = vmatprep.subr.bf16.mxu0 0
  %1436 = vmatpush2.bf16.msra.mxu0 0
  %1437 = vmatprep.subr.bf16.mxu0 0
  %1438 = vmatpush2.bf16.msra.mxu0 0
  %1439 = vmatprep.subr.bf16.mxu0 0
  %1440 = vmatpush2.bf16.msra.mxu0 0
  %1441 = vmatprep.subr.bf16.mxu0 0
  %1442 = vmatpush2.bf16.msra.mxu0 0
  %1443 = vmatprep.subr.bf16.mxu0 0
  %1444 = vmatpush2.bf16.msra.mxu0 0
  %1445 = vmatprep.subr.bf16.mxu0 0
  %1446 = vmatpush2.bf16.msra.mxu0 0
  %1447 = vmatprep.mubr.bf16.mxu0 0
  %1448 = vmatmul.mubr.bf16.gmra.mxu0 %v769
  %v1449 = vpop.f32.mrf.mxu0
  %v1450 = vadd.f32 0.0, %v1449
  %v1451 = vpop.f32.mrf.mxu0
  %v1452 = vadd.f32 0.0, %v1451
  %v1453 = vpop.f32.mrf.mxu0
  %v1454 = vpop.f32.mrf.mxu0
  %1455 = vdwg.mxu0
  %v1456 = vadd.f32 %v1370, %v1409
  %v1457 = vadd.f32 %v1371, %v1411
  %v1458 = vadd.f32 %v1372, %v1450
  %v1459 = vadd.f32 %v1373, %v1452
  %v1460 = vxor.u32 %v1456, 2147483648
  %v1461 = vmul.f32 %v1460, 1.442695
  %v1462 = vpow.pop %v1461
  %v1463 = vadd.f32 %v1462, 1.0
  %v1464 = vrcp.pop %v1463
  %v1465 = vmul.f32 1.0, %v1464
  %v1466 = vxor.u32 %v1457, 2147483648
  %v1467 = vmul.f32 %v1466, 1.442695
  %v1468 = vpow.pop %v1467
  %v1469 = vadd.f32 %v1468, 1.0
  %v1470 = vrcp.pop %v1469
  %v1471 = vmul.f32 1.0, %v1470
  %v1472 = vtanh.pop %v1458
  %v1473 = vxor.u32 %v1459, 2147483648
  %v1474 = vmul.f32 %v1473, 1.442695
  %v1475 = vpow.pop %v1474
  %v1476 = vadd.f32 %v1475, 1.0
  %v1477 = vrcp.pop %v1476
  %v1478 = vmul.f32 1.0, %v1477
  %v1479 = vmul.f32 %v1471, %v766
  %v1480 = vmul.f32 %v1465, %v1472
  %v1481 = vadd.f32 %v1479, %v1480
  %v1482 = vtanh.pop %v1481
  %v1483 = vmul.f32 %v1478, %v1482
  %v1484 = vpack.c.bf16 %v1483, %v1483
  %1485 = vmatprep.subr.bf16.mxu0 %v959
  %1486 = vmatpush1.bf16.msra.mxu0 %v958
  %1487 = vmatprep.subr.bf16.mxu0 %v955
  %1488 = vmatpush1.bf16.msra.mxu0 %v954
  %1489 = vmatprep.subr.bf16.mxu0 %v951
  %1490 = vmatpush1.bf16.msra.mxu0 %v950
  %1491 = vmatprep.subr.bf16.mxu0 %v947
  %1492 = vmatpush1.bf16.msra.mxu0 %v946
  %1493 = vmatprep.subr.bf16.mxu0 %v943
  %1494 = vmatpush1.bf16.msra.mxu0 %v942
  %1495 = vmatprep.subr.bf16.mxu0 %v939
  %1496 = vmatpush1.bf16.msra.mxu0 %v938
  %1497 = vmatprep.subr.bf16.mxu0 %v935
  %1498 = vmatpush1.bf16.msra.mxu0 %v934
  %1499 = vmatprep.subr.bf16.mxu0 %v931
  %1500 = vmatpush1.bf16.msra.mxu0 %v930
  %1501 = vmatprep.subr.bf16.mxu0 0
  %1502 = vmatpush2.bf16.msra.mxu0 0
  %1503 = vmatprep.subr.bf16.mxu0 0
  %1504 = vmatpush2.bf16.msra.mxu0 0
  %1505 = vmatprep.subr.bf16.mxu0 0
  %1506 = vmatpush2.bf16.msra.mxu0 0
  %1507 = vmatprep.subr.bf16.mxu0 0
  %1508 = vmatpush2.bf16.msra.mxu0 0
  %1509 = vmatprep.subr.bf16.mxu0 0
  %1510 = vmatpush2.bf16.msra.mxu0 0
  %1511 = vmatprep.subr.bf16.mxu0 0
  %1512 = vmatpush2.bf16.msra.mxu0 0
  %1513 = vmatprep.subr.bf16.mxu0 0
  %1514 = vmatpush2.bf16.msra.mxu0 0
  %1515 = vmatprep.subr.bf16.mxu0 0
  %1516 = vmatpush2.bf16.msra.mxu0 0
  %1517 = vmatprep.mubr.bf16.mxu0 0
  %1518 = vmatmul.mubr.bf16.gmra.mxu0 %v1368
  %v1519 = vpop.f32.mrf.mxu0
  %v1520 = vadd.f32 0.0, %v1519
  %v1521 = vpop.f32.mrf.mxu0
  %v1522 = vadd.f32 0.0, %v1521
  %v1523 = vpop.f32.mrf.mxu0
  %v1524 = vpop.f32.mrf.mxu0
  %1525 = vdwg.mxu0
  %1526 = vmatprep.subr.bf16.mxu0 %v961
  %1527 = vmatpush1.bf16.msra.mxu0 %v960
  %1528 = vmatprep.subr.bf16.mxu0 %v957
  %1529 = vmatpush1.bf16.msra.mxu0 %v956
  %1530 = vmatprep.subr.bf16.mxu0 %v953
  %1531 = vmatpush1.bf16.msra.mxu0 %v952
  %1532 = vmatprep.subr.bf16.mxu0 %v949
  %1533 = vmatpush1.bf16.msra.mxu0 %v948
  %1534 = vmatprep.subr.bf16.mxu0 %v945
  %1535 = vmatpush1.bf16.msra.mxu0 %v944
  %1536 = vmatprep.subr.bf16.mxu0 %v941
  %1537 = vmatpush1.bf16.msra.mxu0 %v940
  %1538 = vmatprep.subr.bf16.mxu0 %v937
  %1539 = vmatpush1.bf16.msra.mxu0 %v936
  %1540 = vmatprep.subr.bf16.mxu0 %v933
  %1541 = vmatpush1.bf16.msra.mxu0 %v932
  %1542 = vmatprep.subr.bf16.mxu0 0
  %1543 = vmatpush2.bf16.msra.mxu0 0
  %1544 = vmatprep.subr.bf16.mxu0 0
  %1545 = vmatpush2.bf16.msra.mxu0 0
  %1546 = vmatprep.subr.bf16.mxu0 0
  %1547 = vmatpush2.bf16.msra.mxu0 0
  %1548 = vmatprep.subr.bf16.mxu0 0
  %1549 = vmatpush2.bf16.msra.mxu0 0
  %1550 = vmatprep.subr.bf16.mxu0 0
  %1551 = vmatpush2.bf16.msra.mxu0 0
  %1552 = vmatprep.subr.bf16.mxu0 0
  %1553 = vmatpush2.bf16.msra.mxu0 0
  %1554 = vmatprep.subr.bf16.mxu0 0
  %1555 = vmatpush2.bf16.msra.mxu0 0
  %1556 = vmatprep.subr.bf16.mxu0 0
  %1557 = vmatpush2.bf16.msra.mxu0 0
  %1558 = vmatprep.mubr.bf16.mxu0 0
  %1559 = vmatmul.mubr.bf16.gmra.mxu0 %v1368
  %v1560 = vpop.f32.mrf.mxu0
  %v1561 = vadd.f32 0.0, %v1560
  %v1562 = vpop.f32.mrf.mxu0
  %v1563 = vadd.f32 0.0, %v1562
  %v1564 = vpop.f32.mrf.mxu0
  %v1565 = vpop.f32.mrf.mxu0
  %1566 = vdwg.mxu0
  %1567 = vmatprep.subr.bf16.mxu0 %v1201
  %1568 = vmatpush1.bf16.msra.mxu0 %v1200
  %1569 = vmatprep.subr.bf16.mxu0 %v1197
  %1570 = vmatpush1.bf16.msra.mxu0 %v1196
  %1571 = vmatprep.subr.bf16.mxu0 %v1193
  %1572 = vmatpush1.bf16.msra.mxu0 %v1192
  %1573 = vmatprep.subr.bf16.mxu0 %v1189
  %1574 = vmatpush1.bf16.msra.mxu0 %v1188
  %1575 = vmatprep.subr.bf16.mxu0 %v1185
  %1576 = vmatpush1.bf16.msra.mxu0 %v1184
  %1577 = vmatprep.subr.bf16.mxu0 %v1181
  %1578 = vmatpush1.bf16.msra.mxu0 %v1180
  %1579 = vmatprep.subr.bf16.mxu0 %v1177
  %1580 = vmatpush1.bf16.msra.mxu0 %v1176
  %1581 = vmatprep.subr.bf16.mxu0 %v1173
  %1582 = vmatpush1.bf16.msra.mxu0 %v1172
  %1583 = vmatprep.subr.bf16.mxu0 0
  %1584 = vmatpush2.bf16.msra.mxu0 0
  %1585 = vmatprep.subr.bf16.mxu0 0
  %1586 = vmatpush2.bf16.msra.mxu0 0
  %1587 = vmatprep.subr.bf16.mxu0 0
  %1588 = vmatpush2.bf16.msra.mxu0 0
  %1589 = vmatprep.subr.bf16.mxu0 0
  %1590 = vmatpush2.bf16.msra.mxu0 0
  %1591 = vmatprep.subr.bf16.mxu0 0
  %1592 = vmatpush2.bf16.msra.mxu0 0
  %1593 = vmatprep.subr.bf16.mxu0 0
  %1594 = vmatpush2.bf16.msra.mxu0 0
  %1595 = vmatprep.subr.bf16.mxu0 0
  %1596 = vmatpush2.bf16.msra.mxu0 0
  %1597 = vmatprep.subr.bf16.mxu0 0
  %1598 = vmatpush2.bf16.msra.mxu0 0
  %1599 = vmatprep.mubr.bf16.mxu0 0
  %1600 = vmatmul.mubr.bf16.gmra.mxu0 %v1484
  %v1601 = vpop.f32.mrf.mxu0
  %v1602 = vadd.f32 %v1520, %v1601
  %v1603 = vpop.f32.mrf.mxu0
  %v1604 = vadd.f32 %v1522, %v1603
  %v1605 = vpop.f32.mrf.mxu0
  %v1606 = vpop.f32.mrf.mxu0
  %1607 = vdwg.mxu0
  %1608 = vmatprep.subr.bf16.mxu0 %v1203
  %1609 = vmatpush1.bf16.msra.mxu0 %v1202
  %1610 = vmatprep.subr.bf16.mxu0 %v1199
  %1611 = vmatpush1.bf16.msra.mxu0 %v1198
  %1612 = vmatprep.subr.bf16.mxu0 %v1195
  %1613 = vmatpush1.bf16.msra.mxu0 %v1194
  %1614 = vmatprep.subr.bf16.mxu0 %v1191
  %1615 = vmatpush1.bf16.msra.mxu0 %v1190
  %1616 = vmatprep.subr.bf16.mxu0 %v1187
  %1617 = vmatpush1.bf16.msra.mxu0 %v1186
  %1618 = vmatprep.subr.bf16.mxu0 %v1183
  %1619 = vmatpush1.bf16.msra.mxu0 %v1182
  %1620 = vmatprep.subr.bf16.mxu0 %v1179
  %1621 = vmatpush1.bf16.msra.mxu0 %v1178
  %1622 = vmatprep.subr.bf16.mxu0 %v1175
  %1623 = vmatpush1.bf16.msra.mxu0 %v1174
  %1624 = vmatprep.subr.bf16.mxu0 0
  %1625 = vmatpush2.bf16.msra.mxu0 0
  %1626 = vmatprep.subr.bf16.mxu0 0
  %1627 = vmatpush2.bf16.msra.mxu0 0
  %1628 = vmatprep.subr.bf16.mxu0 0
  %1629 = vmatpush2.bf16.msra.mxu0 0
  %1630 = vmatprep.subr.bf16.mxu0 0
  %1631 = vmatpush2.bf16.msra.mxu0 0
  %1632 = vmatprep.subr.bf16.mxu0 0
  %1633 = vmatpush2.bf16.msra.mxu0 0
  %1634 = vmatprep.subr.bf16.mxu0 0
  %1635 = vmatpush2.bf16.msra.mxu0 0
  %1636 = vmatprep.subr.bf16.mxu0 0
  %1637 = vmatpush2.bf16.msra.mxu0 0
  %1638 = vmatprep.subr.bf16.mxu0 0
  %1639 = vmatpush2.bf16.msra.mxu0 0
  %1640 = vmatprep.mubr.bf16.mxu0 0
  %1641 = vmatmul.mubr.bf16.gmra.mxu0 %v1484
  %v1642 = vpop.f32.mrf.mxu0
  %v1643 = vadd.f32 %v1561, %v1642
  %v1644 = vpop.f32.mrf.mxu0
  %v1645 = vadd.f32 %v1563, %v1644
  %v1646 = vpop.f32.mrf.mxu0
  %v1647 = vpop.f32.mrf.mxu0
  %1648 = vdwg.mxu0
  %v1649 = vadd.f32 %v1602, %v1323
  %v1650 = vadd.f32 %v1604, %v1327
  %v1651 = vadd.f32 %v1643, %v1331
  %v1652 = vadd.f32 %v1645, %v1335
  %v1653 = vxor.u32 %v1649, 2147483648
  %v1654 = vmul.f32 %v1653, 1.442695
  %v1655 = vpow.pop %v1654
  %v1656 = vadd.f32 %v1655, 1.0
  %v1657 = vrcp.pop %v1656
  %v1658 = vmul.f32 1.0, %v1657
  %v1659 = vxor.u32 %v1650, 2147483648
  %v1660 = vmul.f32 %v1659, 1.442695
  %v1661 = vpow.pop %v1660
  %v1662 = vadd.f32 %v1661, 1.0
  %v1663 = vrcp.pop %v1662
  %v1664 = vmul.f32 1.0, %v1663
  %v1665 = vtanh.pop %v1651
  %v1666 = vxor.u32 %v1652, 2147483648
  %v1667 = vmul.f32 %v1666, 1.442695
  %v1668 = vpow.pop %v1667
  %v1669 = vadd.f32 %v1668, 1.0
  %v1670 = vrcp.pop %v1669
  %v1671 = vmul.f32 1.0, %v1670
  %v1672 = vmul.f32 %v1664, %v1365
  %v1673 = vmul.f32 %v1658, %v1665
  %v1674 = vadd.f32 %v1672, %v1673
  %v1675 = vtanh.pop %v1674
  %v1676 = vmul.f32 %v1671, %v1675
  %v1677 = vpack.c.bf16 %v1676, %v1676
  %s1678 = scalar_lea.vmem [#allocation2], 64
  %v1679 = vld [vmem:[%s1678] sm:$0xff]
  %v1680 = vld [vmem:[%s1678 + $0x8] sm:$0xff]
  %v1681 = vld [vmem:[%s1678 + $0x10] sm:$0xff]
  %v1682 = vld [vmem:[%s1678 + $0x18] sm:$0xff]
  %1683 = vmatprep.subr.bf16.mxu0 %v624
  %1684 = vmatpush1.bf16.msra.mxu0 %v623
  %1685 = vmatprep.subr.bf16.mxu0 %v620
  %1686 = vmatpush1.bf16.msra.mxu0 %v619
  %1687 = vmatprep.subr.bf16.mxu0 %v616
  %1688 = vmatpush1.bf16.msra.mxu0 %v615
  %1689 = vmatprep.subr.bf16.mxu0 %v612
  %1690 = vmatpush1.bf16.msra.mxu0 %v611
  %1691 = vmatprep.subr.bf16.mxu0 %v608
  %1692 = vmatpush1.bf16.msra.mxu0 %v607
  %1693 = vmatprep.subr.bf16.mxu0 %v604
  %1694 = vmatpush1.bf16.msra.mxu0 %v603
  %1695 = vmatprep.subr.bf16.mxu0 %v600
  %1696 = vmatpush1.bf16.msra.mxu0 %v599
  %1697 = vmatprep.subr.bf16.mxu0 %v596
  %1698 = vmatpush1.bf16.msra.mxu0 %v595
  %1699 = vmatprep.subr.bf16.mxu0 0
  %1700 = vmatpush2.bf16.msra.mxu0 0
  %1701 = vmatprep.subr.bf16.mxu0 0
  %1702 = vmatpush2.bf16.msra.mxu0 0
  %1703 = vmatprep.subr.bf16.mxu0 0
  %1704 = vmatpush2.bf16.msra.mxu0 0
  %1705 = vmatprep.subr.bf16.mxu0 0
  %1706 = vmatpush2.bf16.msra.mxu0 0
  %1707 = vmatprep.subr.bf16.mxu0 0
  %1708 = vmatpush2.bf16.msra.mxu0 0
  %1709 = vmatprep.subr.bf16.mxu0 0
  %1710 = vmatpush2.bf16.msra.mxu0 0
  %1711 = vmatprep.subr.bf16.mxu0 0
  %1712 = vmatpush2.bf16.msra.mxu0 0
  %1713 = vmatprep.subr.bf16.mxu0 0
  %1714 = vmatpush2.bf16.msra.mxu0 0
  %1715 = vmatprep.mubr.bf16.mxu0 0
  %1716 = vmatmul.mubr.bf16.gmra.mxu0 %v1484
  %v1717 = vpop.f32.mrf.mxu0
  %v1718 = vadd.f32 0.0, %v1717
  %v1719 = vpop.f32.mrf.mxu0
  %v1720 = vadd.f32 0.0, %v1719
  %v1721 = vpop.f32.mrf.mxu0
  %v1722 = vpop.f32.mrf.mxu0
  %1723 = vdwg.mxu0
  %1724 = vmatprep.subr.bf16.mxu0 %v626
  %1725 = vmatpush1.bf16.msra.mxu0 %v625
  %1726 = vmatprep.subr.bf16.mxu0 %v622
  %1727 = vmatpush1.bf16.msra.mxu0 %v621
  %1728 = vmatprep.subr.bf16.mxu0 %v618
  %1729 = vmatpush1.bf16.msra.mxu0 %v617
  %1730 = vmatprep.subr.bf16.mxu0 %v614
  %1731 = vmatpush1.bf16.msra.mxu0 %v613
  %1732 = vmatprep.subr.bf16.mxu0 %v610
  %1733 = vmatpush1.bf16.msra.mxu0 %v609
  %1734 = vmatprep.subr.bf16.mxu0 %v606
  %1735 = vmatpush1.bf16.msra.mxu0 %v605
  %1736 = vmatprep.subr.bf16.mxu0 %v602
  %1737 = vmatpush1.bf16.msra.mxu0 %v601
  %1738 = vmatprep.subr.bf16.mxu0 %v598
  %1739 = vmatpush1.bf16.msra.mxu0 %v597
  %1740 = vmatprep.subr.bf16.mxu0 0
  %1741 = vmatpush2.bf16.msra.mxu0 0
  %1742 = vmatprep.subr.bf16.mxu0 0
  %1743 = vmatpush2.bf16.msra.mxu0 0
  %1744 = vmatprep.subr.bf16.mxu0 0
  %1745 = vmatpush2.bf16.msra.mxu0 0
  %1746 = vmatprep.subr.bf16.mxu0 0
  %1747 = vmatpush2.bf16.msra.mxu0 0
  %1748 = vmatprep.subr.bf16.mxu0 0
  %1749 = vmatpush2.bf16.msra.mxu0 0
  %1750 = vmatprep.subr.bf16.mxu0 0
  %1751 = vmatpush2.bf16.msra.mxu0 0
  %1752 = vmatprep.subr.bf16.mxu0 0
  %1753 = vmatpush2.bf16.msra.mxu0 0
  %1754 = vmatprep.subr.bf16.mxu0 0
  %1755 = vmatpush2.bf16.msra.mxu0 0
  %1756 = vmatprep.mubr.bf16.mxu0 0
  %1757 = vmatmul.mubr.bf16.gmra.mxu0 %v1484
  %v1758 = vpop.f32.mrf.mxu0
  %v1759 = vadd.f32 0.0, %v1758
  %v1760 = vpop.f32.mrf.mxu0
  %v1761 = vadd.f32 0.0, %v1760
  %v1762 = vpop.f32.mrf.mxu0
  %v1763 = vpop.f32.mrf.mxu0
  %1764 = vdwg.mxu0
  %v1765 = vadd.f32 %v1679, %v1718
  %v1766 = vadd.f32 %v1680, %v1720
  %v1767 = vadd.f32 %v1681, %v1759
  %v1768 = vadd.f32 %v1682, %v1761
  %v1769 = vxor.u32 %v1765, 2147483648
  %v1770 = vmul.f32 %v1769, 1.442695
  %v1771 = vpow.pop %v1770
  %v1772 = vadd.f32 %v1771, 1.0
  %v1773 = vrcp.pop %v1772
  %v1774 = vmul.f32 1.0, %v1773
  %v1775 = vxor.u32 %v1766, 2147483648
  %v1776 = vmul.f32 %v1775, 1.442695
  %v1777 = vpow.pop %v1776
  %v1778 = vadd.f32 %v1777, 1.0
  %v1779 = vrcp.pop %v1778
  %v1780 = vmul.f32 1.0, %v1779
  %v1781 = vtanh.pop %v1767
  %v1782 = vxor.u32 %v1768, 2147483648
  %v1783 = vmul.f32 %v1782, 1.442695
  %v1784 = vpow.pop %v1783
  %v1785 = vadd.f32 %v1784, 1.0
  %v1786 = vrcp.pop %v1785
  %v1787 = vmul.f32 1.0, %v1786
  %v1788 = vmul.f32 %v1780, %v1481
  %v1789 = vmul.f32 %v1774, %v1781
  %v1790 = vadd.f32 %v1788, %v1789
  %v1791 = vtanh.pop %v1790
  %v1792 = vmul.f32 %v1787, %v1791
  %v1793 = vpack.c.bf16 %v1792, %v1792
  %1794 = vmatprep.subr.bf16.mxu0 %v959
  %1795 = vmatpush1.bf16.msra.mxu0 %v958
  %1796 = vmatprep.subr.bf16.mxu0 %v955
  %1797 = vmatpush1.bf16.msra.mxu0 %v954
  %1798 = vmatprep.subr.bf16.mxu0 %v951
  %1799 = vmatpush1.bf16.msra.mxu0 %v950
  %1800 = vmatprep.subr.bf16.mxu0 %v947
  %1801 = vmatpush1.bf16.msra.mxu0 %v946
  %1802 = vmatprep.subr.bf16.mxu0 %v943
  %1803 = vmatpush1.bf16.msra.mxu0 %v942
  %1804 = vmatprep.subr.bf16.mxu0 %v939
  %1805 = vmatpush1.bf16.msra.mxu0 %v938
  %1806 = vmatprep.subr.bf16.mxu0 %v935
  %1807 = vmatpush1.bf16.msra.mxu0 %v934
  %1808 = vmatprep.subr.bf16.mxu0 %v931
  %1809 = vmatpush1.bf16.msra.mxu0 %v930
  %1810 = vmatprep.subr.bf16.mxu0 0
  %1811 = vmatpush2.bf16.msra.mxu0 0
  %1812 = vmatprep.subr.bf16.mxu0 0
  %1813 = vmatpush2.bf16.msra.mxu0 0
  %1814 = vmatprep.subr.bf16.mxu0 0
  %1815 = vmatpush2.bf16.msra.mxu0 0
  %1816 = vmatprep.subr.bf16.mxu0 0
  %1817 = vmatpush2.bf16.msra.mxu0 0
  %1818 = vmatprep.subr.bf16.mxu0 0
  %1819 = vmatpush2.bf16.msra.mxu0 0
  %1820 = vmatprep.subr.bf16.mxu0 0
  %1821 = vmatpush2.bf16.msra.mxu0 0
  %1822 = vmatprep.subr.bf16.mxu0 0
  %1823 = vmatpush2.bf16.msra.mxu0 0
  %1824 = vmatprep.subr.bf16.mxu0 0
  %1825 = vmatpush2.bf16.msra.mxu0 0
  %1826 = vmatprep.mubr.bf16.mxu0 0
  %1827 = vmatmul.mubr.bf16.gmra.mxu0 %v1677
  %v1828 = vpop.f32.mrf.mxu0
  %v1829 = vadd.f32 0.0, %v1828
  %v1830 = vpop.f32.mrf.mxu0
  %v1831 = vadd.f32 0.0, %v1830
  %v1832 = vpop.f32.mrf.mxu0
  %v1833 = vpop.f32.mrf.mxu0
  %1834 = vdwg.mxu0
  %1835 = vmatprep.subr.bf16.mxu0 %v961
  %1836 = vmatpush1.bf16.msra.mxu0 %v960
  %1837 = vmatprep.subr.bf16.mxu0 %v957
  %1838 = vmatpush1.bf16.msra.mxu0 %v956
  %1839 = vmatprep.subr.bf16.mxu0 %v953
  %1840 = vmatpush1.bf16.msra.mxu0 %v952
  %1841 = vmatprep.subr.bf16.mxu0 %v949
  %1842 = vmatpush1.bf16.msra.mxu0 %v948
  %1843 = vmatprep.subr.bf16.mxu0 %v945
  %1844 = vmatpush1.bf16.msra.mxu0 %v944
  %1845 = vmatprep.subr.bf16.mxu0 %v941
  %1846 = vmatpush1.bf16.msra.mxu0 %v940
  %1847 = vmatprep.subr.bf16.mxu0 %v937
  %1848 = vmatpush1.bf16.msra.mxu0 %v936
  %1849 = vmatprep.subr.bf16.mxu0 %v933
  %1850 = vmatpush1.bf16.msra.mxu0 %v932
  %1851 = vmatprep.subr.bf16.mxu0 0
  %1852 = vmatpush2.bf16.msra.mxu0 0
  %1853 = vmatprep.subr.bf16.mxu0 0
  %1854 = vmatpush2.bf16.msra.mxu0 0
  %1855 = vmatprep.subr.bf16.mxu0 0
  %1856 = vmatpush2.bf16.msra.mxu0 0
  %1857 = vmatprep.subr.bf16.mxu0 0
  %1858 = vmatpush2.bf16.msra.mxu0 0
  %1859 = vmatprep.subr.bf16.mxu0 0
  %1860 = vmatpush2.bf16.msra.mxu0 0
  %1861 = vmatprep.subr.bf16.mxu0 0
  %1862 = vmatpush2.bf16.msra.mxu0 0
  %1863 = vmatprep.subr.bf16.mxu0 0
  %1864 = vmatpush2.bf16.msra.mxu0 0
  %1865 = vmatprep.subr.bf16.mxu0 0
  %1866 = vmatpush2.bf16.msra.mxu0 0
  %1867 = vmatprep.mubr.bf16.mxu0 0
  %1868 = vmatmul.mubr.bf16.gmra.mxu0 %v1677
  %v1869 = vpop.f32.mrf.mxu0
  %v1870 = vadd.f32 0.0, %v1869
  %v1871 = vpop.f32.mrf.mxu0
  %v1872 = vadd.f32 0.0, %v1871
  %v1873 = vpop.f32.mrf.mxu0
  %v1874 = vpop.f32.mrf.mxu0
  %1875 = vdwg.mxu0
  %1876 = vmatprep.subr.bf16.mxu0 %v1201
  %1877 = vmatpush1.bf16.msra.mxu0 %v1200
  %1878 = vmatprep.subr.bf16.mxu0 %v1197
  %1879 = vmatpush1.bf16.msra.mxu0 %v1196
  %1880 = vmatprep.subr.bf16.mxu0 %v1193
  %1881 = vmatpush1.bf16.msra.mxu0 %v1192
  %1882 = vmatprep.subr.bf16.mxu0 %v1189
  %1883 = vmatpush1.bf16.msra.mxu0 %v1188
  %1884 = vmatprep.subr.bf16.mxu0 %v1185
  %1885 = vmatpush1.bf16.msra.mxu0 %v1184
  %1886 = vmatprep.subr.bf16.mxu0 %v1181
  %1887 = vmatpush1.bf16.msra.mxu0 %v1180
  %1888 = vmatprep.subr.bf16.mxu0 %v1177
  %1889 = vmatpush1.bf16.msra.mxu0 %v1176
  %1890 = vmatprep.subr.bf16.mxu0 %v1173
  %1891 = vmatpush1.bf16.msra.mxu0 %v1172
  %1892 = vmatprep.subr.bf16.mxu0 0
  %1893 = vmatpush2.bf16.msra.mxu0 0
  %1894 = vmatprep.subr.bf16.mxu0 0
  %1895 = vmatpush2.bf16.msra.mxu0 0
  %1896 = vmatprep.subr.bf16.mxu0 0
  %1897 = vmatpush2.bf16.msra.mxu0 0
  %1898 = vmatprep.subr.bf16.mxu0 0
  %1899 = vmatpush2.bf16.msra.mxu0 0
  %1900 = vmatprep.subr.bf16.mxu0 0
  %1901 = vmatpush2.bf16.msra.mxu0 0
  %1902 = vmatprep.subr.bf16.mxu0 0
  %1903 = vmatpush2.bf16.msra.mxu0 0
  %1904 = vmatprep.subr.bf16.mxu0 0
  %1905 = vmatpush2.bf16.msra.mxu0 0
  %1906 = vmatprep.subr.bf16.mxu0 0
  %1907 = vmatpush2.bf16.msra.mxu0 0
  %1908 = vmatprep.mubr.bf16.mxu0 0
  %1909 = vmatmul.mubr.bf16.gmra.mxu0 %v1793
  %v1910 = vpop.f32.mrf.mxu0
  %v1911 = vadd.f32 %v1829, %v1910
  %v1912 = vpop.f32.mrf.mxu0
  %v1913 = vadd.f32 %v1831, %v1912
  %v1914 = vpop.f32.mrf.mxu0
  %v1915 = vpop.f32.mrf.mxu0
  %1916 = vdwg.mxu0
  %1917 = vmatprep.subr.bf16.mxu0 %v1203
  %1918 = vmatpush1.bf16.msra.mxu0 %v1202
  %1919 = vmatprep.subr.bf16.mxu0 %v1199
  %1920 = vmatpush1.bf16.msra.mxu0 %v1198
  %1921 = vmatprep.subr.bf16.mxu0 %v1195
  %1922 = vmatpush1.bf16.msra.mxu0 %v1194
  %1923 = vmatprep.subr.bf16.mxu0 %v1191
  %1924 = vmatpush1.bf16.msra.mxu0 %v1190
  %1925 = vmatprep.subr.bf16.mxu0 %v1187
  %1926 = vmatpush1.bf16.msra.mxu0 %v1186
  %1927 = vmatprep.subr.bf16.mxu0 %v1183
  %1928 = vmatpush1.bf16.msra.mxu0 %v1182
  %1929 = vmatprep.subr.bf16.mxu0 %v1179
  %1930 = vmatpush1.bf16.msra.mxu0 %v1178
  %1931 = vmatprep.subr.bf16.mxu0 %v1175
  %1932 = vmatpush1.bf16.msra.mxu0 %v1174
  %1933 = vmatprep.subr.bf16.mxu0 0
  %1934 = vmatpush2.bf16.msra.mxu0 0
  %1935 = vmatprep.subr.bf16.mxu0 0
  %1936 = vmatpush2.bf16.msra.mxu0 0
  %1937 = vmatprep.subr.bf16.mxu0 0
  %1938 = vmatpush2.bf16.msra.mxu0 0
  %1939 = vmatprep.subr.bf16.mxu0 0
  %1940 = vmatpush2.bf16.msra.mxu0 0
  %1941 = vmatprep.subr.bf16.mxu0 0
  %1942 = vmatpush2.bf16.msra.mxu0 0
  %1943 = vmatprep.subr.bf16.mxu0 0
  %1944 = vmatpush2.bf16.msra.mxu0 0
  %1945 = vmatprep.subr.bf16.mxu0 0
  %1946 = vmatpush2.bf16.msra.mxu0 0
  %1947 = vmatprep.subr.bf16.mxu0 0
  %1948 = vmatpush2.bf16.msra.mxu0 0
  %1949 = vmatprep.mubr.bf16.mxu0 0
  %1950 = vmatmul.mubr.bf16.gmra.mxu0 %v1793
  %v1951 = vpop.f32.mrf.mxu0
  %v1952 = vadd.f32 %v1870, %v1951
  %v1953 = vpop.f32.mrf.mxu0
  %v1954 = vadd.f32 %v1872, %v1953
  %v1955 = vpop.f32.mrf.mxu0
  %v1956 = vpop.f32.mrf.mxu0
  %1957 = vdwg.mxu0
  %v1958 = vadd.f32 %v1911, %v1323
  %v1959 = vadd.f32 %v1913, %v1327
  %v1960 = vadd.f32 %v1952, %v1331
  %v1961 = vadd.f32 %v1954, %v1335
  %v1962 = vxor.u32 %v1958, 2147483648
  %v1963 = vmul.f32 %v1962, 1.442695
  %v1964 = vpow.pop %v1963
  %v1965 = vadd.f32 %v1964, 1.0
  %v1966 = vrcp.pop %v1965
  %v1967 = vmul.f32 1.0, %v1966
  %v1968 = vxor.u32 %v1959, 2147483648
  %v1969 = vmul.f32 %v1968, 1.442695
  %v1970 = vpow.pop %v1969
  %v1971 = vadd.f32 %v1970, 1.0
  %v1972 = vrcp.pop %v1971
  %v1973 = vmul.f32 1.0, %v1972
  %v1974 = vtanh.pop %v1960
  %v1975 = vxor.u32 %v1961, 2147483648
  %v1976 = vmul.f32 %v1975, 1.442695
  %v1977 = vpow.pop %v1976
  %v1978 = vadd.f32 %v1977, 1.0
  %v1979 = vrcp.pop %v1978
  %v1980 = vmul.f32 1.0, %v1979
  %v1981 = vmul.f32 %v1973, %v1674
  %v1982 = vmul.f32 %v1967, %v1974
  %v1983 = vadd.f32 %v1981, %v1982
  %v1984 = vtanh.pop %v1983
  %v1985 = vmul.f32 %v1980, %v1984
  %v1986 = vpack.c.bf16 %v1985, %v1985
  %s1987 = scalar_lea.vmem [#allocation2], 96
  %v1988 = vld [vmem:[%s1987] sm:$0xff]
  %v1989 = vld [vmem:[%s1987 + $0x8] sm:$0xff]
  %v1990 = vld [vmem:[%s1987 + $0x10] sm:$0xff]
  %v1991 = vld [vmem:[%s1987 + $0x18] sm:$0xff]
  %1992 = vmatprep.subr.bf16.mxu0 %v624
  %1993 = vmatpush1.bf16.msra.mxu0 %v623
  %1994 = vmatprep.subr.bf16.mxu0 %v620
  %1995 = vmatpush1.bf16.msra.mxu0 %v619
  %1996 = vmatprep.subr.bf16.mxu0 %v616
  %1997 = vmatpush1.bf16.msra.mxu0 %v615
  %1998 = vmatprep.subr.bf16.mxu0 %v612
  %1999 = vmatpush1.bf16.msra.mxu0 %v611
  %2000 = vmatprep.subr.bf16.mxu0 %v608
  %2001 = vmatpush1.bf16.msra.mxu0 %v607
  %2002 = vmatprep.subr.bf16.mxu0 %v604
  %2003 = vmatpush1.bf16.msra.mxu0 %v603
  %2004 = vmatprep.subr.bf16.mxu0 %v600
  %2005 = vmatpush1.bf16.msra.mxu0 %v599
  %2006 = vmatprep.subr.bf16.mxu0 %v596
  %2007 = vmatpush1.bf16.msra.mxu0 %v595
  %2008 = vmatprep.subr.bf16.mxu0 0
  %2009 = vmatpush2.bf16.msra.mxu0 0
  %2010 = vmatprep.subr.bf16.mxu0 0
  %2011 = vmatpush2.bf16.msra.mxu0 0
  %2012 = vmatprep.subr.bf16.mxu0 0
  %2013 = vmatpush2.bf16.msra.mxu0 0
  %2014 = vmatprep.subr.bf16.mxu0 0
  %2015 = vmatpush2.bf16.msra.mxu0 0
  %2016 = vmatprep.subr.bf16.mxu0 0
  %2017 = vmatpush2.bf16.msra.mxu0 0
  %2018 = vmatprep.subr.bf16.mxu0 0
  %2019 = vmatpush2.bf16.msra.mxu0 0
  %2020 = vmatprep.subr.bf16.mxu0 0
  %2021 = vmatpush2.bf16.msra.mxu0 0
  %2022 = vmatprep.subr.bf16.mxu0 0
  %2023 = vmatpush2.bf16.msra.mxu0 0
  %2024 = vmatprep.mubr.bf16.mxu0 0
  %2025 = vmatmul.mubr.bf16.gmra.mxu0 %v1793
  %v2026 = vpop.f32.mrf.mxu0
  %v2027 = vadd.f32 0.0, %v2026
  %v2028 = vpop.f32.mrf.mxu0
  %v2029 = vadd.f32 0.0, %v2028
  %v2030 = vpop.f32.mrf.mxu0
  %v2031 = vpop.f32.mrf.mxu0
  %2032 = vdwg.mxu0
  %2033 = vmatprep.subr.bf16.mxu0 %v626
  %2034 = vmatpush1.bf16.msra.mxu0 %v625
  %2035 = vmatprep.subr.bf16.mxu0 %v622
  %2036 = vmatpush1.bf16.msra.mxu0 %v621
  %2037 = vmatprep.subr.bf16.mxu0 %v618
  %2038 = vmatpush1.bf16.msra.mxu0 %v617
  %2039 = vmatprep.subr.bf16.mxu0 %v614
  %2040 = vmatpush1.bf16.msra.mxu0 %v613
  %2041 = vmatprep.subr.bf16.mxu0 %v610
  %2042 = vmatpush1.bf16.msra.mxu0 %v609
  %2043 = vmatprep.subr.bf16.mxu0 %v606
  %2044 = vmatpush1.bf16.msra.mxu0 %v605
  %2045 = vmatprep.subr.bf16.mxu0 %v602
  %2046 = vmatpush1.bf16.msra.mxu0 %v601
  %2047 = vmatprep.subr.bf16.mxu0 %v598
  %2048 = vmatpush1.bf16.msra.mxu0 %v597
  %2049 = vmatprep.subr.bf16.mxu0 0
  %2050 = vmatpush2.bf16.msra.mxu0 0
  %2051 = vmatprep.subr.bf16.mxu0 0
  %2052 = vmatpush2.bf16.msra.mxu0 0
  %2053 = vmatprep.subr.bf16.mxu0 0
  %2054 = vmatpush2.bf16.msra.mxu0 0
  %2055 = vmatprep.subr.bf16.mxu0 0
  %2056 = vmatpush2.bf16.msra.mxu0 0
  %2057 = vmatprep.subr.bf16.mxu0 0
  %2058 = vmatpush2.bf16.msra.mxu0 0
  %2059 = vmatprep.subr.bf16.mxu0 0
  %2060 = vmatpush2.bf16.msra.mxu0 0
  %2061 = vmatprep.subr.bf16.mxu0 0
  %2062 = vmatpush2.bf16.msra.mxu0 0
  %2063 = vmatprep.subr.bf16.mxu0 0
  %2064 = vmatpush2.bf16.msra.mxu0 0
  %2065 = vmatprep.mubr.bf16.mxu0 0
  %2066 = vmatmul.mubr.bf16.gmra.mxu0 %v1793
  %v2067 = vpop.f32.mrf.mxu0
  %v2068 = vadd.f32 0.0, %v2067
  %v2069 = vpop.f32.mrf.mxu0
  %v2070 = vadd.f32 0.0, %v2069
  %v2071 = vpop.f32.mrf.mxu0
  %v2072 = vpop.f32.mrf.mxu0
  %2073 = vdwg.mxu0
  %v2074 = vadd.f32 %v1988, %v2027
  %v2075 = vadd.f32 %v1989, %v2029
  %v2076 = vadd.f32 %v1990, %v2068
  %v2077 = vadd.f32 %v1991, %v2070
  %v2078 = vxor.u32 %v2074, 2147483648
  %v2079 = vmul.f32 %v2078, 1.442695
  %v2080 = vpow.pop %v2079
  %v2081 = vadd.f32 %v2080, 1.0
  %v2082 = vrcp.pop %v2081
  %v2083 = vmul.f32 1.0, %v2082
  %v2084 = vxor.u32 %v2075, 2147483648
  %v2085 = vmul.f32 %v2084, 1.442695
  %v2086 = vpow.pop %v2085
  %v2087 = vadd.f32 %v2086, 1.0
  %v2088 = vrcp.pop %v2087
  %v2089 = vmul.f32 1.0, %v2088
  %v2090 = vtanh.pop %v2076
  %v2091 = vxor.u32 %v2077, 2147483648
  %v2092 = vmul.f32 %v2091, 1.442695
  %v2093 = vpow.pop %v2092
  %v2094 = vadd.f32 %v2093, 1.0
  %v2095 = vrcp.pop %v2094
  %v2096 = vmul.f32 1.0, %v2095
  %v2097 = vmul.f32 %v2089, %v1790
  %v2098 = vmul.f32 %v2083, %v2090
  %v2099 = vadd.f32 %v2097, %v2098
  %v2100 = vtanh.pop %v2099
  %v2101 = vmul.f32 %v2096, %v2100
  %v2102 = vpack.c.bf16 %v2101, %v2101
  %2103 = vmatprep.subr.bf16.mxu0 %v959
  %2104 = vmatpush1.bf16.msra.mxu0 %v958
  %2105 = vmatprep.subr.bf16.mxu0 %v955
  %2106 = vmatpush1.bf16.msra.mxu0 %v954
  %2107 = vmatprep.subr.bf16.mxu0 %v951
  %2108 = vmatpush1.bf16.msra.mxu0 %v950
  %2109 = vmatprep.subr.bf16.mxu0 %v947
  %2110 = vmatpush1.bf16.msra.mxu0 %v946
  %2111 = vmatprep.subr.bf16.mxu0 %v943
  %2112 = vmatpush1.bf16.msra.mxu0 %v942
  %2113 = vmatprep.subr.bf16.mxu0 %v939
  %2114 = vmatpush1.bf16.msra.mxu0 %v938
  %2115 = vmatprep.subr.bf16.mxu0 %v935
  %2116 = vmatpush1.bf16.msra.mxu0 %v934
  %2117 = vmatprep.subr.bf16.mxu0 %v931
  %2118 = vmatpush1.bf16.msra.mxu0 %v930
  %2119 = vmatprep.subr.bf16.mxu0 0
  %2120 = vmatpush2.bf16.msra.mxu0 0
  %2121 = vmatprep.subr.bf16.mxu0 0
  %2122 = vmatpush2.bf16.msra.mxu0 0
  %2123 = vmatprep.subr.bf16.mxu0 0
  %2124 = vmatpush2.bf16.msra.mxu0 0
  %2125 = vmatprep.subr.bf16.mxu0 0
  %2126 = vmatpush2.bf16.msra.mxu0 0
  %2127 = vmatprep.subr.bf16.mxu0 0
  %2128 = vmatpush2.bf16.msra.mxu0 0
  %2129 = vmatprep.subr.bf16.mxu0 0
  %2130 = vmatpush2.bf16.msra.mxu0 0
  %2131 = vmatprep.subr.bf16.mxu0 0
  %2132 = vmatpush2.bf16.msra.mxu0 0
  %2133 = vmatprep.subr.bf16.mxu0 0
  %2134 = vmatpush2.bf16.msra.mxu0 0
  %2135 = vmatprep.mubr.bf16.mxu0 0
  %2136 = vmatmul.mubr.bf16.gmra.mxu0 %v1986
  %v2137 = vpop.f32.mrf.mxu0
  %v2138 = vadd.f32 0.0, %v2137
  %v2139 = vpop.f32.mrf.mxu0
  %v2140 = vadd.f32 0.0, %v2139
  %v2141 = vpop.f32.mrf.mxu0
  %v2142 = vpop.f32.mrf.mxu0
  %2143 = vdwg.mxu0
  %2144 = vmatprep.subr.bf16.mxu0 %v961
  %2145 = vmatpush1.bf16.msra.mxu0 %v960
  %2146 = vmatprep.subr.bf16.mxu0 %v957
  %2147 = vmatpush1.bf16.msra.mxu0 %v956
  %2148 = vmatprep.subr.bf16.mxu0 %v953
  %2149 = vmatpush1.bf16.msra.mxu0 %v952
  %2150 = vmatprep.subr.bf16.mxu0 %v949
  %2151 = vmatpush1.bf16.msra.mxu0 %v948
  %2152 = vmatprep.subr.bf16.mxu0 %v945
  %2153 = vmatpush1.bf16.msra.mxu0 %v944
  %2154 = vmatprep.subr.bf16.mxu0 %v941
  %2155 = vmatpush1.bf16.msra.mxu0 %v940
  %2156 = vmatprep.subr.bf16.mxu0 %v937
  %2157 = vmatpush1.bf16.msra.mxu0 %v936
  %2158 = vmatprep.subr.bf16.mxu0 %v933
  %2159 = vmatpush1.bf16.msra.mxu0 %v932
  %2160 = vmatprep.subr.bf16.mxu0 0
  %2161 = vmatpush2.bf16.msra.mxu0 0
  %2162 = vmatprep.subr.bf16.mxu0 0
  %2163 = vmatpush2.bf16.msra.mxu0 0
  %2164 = vmatprep.subr.bf16.mxu0 0
  %2165 = vmatpush2.bf16.msra.mxu0 0
  %2166 = vmatprep.subr.bf16.mxu0 0
  %2167 = vmatpush2.bf16.msra.mxu0 0
  %2168 = vmatprep.subr.bf16.mxu0 0
  %2169 = vmatpush2.bf16.msra.mxu0 0
  %2170 = vmatprep.subr.bf16.mxu0 0
  %2171 = vmatpush2.bf16.msra.mxu0 0
  %2172 = vmatprep.subr.bf16.mxu0 0
  %2173 = vmatpush2.bf16.msra.mxu0 0
  %2174 = vmatprep.subr.bf16.mxu0 0
  %2175 = vmatpush2.bf16.msra.mxu0 0
  %2176 = vmatprep.mubr.bf16.mxu0 0
  %2177 = vmatmul.mubr.bf16.gmra.mxu0 %v1986
  %v2178 = vpop.f32.mrf.mxu0
  %v2179 = vadd.f32 0.0, %v2178
  %v2180 = vpop.f32.mrf.mxu0
  %v2181 = vadd.f32 0.0, %v2180
  %v2182 = vpop.f32.mrf.mxu0
  %v2183 = vpop.f32.mrf.mxu0
  %2184 = vdwg.mxu0
  %2185 = vmatprep.subr.bf16.mxu0 %v1201
  %2186 = vmatpush1.bf16.msra.mxu0 %v1200
  %2187 = vmatprep.subr.bf16.mxu0 %v1197
  %2188 = vmatpush1.bf16.msra.mxu0 %v1196
  %2189 = vmatprep.subr.bf16.mxu0 %v1193
  %2190 = vmatpush1.bf16.msra.mxu0 %v1192
  %2191 = vmatprep.subr.bf16.mxu0 %v1189
  %2192 = vmatpush1.bf16.msra.mxu0 %v1188
  %2193 = vmatprep.subr.bf16.mxu0 %v1185
  %2194 = vmatpush1.bf16.msra.mxu0 %v1184
  %2195 = vmatprep.subr.bf16.mxu0 %v1181
  %2196 = vmatpush1.bf16.msra.mxu0 %v1180
  %2197 = vmatprep.subr.bf16.mxu0 %v1177
  %2198 = vmatpush1.bf16.msra.mxu0 %v1176
  %2199 = vmatprep.subr.bf16.mxu0 %v1173
  %2200 = vmatpush1.bf16.msra.mxu0 %v1172
  %2201 = vmatprep.subr.bf16.mxu0 0
  %2202 = vmatpush2.bf16.msra.mxu0 0
  %2203 = vmatprep.subr.bf16.mxu0 0
  %2204 = vmatpush2.bf16.msra.mxu0 0
  %2205 = vmatprep.subr.bf16.mxu0 0
  %2206 = vmatpush2.bf16.msra.mxu0 0
  %2207 = vmatprep.subr.bf16.mxu0 0
  %2208 = vmatpush2.bf16.msra.mxu0 0
  %2209 = vmatprep.subr.bf16.mxu0 0
  %2210 = vmatpush2.bf16.msra.mxu0 0
  %2211 = vmatprep.subr.bf16.mxu0 0
  %2212 = vmatpush2.bf16.msra.mxu0 0
  %2213 = vmatprep.subr.bf16.mxu0 0
  %2214 = vmatpush2.bf16.msra.mxu0 0
  %2215 = vmatprep.subr.bf16.mxu0 0
  %2216 = vmatpush2.bf16.msra.mxu0 0
  %2217 = vmatprep.mubr.bf16.mxu0 0
  %2218 = vmatmul.mubr.bf16.gmra.mxu0 %v2102
  %v2219 = vpop.f32.mrf.mxu0
  %v2220 = vadd.f32 %v2138, %v2219
  %v2221 = vpop.f32.mrf.mxu0
  %v2222 = vadd.f32 %v2140, %v2221
  %v2223 = vpop.f32.mrf.mxu0
  %v2224 = vpop.f32.mrf.mxu0
  %2225 = vdwg.mxu0
  %2226 = vmatprep.subr.bf16.mxu0 %v1203
  %2227 = vmatpush1.bf16.msra.mxu0 %v1202
  %2228 = vmatprep.subr.bf16.mxu0 %v1199
  %2229 = vmatpush1.bf16.msra.mxu0 %v1198
  %2230 = vmatprep.subr.bf16.mxu0 %v1195
  %2231 = vmatpush1.bf16.msra.mxu0 %v1194
  %2232 = vmatprep.subr.bf16.mxu0 %v1191
  %2233 = vmatpush1.bf16.msra.mxu0 %v1190
  %2234 = vmatprep.subr.bf16.mxu0 %v1187
  %2235 = vmatpush1.bf16.msra.mxu0 %v1186
  %2236 = vmatprep.subr.bf16.mxu0 %v1183
  %2237 = vmatpush1.bf16.msra.mxu0 %v1182
  %2238 = vmatprep.subr.bf16.mxu0 %v1179
  %2239 = vmatpush1.bf16.msra.mxu0 %v1178
  %2240 = vmatprep.subr.bf16.mxu0 %v1175
  %2241 = vmatpush1.bf16.msra.mxu0 %v1174
  %2242 = vmatprep.subr.bf16.mxu0 0
  %2243 = vmatpush2.bf16.msra.mxu0 0
  %2244 = vmatprep.subr.bf16.mxu0 0
  %2245 = vmatpush2.bf16.msra.mxu0 0
  %2246 = vmatprep.subr.bf16.mxu0 0
  %2247 = vmatpush2.bf16.msra.mxu0 0
  %2248 = vmatprep.subr.bf16.mxu0 0
  %2249 = vmatpush2.bf16.msra.mxu0 0
  %2250 = vmatprep.subr.bf16.mxu0 0
  %2251 = vmatpush2.bf16.msra.mxu0 0
  %2252 = vmatprep.subr.bf16.mxu0 0
  %2253 = vmatpush2.bf16.msra.mxu0 0
  %2254 = vmatprep.subr.bf16.mxu0 0
  %2255 = vmatpush2.bf16.msra.mxu0 0
  %2256 = vmatprep.subr.bf16.mxu0 0
  %2257 = vmatpush2.bf16.msra.mxu0 0
  %2258 = vmatprep.mubr.bf16.mxu0 0
  %2259 = vmatmul.mubr.bf16.gmra.mxu0 %v2102
  %v2260 = vpop.f32.mrf.mxu0
  %v2261 = vadd.f32 %v2179, %v2260
  %v2262 = vpop.f32.mrf.mxu0
  %v2263 = vadd.f32 %v2181, %v2262
  %v2264 = vpop.f32.mrf.mxu0
  %v2265 = vpop.f32.mrf.mxu0
  %2266 = vdwg.mxu0
  %v2267 = vadd.f32 %v2220, %v1323
  %v2268 = vadd.f32 %v2222, %v1327
  %v2269 = vadd.f32 %v2261, %v1331
  %v2270 = vadd.f32 %v2263, %v1335
  %v2271 = vxor.u32 %v2267, 2147483648
  %v2272 = vmul.f32 %v2271, 1.442695
  %v2273 = vpow.pop %v2272
  %v2274 = vadd.f32 %v2273, 1.0
  %v2275 = vrcp.pop %v2274
  %v2276 = vmul.f32 1.0, %v2275
  %v2277 = vxor.u32 %v2268, 2147483648
  %v2278 = vmul.f32 %v2277, 1.442695
  %v2279 = vpow.pop %v2278
  %v2280 = vadd.f32 %v2279, 1.0
  %v2281 = vrcp.pop %v2280
  %v2282 = vmul.f32 1.0, %v2281
  %v2283 = vtanh.pop %v2269
  %v2284 = vxor.u32 %v2270, 2147483648
  %v2285 = vmul.f32 %v2284, 1.442695
  %v2286 = vpow.pop %v2285
  %v2287 = vadd.f32 %v2286, 1.0
  %v2288 = vrcp.pop %v2287
  %v2289 = vmul.f32 1.0, %v2288
  %v2290 = vmul.f32 %v2282, %v1983
  %v2291 = vmul.f32 %v2276, %v2283
  %v2292 = vadd.f32 %v2290, %v2291
  %v2293 = vtanh.pop %v2292
  %v2294 = vmul.f32 %v2289, %v2293
  %v2295 = vpack.c.bf16 %v2294, %v2294
  %s2296 = scalar_lea.vmem [#allocation2], 128
  %v2297 = vld [vmem:[%s2296] sm:$0xff]
  %v2298 = vld [vmem:[%s2296 + $0x8] sm:$0xff]
  %v2299 = vld [vmem:[%s2296 + $0x10] sm:$0xff]
  %v2300 = vld [vmem:[%s2296 + $0x18] sm:$0xff]
  %2301 = vmatprep.subr.bf16.mxu0 %v624
  %2302 = vmatpush1.bf16.msra.mxu0 %v623
  %2303 = vmatprep.subr.bf16.mxu0 %v620
  %2304 = vmatpush1.bf16.msra.mxu0 %v619
  %2305 = vmatprep.subr.bf16.mxu0 %v616
  %2306 = vmatpush1.bf16.msra.mxu0 %v615
  %2307 = vmatprep.subr.bf16.mxu0 %v612
  %2308 = vmatpush1.bf16.msra.mxu0 %v611
  %2309 = vmatprep.subr.bf16.mxu0 %v608
  %2310 = vmatpush1.bf16.msra.mxu0 %v607
  %2311 = vmatprep.subr.bf16.mxu0 %v604
  %2312 = vmatpush1.bf16.msra.mxu0 %v603
  %2313 = vmatprep.subr.bf16.mxu0 %v600
  %2314 = vmatpush1.bf16.msra.mxu0 %v599
  %2315 = vmatprep.subr.bf16.mxu0 %v596
  %2316 = vmatpush1.bf16.msra.mxu0 %v595
  %2317 = vmatprep.subr.bf16.mxu0 0
  %2318 = vmatpush2.bf16.msra.mxu0 0
  %2319 = vmatprep.subr.bf16.mxu0 0
  %2320 = vmatpush2.bf16.msra.mxu0 0
  %2321 = vmatprep.subr.bf16.mxu0 0
  %2322 = vmatpush2.bf16.msra.mxu0 0
  %2323 = vmatprep.subr.bf16.mxu0 0
  %2324 = vmatpush2.bf16.msra.mxu0 0
  %2325 = vmatprep.subr.bf16.mxu0 0
  %2326 = vmatpush2.bf16.msra.mxu0 0
  %2327 = vmatprep.subr.bf16.mxu0 0
  %2328 = vmatpush2.bf16.msra.mxu0 0
  %2329 = vmatprep.subr.bf16.mxu0 0
  %2330 = vmatpush2.bf16.msra.mxu0 0
  %2331 = vmatprep.subr.bf16.mxu0 0
  %2332 = vmatpush2.bf16.msra.mxu0 0
  %2333 = vmatprep.mubr.bf16.mxu0 0
  %2334 = vmatmul.mubr.bf16.gmra.mxu0 %v2102
  %v2335 = vpop.f32.mrf.mxu0
  %v2336 = vadd.f32 0.0, %v2335
  %v2337 = vpop.f32.mrf.mxu0
  %v2338 = vadd.f32 0.0, %v2337
  %v2339 = vpop.f32.mrf.mxu0
  %v2340 = vpop.f32.mrf.mxu0
  %2341 = vdwg.mxu0
  %2342 = vmatprep.subr.bf16.mxu0 %v626
  %2343 = vmatpush1.bf16.msra.mxu0 %v625
  %2344 = vmatprep.subr.bf16.mxu0 %v622
  %2345 = vmatpush1.bf16.msra.mxu0 %v621
  %2346 = vmatprep.subr.bf16.mxu0 %v618
  %2347 = vmatpush1.bf16.msra.mxu0 %v617
  %2348 = vmatprep.subr.bf16.mxu0 %v614
  %2349 = vmatpush1.bf16.msra.mxu0 %v613
  %2350 = vmatprep.subr.bf16.mxu0 %v610
  %2351 = vmatpush1.bf16.msra.mxu0 %v609
  %2352 = vmatprep.subr.bf16.mxu0 %v606
  %2353 = vmatpush1.bf16.msra.mxu0 %v605
  %2354 = vmatprep.subr.bf16.mxu0 %v602
  %2355 = vmatpush1.bf16.msra.mxu0 %v601
  %2356 = vmatprep.subr.bf16.mxu0 %v598
  %2357 = vmatpush1.bf16.msra.mxu0 %v597
  %2358 = vmatprep.subr.bf16.mxu0 0
  %2359 = vmatpush2.bf16.msra.mxu0 0
  %2360 = vmatprep.subr.bf16.mxu0 0
  %2361 = vmatpush2.bf16.msra.mxu0 0
  %2362 = vmatprep.subr.bf16.mxu0 0
  %2363 = vmatpush2.bf16.msra.mxu0 0
  %2364 = vmatprep.subr.bf16.mxu0 0
  %2365 = vmatpush2.bf16.msra.mxu0 0
  %2366 = vmatprep.subr.bf16.mxu0 0
  %2367 = vmatpush2.bf16.msra.mxu0 0
  %2368 = vmatprep.subr.bf16.mxu0 0
  %2369 = vmatpush2.bf16.msra.mxu0 0
  %2370 = vmatprep.subr.bf16.mxu0 0
  %2371 = vmatpush2.bf16.msra.mxu0 0
  %2372 = vmatprep.subr.bf16.mxu0 0
  %2373 = vmatpush2.bf16.msra.mxu0 0
  %2374 = vmatprep.mubr.bf16.mxu0 0
  %2375 = vmatmul.mubr.bf16.gmra.mxu0 %v2102
  %v2376 = vpop.f32.mrf.mxu0
  %v2377 = vadd.f32 0.0, %v2376
  %v2378 = vpop.f32.mrf.mxu0
  %v2379 = vadd.f32 0.0, %v2378
  %v2380 = vpop.f32.mrf.mxu0
  %v2381 = vpop.f32.mrf.mxu0
  %2382 = vdwg.mxu0
  %v2383 = vadd.f32 %v2297, %v2336
  %v2384 = vadd.f32 %v2298, %v2338
  %v2385 = vadd.f32 %v2299, %v2377
  %v2386 = vadd.f32 %v2300, %v2379
  %v2387 = vxor.u32 %v2383, 2147483648
  %v2388 = vmul.f32 %v2387, 1.442695
  %v2389 = vpow.pop %v2388
  %v2390 = vadd.f32 %v2389, 1.0
  %v2391 = vrcp.pop %v2390
  %v2392 = vmul.f32 1.0, %v2391
  %v2393 = vxor.u32 %v2384, 2147483648
  %v2394 = vmul.f32 %v2393, 1.442695
  %v2395 = vpow.pop %v2394
  %v2396 = vadd.f32 %v2395, 1.0
  %v2397 = vrcp.pop %v2396
  %v2398 = vmul.f32 1.0, %v2397
  %v2399 = vtanh.pop %v2385
  %v2400 = vxor.u32 %v2386, 2147483648
  %v2401 = vmul.f32 %v2400, 1.442695
  %v2402 = vpow.pop %v2401
  %v2403 = vadd.f32 %v2402, 1.0
  %v2404 = vrcp.pop %v2403
  %v2405 = vmul.f32 1.0, %v2404
  %v2406 = vmul.f32 %v2398, %v2099
  %v2407 = vmul.f32 %v2392, %v2399
  %v2408 = vadd.f32 %v2406, %v2407
  %v2409 = vtanh.pop %v2408
  %v2410 = vmul.f32 %v2405, %v2409
  %v2411 = vpack.c.bf16 %v2410, %v2410
  %2412 = vmatprep.subr.bf16.mxu0 %v959
  %2413 = vmatpush1.bf16.msra.mxu0 %v958
  %2414 = vmatprep.subr.bf16.mxu0 %v955
  %2415 = vmatpush1.bf16.msra.mxu0 %v954
  %2416 = vmatprep.subr.bf16.mxu0 %v951
  %2417 = vmatpush1.bf16.msra.mxu0 %v950
  %2418 = vmatprep.subr.bf16.mxu0 %v947
  %2419 = vmatpush1.bf16.msra.mxu0 %v946
  %2420 = vmatprep.subr.bf16.mxu0 %v943
  %2421 = vmatpush1.bf16.msra.mxu0 %v942
  %2422 = vmatprep.subr.bf16.mxu0 %v939
  %2423 = vmatpush1.bf16.msra.mxu0 %v938
  %2424 = vmatprep.subr.bf16.mxu0 %v935
  %2425 = vmatpush1.bf16.msra.mxu0 %v934
  %2426 = vmatprep.subr.bf16.mxu0 %v931
  %2427 = vmatpush1.bf16.msra.mxu0 %v930
  %2428 = vmatprep.subr.bf16.mxu0 0
  %2429 = vmatpush2.bf16.msra.mxu0 0
  %2430 = vmatprep.subr.bf16.mxu0 0
  %2431 = vmatpush2.bf16.msra.mxu0 0
  %2432 = vmatprep.subr.bf16.mxu0 0
  %2433 = vmatpush2.bf16.msra.mxu0 0
  %2434 = vmatprep.subr.bf16.mxu0 0
  %2435 = vmatpush2.bf16.msra.mxu0 0
  %2436 = vmatprep.subr.bf16.mxu0 0
  %2437 = vmatpush2.bf16.msra.mxu0 0
  %2438 = vmatprep.subr.bf16.mxu0 0
  %2439 = vmatpush2.bf16.msra.mxu0 0
  %2440 = vmatprep.subr.bf16.mxu0 0
  %2441 = vmatpush2.bf16.msra.mxu0 0
  %2442 = vmatprep.subr.bf16.mxu0 0
  %2443 = vmatpush2.bf16.msra.mxu0 0
  %2444 = vmatprep.mubr.bf16.mxu0 0
  %2445 = vmatmul.mubr.bf16.gmra.mxu0 %v2295
  %v2446 = vpop.f32.mrf.mxu0
  %v2447 = vadd.f32 0.0, %v2446
  %v2448 = vpop.f32.mrf.mxu0
  %v2449 = vadd.f32 0.0, %v2448
  %v2450 = vpop.f32.mrf.mxu0
  %v2451 = vpop.f32.mrf.mxu0
  %2452 = vdwg.mxu0
  %2453 = vmatprep.subr.bf16.mxu0 %v961
  %2454 = vmatpush1.bf16.msra.mxu0 %v960
  %2455 = vmatprep.subr.bf16.mxu0 %v957
  %2456 = vmatpush1.bf16.msra.mxu0 %v956
  %2457 = vmatprep.subr.bf16.mxu0 %v953
  %2458 = vmatpush1.bf16.msra.mxu0 %v952
  %2459 = vmatprep.subr.bf16.mxu0 %v949
  %2460 = vmatpush1.bf16.msra.mxu0 %v948
  %2461 = vmatprep.subr.bf16.mxu0 %v945
  %2462 = vmatpush1.bf16.msra.mxu0 %v944
  %2463 = vmatprep.subr.bf16.mxu0 %v941
  %2464 = vmatpush1.bf16.msra.mxu0 %v940
  %2465 = vmatprep.subr.bf16.mxu0 %v937
  %2466 = vmatpush1.bf16.msra.mxu0 %v936
  %2467 = vmatprep.subr.bf16.mxu0 %v933
  %2468 = vmatpush1.bf16.msra.mxu0 %v932
  %2469 = vmatprep.subr.bf16.mxu0 0
  %2470 = vmatpush2.bf16.msra.mxu0 0
  %2471 = vmatprep.subr.bf16.mxu0 0
  %2472 = vmatpush2.bf16.msra.mxu0 0
  %2473 = vmatprep.subr.bf16.mxu0 0
  %2474 = vmatpush2.bf16.msra.mxu0 0
  %2475 = vmatprep.subr.bf16.mxu0 0
  %2476 = vmatpush2.bf16.msra.mxu0 0
  %2477 = vmatprep.subr.bf16.mxu0 0
  %2478 = vmatpush2.bf16.msra.mxu0 0
  %2479 = vmatprep.subr.bf16.mxu0 0
  %2480 = vmatpush2.bf16.msra.mxu0 0
  %2481 = vmatprep.subr.bf16.mxu0 0
  %2482 = vmatpush2.bf16.msra.mxu0 0
  %2483 = vmatprep.subr.bf16.mxu0 0
  %2484 = vmatpush2.bf16.msra.mxu0 0
  %2485 = vmatprep.mubr.bf16.mxu0 0
  %2486 = vmatmul.mubr.bf16.gmra.mxu0 %v2295
  %v2487 = vpop.f32.mrf.mxu0
  %v2488 = vadd.f32 0.0, %v2487
  %v2489 = vpop.f32.mrf.mxu0
  %v2490 = vadd.f32 0.0, %v2489
  %v2491 = vpop.f32.mrf.mxu0
  %v2492 = vpop.f32.mrf.mxu0
  %2493 = vdwg.mxu0
  %2494 = vmatprep.subr.bf16.mxu0 %v1201
  %2495 = vmatpush1.bf16.msra.mxu0 %v1200
  %2496 = vmatprep.subr.bf16.mxu0 %v1197
  %2497 = vmatpush1.bf16.msra.mxu0 %v1196
  %2498 = vmatprep.subr.bf16.mxu0 %v1193
  %2499 = vmatpush1.bf16.msra.mxu0 %v1192
  %2500 = vmatprep.subr.bf16.mxu0 %v1189
  %2501 = vmatpush1.bf16.msra.mxu0 %v1188
  %2502 = vmatprep.subr.bf16.mxu0 %v1185
  %2503 = vmatpush1.bf16.msra.mxu0 %v1184
  %2504 = vmatprep.subr.bf16.mxu0 %v1181
  %2505 = vmatpush1.bf16.msra.mxu0 %v1180
  %2506 = vmatprep.subr.bf16.mxu0 %v1177
  %2507 = vmatpush1.bf16.msra.mxu0 %v1176
  %2508 = vmatprep.subr.bf16.mxu0 %v1173
  %2509 = vmatpush1.bf16.msra.mxu0 %v1172
  %2510 = vmatprep.subr.bf16.mxu0 0
  %2511 = vmatpush2.bf16.msra.mxu0 0
  %2512 = vmatprep.subr.bf16.mxu0 0
  %2513 = vmatpush2.bf16.msra.mxu0 0
  %2514 = vmatprep.subr.bf16.mxu0 0
  %2515 = vmatpush2.bf16.msra.mxu0 0
  %2516 = vmatprep.subr.bf16.mxu0 0
  %2517 = vmatpush2.bf16.msra.mxu0 0
  %2518 = vmatprep.subr.bf16.mxu0 0
  %2519 = vmatpush2.bf16.msra.mxu0 0
  %2520 = vmatprep.subr.bf16.mxu0 0
  %2521 = vmatpush2.bf16.msra.mxu0 0
  %2522 = vmatprep.subr.bf16.mxu0 0
  %2523 = vmatpush2.bf16.msra.mxu0 0
  %2524 = vmatprep.subr.bf16.mxu0 0
  %2525 = vmatpush2.bf16.msra.mxu0 0
  %2526 = vmatprep.mubr.bf16.mxu0 0
  %2527 = vmatmul.mubr.bf16.gmra.mxu0 %v2411
  %v2528 = vpop.f32.mrf.mxu0
  %v2529 = vadd.f32 %v2447, %v2528
  %v2530 = vpop.f32.mrf.mxu0
  %v2531 = vadd.f32 %v2449, %v2530
  %v2532 = vpop.f32.mrf.mxu0
  %v2533 = vpop.f32.mrf.mxu0
  %2534 = vdwg.mxu0
  %2535 = vmatprep.subr.bf16.mxu0 %v1203
  %2536 = vmatpush1.bf16.msra.mxu0 %v1202
  %2537 = vmatprep.subr.bf16.mxu0 %v1199
  %2538 = vmatpush1.bf16.msra.mxu0 %v1198
  %2539 = vmatprep.subr.bf16.mxu0 %v1195
  %2540 = vmatpush1.bf16.msra.mxu0 %v1194
  %2541 = vmatprep.subr.bf16.mxu0 %v1191
  %2542 = vmatpush1.bf16.msra.mxu0 %v1190
  %2543 = vmatprep.subr.bf16.mxu0 %v1187
  %2544 = vmatpush1.bf16.msra.mxu0 %v1186
  %2545 = vmatprep.subr.bf16.mxu0 %v1183
  %2546 = vmatpush1.bf16.msra.mxu0 %v1182
  %2547 = vmatprep.subr.bf16.mxu0 %v1179
  %2548 = vmatpush1.bf16.msra.mxu0 %v1178
  %2549 = vmatprep.subr.bf16.mxu0 %v1175
  %2550 = vmatpush1.bf16.msra.mxu0 %v1174
  %2551 = vmatprep.subr.bf16.mxu0 0
  %2552 = vmatpush2.bf16.msra.mxu0 0
  %2553 = vmatprep.subr.bf16.mxu0 0
  %2554 = vmatpush2.bf16.msra.mxu0 0
  %2555 = vmatprep.subr.bf16.mxu0 0
  %2556 = vmatpush2.bf16.msra.mxu0 0
  %2557 = vmatprep.subr.bf16.mxu0 0
  %2558 = vmatpush2.bf16.msra.mxu0 0
  %2559 = vmatprep.subr.bf16.mxu0 0
  %2560 = vmatpush2.bf16.msra.mxu0 0
  %2561 = vmatprep.subr.bf16.mxu0 0
  %2562 = vmatpush2.bf16.msra.mxu0 0
  %2563 = vmatprep.subr.bf16.mxu0 0
  %2564 = vmatpush2.bf16.msra.mxu0 0
  %2565 = vmatprep.subr.bf16.mxu0 0
  %2566 = vmatpush2.bf16.msra.mxu0 0
  %2567 = vmatprep.mubr.bf16.mxu0 0
  %2568 = vmatmul.mubr.bf16.gmra.mxu0 %v2411
  %v2569 = vpop.f32.mrf.mxu0
  %v2570 = vadd.f32 %v2488, %v2569
  %v2571 = vpop.f32.mrf.mxu0
  %v2572 = vadd.f32 %v2490, %v2571
  %v2573 = vpop.f32.mrf.mxu0
  %v2574 = vpop.f32.mrf.mxu0
  %2575 = vdwg.mxu0
  %v2576 = vadd.f32 %v2529, %v1323
  %v2577 = vadd.f32 %v2531, %v1327
  %v2578 = vadd.f32 %v2570, %v1331
  %v2579 = vadd.f32 %v2572, %v1335
  %v2580 = vxor.u32 %v2576, 2147483648
  %v2581 = vmul.f32 %v2580, 1.442695
  %v2582 = vpow.pop %v2581
  %v2583 = vadd.f32 %v2582, 1.0
  %v2584 = vrcp.pop %v2583
  %v2585 = vmul.f32 1.0, %v2584
  %v2586 = vxor.u32 %v2577, 2147483648
  %v2587 = vmul.f32 %v2586, 1.442695
  %v2588 = vpow.pop %v2587
  %v2589 = vadd.f32 %v2588, 1.0
  %v2590 = vrcp.pop %v2589
  %v2591 = vmul.f32 1.0, %v2590
  %v2592 = vtanh.pop %v2578
  %v2593 = vxor.u32 %v2579, 2147483648
  %v2594 = vmul.f32 %v2593, 1.442695
  %v2595 = vpow.pop %v2594
  %v2596 = vadd.f32 %v2595, 1.0
  %v2597 = vrcp.pop %v2596
  %v2598 = vmul.f32 1.0, %v2597
  %v2599 = vmul.f32 %v2591, %v2292
  %v2600 = vmul.f32 %v2585, %v2592
  %v2601 = vadd.f32 %v2599, %v2600
  %v2602 = vtanh.pop %v2601
  %v2603 = vmul.f32 %v2598, %v2602
  %v2604 = vpack.c.bf16 %v2603, %v2603
  %s2605 = scalar_lea.vmem [#allocation2], 160
  %v2606 = vld [vmem:[%s2605] sm:$0xff]
  %v2607 = vld [vmem:[%s2605 + $0x8] sm:$0xff]
  %v2608 = vld [vmem:[%s2605 + $0x10] sm:$0xff]
  %v2609 = vld [vmem:[%s2605 + $0x18] sm:$0xff]
  %2610 = vmatprep.subr.bf16.mxu0 %v624
  %2611 = vmatpush1.bf16.msra.mxu0 %v623
  %2612 = vmatprep.subr.bf16.mxu0 %v620
  %2613 = vmatpush1.bf16.msra.mxu0 %v619
  %2614 = vmatprep.subr.bf16.mxu0 %v616
  %2615 = vmatpush1.bf16.msra.mxu0 %v615
  %2616 = vmatprep.subr.bf16.mxu0 %v612
  %2617 = vmatpush1.bf16.msra.mxu0 %v611
  %2618 = vmatprep.subr.bf16.mxu0 %v608
  %2619 = vmatpush1.bf16.msra.mxu0 %v607
  %2620 = vmatprep.subr.bf16.mxu0 %v604
  %2621 = vmatpush1.bf16.msra.mxu0 %v603
  %2622 = vmatprep.subr.bf16.mxu0 %v600
  %2623 = vmatpush1.bf16.msra.mxu0 %v599
  %2624 = vmatprep.subr.bf16.mxu0 %v596
  %2625 = vmatpush1.bf16.msra.mxu0 %v595
  %2626 = vmatprep.subr.bf16.mxu0 0
  %2627 = vmatpush2.bf16.msra.mxu0 0
  %2628 = vmatprep.subr.bf16.mxu0 0
  %2629 = vmatpush2.bf16.msra.mxu0 0
  %2630 = vmatprep.subr.bf16.mxu0 0
  %2631 = vmatpush2.bf16.msra.mxu0 0
  %2632 = vmatprep.subr.bf16.mxu0 0
  %2633 = vmatpush2.bf16.msra.mxu0 0
  %2634 = vmatprep.subr.bf16.mxu0 0
  %2635 = vmatpush2.bf16.msra.mxu0 0
  %2636 = vmatprep.subr.bf16.mxu0 0
  %2637 = vmatpush2.bf16.msra.mxu0 0
  %2638 = vmatprep.subr.bf16.mxu0 0
  %2639 = vmatpush2.bf16.msra.mxu0 0
  %2640 = vmatprep.subr.bf16.mxu0 0
  %2641 = vmatpush2.bf16.msra.mxu0 0
  %2642 = vmatprep.mubr.bf16.mxu0 0
  %2643 = vmatmul.mubr.bf16.gmra.mxu0 %v2411
  %v2644 = vpop.f32.mrf.mxu0
  %v2645 = vadd.f32 0.0, %v2644
  %v2646 = vpop.f32.mrf.mxu0
  %v2647 = vadd.f32 0.0, %v2646
  %v2648 = vpop.f32.mrf.mxu0
  %v2649 = vpop.f32.mrf.mxu0
  %2650 = vdwg.mxu0
  %2651 = vmatprep.subr.bf16.mxu0 %v626
  %2652 = vmatpush1.bf16.msra.mxu0 %v625
  %2653 = vmatprep.subr.bf16.mxu0 %v622
  %2654 = vmatpush1.bf16.msra.mxu0 %v621
  %2655 = vmatprep.subr.bf16.mxu0 %v618
  %2656 = vmatpush1.bf16.msra.mxu0 %v617
  %2657 = vmatprep.subr.bf16.mxu0 %v614
  %2658 = vmatpush1.bf16.msra.mxu0 %v613
  %2659 = vmatprep.subr.bf16.mxu0 %v610
  %2660 = vmatpush1.bf16.msra.mxu0 %v609
  %2661 = vmatprep.subr.bf16.mxu0 %v606
  %2662 = vmatpush1.bf16.msra.mxu0 %v605
  %2663 = vmatprep.subr.bf16.mxu0 %v602
  %2664 = vmatpush1.bf16.msra.mxu0 %v601
  %2665 = vmatprep.subr.bf16.mxu0 %v598
  %2666 = vmatpush1.bf16.msra.mxu0 %v597
  %2667 = vmatprep.subr.bf16.mxu0 0
  %2668 = vmatpush2.bf16.msra.mxu0 0
  %2669 = vmatprep.subr.bf16.mxu0 0
  %2670 = vmatpush2.bf16.msra.mxu0 0
  %2671 = vmatprep.subr.bf16.mxu0 0
  %2672 = vmatpush2.bf16.msra.mxu0 0
  %2673 = vmatprep.subr.bf16.mxu0 0
  %2674 = vmatpush2.bf16.msra.mxu0 0
  %2675 = vmatprep.subr.bf16.mxu0 0
  %2676 = vmatpush2.bf16.msra.mxu0 0
  %2677 = vmatprep.subr.bf16.mxu0 0
  %2678 = vmatpush2.bf16.msra.mxu0 0
  %2679 = vmatprep.subr.bf16.mxu0 0
  %2680 = vmatpush2.bf16.msra.mxu0 0
  %2681 = vmatprep.subr.bf16.mxu0 0
  %2682 = vmatpush2.bf16.msra.mxu0 0
  %2683 = vmatprep.mubr.bf16.mxu0 0
  %2684 = vmatmul.mubr.bf16.gmra.mxu0 %v2411
  %v2685 = vpop.f32.mrf.mxu0
  %v2686 = vadd.f32 0.0, %v2685
  %v2687 = vpop.f32.mrf.mxu0
  %v2688 = vadd.f32 0.0, %v2687
  %v2689 = vpop.f32.mrf.mxu0
  %v2690 = vpop.f32.mrf.mxu0
  %2691 = vdwg.mxu0
  %v2692 = vadd.f32 %v2606, %v2645
  %v2693 = vadd.f32 %v2607, %v2647
  %v2694 = vadd.f32 %v2608, %v2686
  %v2695 = vadd.f32 %v2609, %v2688
  %v2696 = vxor.u32 %v2692, 2147483648
  %v2697 = vmul.f32 %v2696, 1.442695
  %v2698 = vpow.pop %v2697
  %v2699 = vadd.f32 %v2698, 1.0
  %v2700 = vrcp.pop %v2699
  %v2701 = vmul.f32 1.0, %v2700
  %v2702 = vxor.u32 %v2693, 2147483648
  %v2703 = vmul.f32 %v2702, 1.442695
  %v2704 = vpow.pop %v2703
  %v2705 = vadd.f32 %v2704, 1.0
  %v2706 = vrcp.pop %v2705
  %v2707 = vmul.f32 1.0, %v2706
  %v2708 = vtanh.pop %v2694
  %v2709 = vxor.u32 %v2695, 2147483648
  %v2710 = vmul.f32 %v2709, 1.442695
  %v2711 = vpow.pop %v2710
  %v2712 = vadd.f32 %v2711, 1.0
  %v2713 = vrcp.pop %v2712
  %v2714 = vmul.f32 1.0, %v2713
  %v2715 = vmul.f32 %v2707, %v2408
  %v2716 = vmul.f32 %v2701, %v2708
  %v2717 = vadd.f32 %v2715, %v2716
  %v2718 = vtanh.pop %v2717
  %v2719 = vmul.f32 %v2714, %v2718
  %v2720 = vpack.c.bf16 %v2719, %v2719
  %2721 = vmatprep.subr.bf16.mxu0 %v959
  %2722 = vmatpush1.bf16.msra.mxu0 %v958
  %2723 = vmatprep.subr.bf16.mxu0 %v955
  %2724 = vmatpush1.bf16.msra.mxu0 %v954
  %2725 = vmatprep.subr.bf16.mxu0 %v951
  %2726 = vmatpush1.bf16.msra.mxu0 %v950
  %2727 = vmatprep.subr.bf16.mxu0 %v947
  %2728 = vmatpush1.bf16.msra.mxu0 %v946
  %2729 = vmatprep.subr.bf16.mxu0 %v943
  %2730 = vmatpush1.bf16.msra.mxu0 %v942
  %2731 = vmatprep.subr.bf16.mxu0 %v939
  %2732 = vmatpush1.bf16.msra.mxu0 %v938
  %2733 = vmatprep.subr.bf16.mxu0 %v935
  %2734 = vmatpush1.bf16.msra.mxu0 %v934
  %2735 = vmatprep.subr.bf16.mxu0 %v931
  %2736 = vmatpush1.bf16.msra.mxu0 %v930
  %2737 = vmatprep.subr.bf16.mxu0 0
  %2738 = vmatpush2.bf16.msra.mxu0 0
  %2739 = vmatprep.subr.bf16.mxu0 0
  %2740 = vmatpush2.bf16.msra.mxu0 0
  %2741 = vmatprep.subr.bf16.mxu0 0
  %2742 = vmatpush2.bf16.msra.mxu0 0
  %2743 = vmatprep.subr.bf16.mxu0 0
  %2744 = vmatpush2.bf16.msra.mxu0 0
  %2745 = vmatprep.subr.bf16.mxu0 0
  %2746 = vmatpush2.bf16.msra.mxu0 0
  %2747 = vmatprep.subr.bf16.mxu0 0
  %2748 = vmatpush2.bf16.msra.mxu0 0
  %2749 = vmatprep.subr.bf16.mxu0 0
  %2750 = vmatpush2.bf16.msra.mxu0 0
  %2751 = vmatprep.subr.bf16.mxu0 0
  %2752 = vmatpush2.bf16.msra.mxu0 0
  %2753 = vmatprep.mubr.bf16.mxu0 0
  %2754 = vmatmul.mubr.bf16.gmra.mxu0 %v2604
  %v2755 = vpop.f32.mrf.mxu0
  %v2756 = vadd.f32 0.0, %v2755
  %v2757 = vpop.f32.mrf.mxu0
  %v2758 = vadd.f32 0.0, %v2757
  %v2759 = vpop.f32.mrf.mxu0
  %v2760 = vpop.f32.mrf.mxu0
  %2761 = vdwg.mxu0
  %2762 = vmatprep.subr.bf16.mxu0 %v961
  %2763 = vmatpush1.bf16.msra.mxu0 %v960
  %2764 = vmatprep.subr.bf16.mxu0 %v957
  %2765 = vmatpush1.bf16.msra.mxu0 %v956
  %2766 = vmatprep.subr.bf16.mxu0 %v953
  %2767 = vmatpush1.bf16.msra.mxu0 %v952
  %2768 = vmatprep.subr.bf16.mxu0 %v949
  %2769 = vmatpush1.bf16.msra.mxu0 %v948
  %2770 = vmatprep.subr.bf16.mxu0 %v945
  %2771 = vmatpush1.bf16.msra.mxu0 %v944
  %2772 = vmatprep.subr.bf16.mxu0 %v941
  %2773 = vmatpush1.bf16.msra.mxu0 %v940
  %2774 = vmatprep.subr.bf16.mxu0 %v937
  %2775 = vmatpush1.bf16.msra.mxu0 %v936
  %2776 = vmatprep.subr.bf16.mxu0 %v933
  %2777 = vmatpush1.bf16.msra.mxu0 %v932
  %2778 = vmatprep.subr.bf16.mxu0 0
  %2779 = vmatpush2.bf16.msra.mxu0 0
  %2780 = vmatprep.subr.bf16.mxu0 0
  %2781 = vmatpush2.bf16.msra.mxu0 0
  %2782 = vmatprep.subr.bf16.mxu0 0
  %2783 = vmatpush2.bf16.msra.mxu0 0
  %2784 = vmatprep.subr.bf16.mxu0 0
  %2785 = vmatpush2.bf16.msra.mxu0 0
  %2786 = vmatprep.subr.bf16.mxu0 0
  %2787 = vmatpush2.bf16.msra.mxu0 0
  %2788 = vmatprep.subr.bf16.mxu0 0
  %2789 = vmatpush2.bf16.msra.mxu0 0
  %2790 = vmatprep.subr.bf16.mxu0 0
  %2791 = vmatpush2.bf16.msra.mxu0 0
  %2792 = vmatprep.subr.bf16.mxu0 0
  %2793 = vmatpush2.bf16.msra.mxu0 0
  %2794 = vmatprep.mubr.bf16.mxu0 0
  %2795 = vmatmul.mubr.bf16.gmra.mxu0 %v2604
  %v2796 = vpop.f32.mrf.mxu0
  %v2797 = vadd.f32 0.0, %v2796
  %v2798 = vpop.f32.mrf.mxu0
  %v2799 = vadd.f32 0.0, %v2798
  %v2800 = vpop.f32.mrf.mxu0
  %v2801 = vpop.f32.mrf.mxu0
  %2802 = vdwg.mxu0
  %2803 = vmatprep.subr.bf16.mxu0 %v1201
  %2804 = vmatpush1.bf16.msra.mxu0 %v1200
  %2805 = vmatprep.subr.bf16.mxu0 %v1197
  %2806 = vmatpush1.bf16.msra.mxu0 %v1196
  %2807 = vmatprep.subr.bf16.mxu0 %v1193
  %2808 = vmatpush1.bf16.msra.mxu0 %v1192
  %2809 = vmatprep.subr.bf16.mxu0 %v1189
  %2810 = vmatpush1.bf16.msra.mxu0 %v1188
  %2811 = vmatprep.subr.bf16.mxu0 %v1185
  %2812 = vmatpush1.bf16.msra.mxu0 %v1184
  %2813 = vmatprep.subr.bf16.mxu0 %v1181
  %2814 = vmatpush1.bf16.msra.mxu0 %v1180
  %2815 = vmatprep.subr.bf16.mxu0 %v1177
  %2816 = vmatpush1.bf16.msra.mxu0 %v1176
  %2817 = vmatprep.subr.bf16.mxu0 %v1173
  %2818 = vmatpush1.bf16.msra.mxu0 %v1172
  %2819 = vmatprep.subr.bf16.mxu0 0
  %2820 = vmatpush2.bf16.msra.mxu0 0
  %2821 = vmatprep.subr.bf16.mxu0 0
  %2822 = vmatpush2.bf16.msra.mxu0 0
  %2823 = vmatprep.subr.bf16.mxu0 0
  %2824 = vmatpush2.bf16.msra.mxu0 0
  %2825 = vmatprep.subr.bf16.mxu0 0
  %2826 = vmatpush2.bf16.msra.mxu0 0
  %2827 = vmatprep.subr.bf16.mxu0 0
  %2828 = vmatpush2.bf16.msra.mxu0 0
  %2829 = vmatprep.subr.bf16.mxu0 0
  %2830 = vmatpush2.bf16.msra.mxu0 0
  %2831 = vmatprep.subr.bf16.mxu0 0
  %2832 = vmatpush2.bf16.msra.mxu0 0
  %2833 = vmatprep.subr.bf16.mxu0 0
  %2834 = vmatpush2.bf16.msra.mxu0 0
  %2835 = vmatprep.mubr.bf16.mxu0 0
  %2836 = vmatmul.mubr.bf16.gmra.mxu0 %v2720
  %v2837 = vpop.f32.mrf.mxu0
  %v2838 = vadd.f32 %v2756, %v2837
  %v2839 = vpop.f32.mrf.mxu0
  %v2840 = vadd.f32 %v2758, %v2839
  %v2841 = vpop.f32.mrf.mxu0
  %v2842 = vpop.f32.mrf.mxu0
  %2843 = vdwg.mxu0
  %2844 = vmatprep.subr.bf16.mxu0 %v1203
  %2845 = vmatpush1.bf16.msra.mxu0 %v1202
  %2846 = vmatprep.subr.bf16.mxu0 %v1199
  %2847 = vmatpush1.bf16.msra.mxu0 %v1198
  %2848 = vmatprep.subr.bf16.mxu0 %v1195
  %2849 = vmatpush1.bf16.msra.mxu0 %v1194
  %2850 = vmatprep.subr.bf16.mxu0 %v1191
  %2851 = vmatpush1.bf16.msra.mxu0 %v1190
  %2852 = vmatprep.subr.bf16.mxu0 %v1187
  %2853 = vmatpush1.bf16.msra.mxu0 %v1186
  %2854 = vmatprep.subr.bf16.mxu0 %v1183
  %2855 = vmatpush1.bf16.msra.mxu0 %v1182
  %2856 = vmatprep.subr.bf16.mxu0 %v1179
  %2857 = vmatpush1.bf16.msra.mxu0 %v1178
  %2858 = vmatprep.subr.bf16.mxu0 %v1175
  %2859 = vmatpush1.bf16.msra.mxu0 %v1174
  %2860 = vmatprep.subr.bf16.mxu0 0
  %2861 = vmatpush2.bf16.msra.mxu0 0
  %2862 = vmatprep.subr.bf16.mxu0 0
  %2863 = vmatpush2.bf16.msra.mxu0 0
  %2864 = vmatprep.subr.bf16.mxu0 0
  %2865 = vmatpush2.bf16.msra.mxu0 0
  %2866 = vmatprep.subr.bf16.mxu0 0
  %2867 = vmatpush2.bf16.msra.mxu0 0
  %2868 = vmatprep.subr.bf16.mxu0 0
  %2869 = vmatpush2.bf16.msra.mxu0 0
  %2870 = vmatprep.subr.bf16.mxu0 0
  %2871 = vmatpush2.bf16.msra.mxu0 0
  %2872 = vmatprep.subr.bf16.mxu0 0
  %2873 = vmatpush2.bf16.msra.mxu0 0
  %2874 = vmatprep.subr.bf16.mxu0 0
  %2875 = vmatpush2.bf16.msra.mxu0 0
  %2876 = vmatprep.mubr.bf16.mxu0 0
  %2877 = vmatmul.mubr.bf16.gmra.mxu0 %v2720
  %v2878 = vpop.f32.mrf.mxu0
  %v2879 = vadd.f32 %v2797, %v2878
  %v2880 = vpop.f32.mrf.mxu0
  %v2881 = vadd.f32 %v2799, %v2880
  %v2882 = vpop.f32.mrf.mxu0
  %v2883 = vpop.f32.mrf.mxu0
  %2884 = vdwg.mxu0
  %v2885 = vadd.f32 %v2838, %v1323
  %v2886 = vadd.f32 %v2840, %v1327
  %v2887 = vadd.f32 %v2879, %v1331
  %v2888 = vadd.f32 %v2881, %v1335
  %v2889 = vxor.u32 %v2885, 2147483648
  %v2890 = vmul.f32 %v2889, 1.442695
  %v2891 = vpow.pop %v2890
  %v2892 = vadd.f32 %v2891, 1.0
  %v2893 = vrcp.pop %v2892
  %v2894 = vmul.f32 1.0, %v2893
  %v2895 = vxor.u32 %v2886, 2147483648
  %v2896 = vmul.f32 %v2895, 1.442695
  %v2897 = vpow.pop %v2896
  %v2898 = vadd.f32 %v2897, 1.0
  %v2899 = vrcp.pop %v2898
  %v2900 = vmul.f32 1.0, %v2899
  %v2901 = vtanh.pop %v2887
  %v2902 = vxor.u32 %v2888, 2147483648
  %v2903 = vmul.f32 %v2902, 1.442695
  %v2904 = vpow.pop %v2903
  %v2905 = vadd.f32 %v2904, 1.0
  %v2906 = vrcp.pop %v2905
  %v2907 = vmul.f32 1.0, %v2906
  %v2908 = vmul.f32 %v2900, %v2601
  %v2909 = vmul.f32 %v2894, %v2901
  %v2910 = vadd.f32 %v2908, %v2909
  %v2911 = vtanh.pop %v2910
  %v2912 = vmul.f32 %v2907, %v2911
  %v2913 = vpack.c.bf16 %v2912, %v2912
  %s2914 = scalar_lea.vmem [#allocation2], 192
  %v2915 = vld [vmem:[%s2914] sm:$0xff]
  %v2916 = vld [vmem:[%s2914 + $0x8] sm:$0xff]
  %v2917 = vld [vmem:[%s2914 + $0x10] sm:$0xff]
  %v2918 = vld [vmem:[%s2914 + $0x18] sm:$0xff]
  %2919 = vmatprep.subr.bf16.mxu0 %v624
  %2920 = vmatpush1.bf16.msra.mxu0 %v623
  %2921 = vmatprep.subr.bf16.mxu0 %v620
  %2922 = vmatpush1.bf16.msra.mxu0 %v619
  %2923 = vmatprep.subr.bf16.mxu0 %v616
  %2924 = vmatpush1.bf16.msra.mxu0 %v615
  %2925 = vmatprep.subr.bf16.mxu0 %v612
  %2926 = vmatpush1.bf16.msra.mxu0 %v611
  %2927 = vmatprep.subr.bf16.mxu0 %v608
  %2928 = vmatpush1.bf16.msra.mxu0 %v607
  %2929 = vmatprep.subr.bf16.mxu0 %v604
  %2930 = vmatpush1.bf16.msra.mxu0 %v603
  %2931 = vmatprep.subr.bf16.mxu0 %v600
  %2932 = vmatpush1.bf16.msra.mxu0 %v599
  %2933 = vmatprep.subr.bf16.mxu0 %v596
  %2934 = vmatpush1.bf16.msra.mxu0 %v595
  %2935 = vmatprep.subr.bf16.mxu0 0
  %2936 = vmatpush2.bf16.msra.mxu0 0
  %2937 = vmatprep.subr.bf16.mxu0 0
  %2938 = vmatpush2.bf16.msra.mxu0 0
  %2939 = vmatprep.subr.bf16.mxu0 0
  %2940 = vmatpush2.bf16.msra.mxu0 0
  %2941 = vmatprep.subr.bf16.mxu0 0
  %2942 = vmatpush2.bf16.msra.mxu0 0
  %2943 = vmatprep.subr.bf16.mxu0 0
  %2944 = vmatpush2.bf16.msra.mxu0 0
  %2945 = vmatprep.subr.bf16.mxu0 0
  %2946 = vmatpush2.bf16.msra.mxu0 0
  %2947 = vmatprep.subr.bf16.mxu0 0
  %2948 = vmatpush2.bf16.msra.mxu0 0
  %2949 = vmatprep.subr.bf16.mxu0 0
  %2950 = vmatpush2.bf16.msra.mxu0 0
  %2951 = vmatprep.mubr.bf16.mxu0 0
  %2952 = vmatmul.mubr.bf16.gmra.mxu0 %v2720
  %v2953 = vpop.f32.mrf.mxu0
  %v2954 = vadd.f32 0.0, %v2953
  %v2955 = vpop.f32.mrf.mxu0
  %v2956 = vadd.f32 0.0, %v2955
  %v2957 = vpop.f32.mrf.mxu0
  %v2958 = vpop.f32.mrf.mxu0
  %2959 = vdwg.mxu0
  %2960 = vmatprep.subr.bf16.mxu0 %v626
  %2961 = vmatpush1.bf16.msra.mxu0 %v625
  %2962 = vmatprep.subr.bf16.mxu0 %v622
  %2963 = vmatpush1.bf16.msra.mxu0 %v621
  %2964 = vmatprep.subr.bf16.mxu0 %v618
  %2965 = vmatpush1.bf16.msra.mxu0 %v617
  %2966 = vmatprep.subr.bf16.mxu0 %v614
  %2967 = vmatpush1.bf16.msra.mxu0 %v613
  %2968 = vmatprep.subr.bf16.mxu0 %v610
  %2969 = vmatpush1.bf16.msra.mxu0 %v609
  %2970 = vmatprep.subr.bf16.mxu0 %v606
  %2971 = vmatpush1.bf16.msra.mxu0 %v605
  %2972 = vmatprep.subr.bf16.mxu0 %v602
  %2973 = vmatpush1.bf16.msra.mxu0 %v601
  %2974 = vmatprep.subr.bf16.mxu0 %v598
  %2975 = vmatpush1.bf16.msra.mxu0 %v597
  %2976 = vmatprep.subr.bf16.mxu0 0
  %2977 = vmatpush2.bf16.msra.mxu0 0
  %2978 = vmatprep.subr.bf16.mxu0 0
  %2979 = vmatpush2.bf16.msra.mxu0 0
  %2980 = vmatprep.subr.bf16.mxu0 0
  %2981 = vmatpush2.bf16.msra.mxu0 0
  %2982 = vmatprep.subr.bf16.mxu0 0
  %2983 = vmatpush2.bf16.msra.mxu0 0
  %2984 = vmatprep.subr.bf16.mxu0 0
  %2985 = vmatpush2.bf16.msra.mxu0 0
  %2986 = vmatprep.subr.bf16.mxu0 0
  %2987 = vmatpush2.bf16.msra.mxu0 0
  %2988 = vmatprep.subr.bf16.mxu0 0
  %2989 = vmatpush2.bf16.msra.mxu0 0
  %2990 = vmatprep.subr.bf16.mxu0 0
  %2991 = vmatpush2.bf16.msra.mxu0 0
  %2992 = vmatprep.mubr.bf16.mxu0 0
  %2993 = vmatmul.mubr.bf16.gmra.mxu0 %v2720
  %v2994 = vpop.f32.mrf.mxu0
  %v2995 = vadd.f32 0.0, %v2994
  %v2996 = vpop.f32.mrf.mxu0
  %v2997 = vadd.f32 0.0, %v2996
  %v2998 = vpop.f32.mrf.mxu0
  %v2999 = vpop.f32.mrf.mxu0
  %3000 = vdwg.mxu0
  %v3001 = vadd.f32 %v2915, %v2954
  %v3002 = vadd.f32 %v2916, %v2956
  %v3003 = vadd.f32 %v2917, %v2995
  %v3004 = vadd.f32 %v2918, %v2997
  %v3005 = vxor.u32 %v3001, 2147483648
  %v3006 = vmul.f32 %v3005, 1.442695
  %v3007 = vpow.pop %v3006
  %v3008 = vadd.f32 %v3007, 1.0
  %v3009 = vrcp.pop %v3008
  %v3010 = vmul.f32 1.0, %v3009
  %v3011 = vxor.u32 %v3002, 2147483648
  %v3012 = vmul.f32 %v3011, 1.442695
  %v3013 = vpow.pop %v3012
  %v3014 = vadd.f32 %v3013, 1.0
  %v3015 = vrcp.pop %v3014
  %v3016 = vmul.f32 1.0, %v3015
  %v3017 = vtanh.pop %v3003
  %v3018 = vxor.u32 %v3004, 2147483648
  %v3019 = vmul.f32 %v3018, 1.442695
  %v3020 = vpow.pop %v3019
  %v3021 = vadd.f32 %v3020, 1.0
  %v3022 = vrcp.pop %v3021
  %v3023 = vmul.f32 1.0, %v3022
  %v3024 = vmul.f32 %v3016, %v2717
  %v3025 = vmul.f32 %v3010, %v3017
  %v3026 = vadd.f32 %v3024, %v3025
  %v3027 = vtanh.pop %v3026
  %v3028 = vmul.f32 %v3023, %v3027
  %v3029 = vpack.c.bf16 %v3028, %v3028
  %3030 = vmatprep.subr.bf16.mxu0 %v959
  %3031 = vmatpush1.bf16.msra.mxu0 %v958
  %3032 = vmatprep.subr.bf16.mxu0 %v955
  %3033 = vmatpush1.bf16.msra.mxu0 %v954
  %3034 = vmatprep.subr.bf16.mxu0 %v951
  %3035 = vmatpush1.bf16.msra.mxu0 %v950
  %3036 = vmatprep.subr.bf16.mxu0 %v947
  %3037 = vmatpush1.bf16.msra.mxu0 %v946
  %3038 = vmatprep.subr.bf16.mxu0 %v943
  %3039 = vmatpush1.bf16.msra.mxu0 %v942
  %3040 = vmatprep.subr.bf16.mxu0 %v939
  %3041 = vmatpush1.bf16.msra.mxu0 %v938
  %3042 = vmatprep.subr.bf16.mxu0 %v935
  %3043 = vmatpush1.bf16.msra.mxu0 %v934
  %3044 = vmatprep.subr.bf16.mxu0 %v931
  %3045 = vmatpush1.bf16.msra.mxu0 %v930
  %3046 = vmatprep.subr.bf16.mxu0 0
  %3047 = vmatpush2.bf16.msra.mxu0 0
  %3048 = vmatprep.subr.bf16.mxu0 0
  %3049 = vmatpush2.bf16.msra.mxu0 0
  %3050 = vmatprep.subr.bf16.mxu0 0
  %3051 = vmatpush2.bf16.msra.mxu0 0
  %3052 = vmatprep.subr.bf16.mxu0 0
  %3053 = vmatpush2.bf16.msra.mxu0 0
  %3054 = vmatprep.subr.bf16.mxu0 0
  %3055 = vmatpush2.bf16.msra.mxu0 0
  %3056 = vmatprep.subr.bf16.mxu0 0
  %3057 = vmatpush2.bf16.msra.mxu0 0
  %3058 = vmatprep.subr.bf16.mxu0 0
  %3059 = vmatpush2.bf16.msra.mxu0 0
  %3060 = vmatprep.subr.bf16.mxu0 0
  %3061 = vmatpush2.bf16.msra.mxu0 0
  %3062 = vmatprep.mubr.bf16.mxu0 0
  %3063 = vmatmul.mubr.bf16.gmra.mxu0 %v2913
  %v3064 = vpop.f32.mrf.mxu0
  %v3065 = vadd.f32 0.0, %v3064
  %v3066 = vpop.f32.mrf.mxu0
  %v3067 = vadd.f32 0.0, %v3066
  %v3068 = vpop.f32.mrf.mxu0
  %v3069 = vpop.f32.mrf.mxu0
  %3070 = vdwg.mxu0
  %3071 = vmatprep.subr.bf16.mxu0 %v961
  %3072 = vmatpush1.bf16.msra.mxu0 %v960
  %3073 = vmatprep.subr.bf16.mxu0 %v957
  %3074 = vmatpush1.bf16.msra.mxu0 %v956
  %3075 = vmatprep.subr.bf16.mxu0 %v953
  %3076 = vmatpush1.bf16.msra.mxu0 %v952
  %3077 = vmatprep.subr.bf16.mxu0 %v949
  %3078 = vmatpush1.bf16.msra.mxu0 %v948
  %3079 = vmatprep.subr.bf16.mxu0 %v945
  %3080 = vmatpush1.bf16.msra.mxu0 %v944
  %3081 = vmatprep.subr.bf16.mxu0 %v941
  %3082 = vmatpush1.bf16.msra.mxu0 %v940
  %3083 = vmatprep.subr.bf16.mxu0 %v937
  %3084 = vmatpush1.bf16.msra.mxu0 %v936
  %3085 = vmatprep.subr.bf16.mxu0 %v933
  %3086 = vmatpush1.bf16.msra.mxu0 %v932
  %3087 = vmatprep.subr.bf16.mxu0 0
  %3088 = vmatpush2.bf16.msra.mxu0 0
  %3089 = vmatprep.subr.bf16.mxu0 0
  %3090 = vmatpush2.bf16.msra.mxu0 0
  %3091 = vmatprep.subr.bf16.mxu0 0
  %3092 = vmatpush2.bf16.msra.mxu0 0
  %3093 = vmatprep.subr.bf16.mxu0 0
  %3094 = vmatpush2.bf16.msra.mxu0 0
  %3095 = vmatprep.subr.bf16.mxu0 0
  %3096 = vmatpush2.bf16.msra.mxu0 0
  %3097 = vmatprep.subr.bf16.mxu0 0
  %3098 = vmatpush2.bf16.msra.mxu0 0
  %3099 = vmatprep.subr.bf16.mxu0 0
  %3100 = vmatpush2.bf16.msra.mxu0 0
  %3101 = vmatprep.subr.bf16.mxu0 0
  %3102 = vmatpush2.bf16.msra.mxu0 0
  %3103 = vmatprep.mubr.bf16.mxu0 0
  %3104 = vmatmul.mubr.bf16.gmra.mxu0 %v2913
  %v3105 = vpop.f32.mrf.mxu0
  %v3106 = vadd.f32 0.0, %v3105
  %v3107 = vpop.f32.mrf.mxu0
  %v3108 = vadd.f32 0.0, %v3107
  %v3109 = vpop.f32.mrf.mxu0
  %v3110 = vpop.f32.mrf.mxu0
  %3111 = vdwg.mxu0
  %3112 = vmatprep.subr.bf16.mxu0 %v1201
  %3113 = vmatpush1.bf16.msra.mxu0 %v1200
  %3114 = vmatprep.subr.bf16.mxu0 %v1197
  %3115 = vmatpush1.bf16.msra.mxu0 %v1196
  %3116 = vmatprep.subr.bf16.mxu0 %v1193
  %3117 = vmatpush1.bf16.msra.mxu0 %v1192
  %3118 = vmatprep.subr.bf16.mxu0 %v1189
  %3119 = vmatpush1.bf16.msra.mxu0 %v1188
  %3120 = vmatprep.subr.bf16.mxu0 %v1185
  %3121 = vmatpush1.bf16.msra.mxu0 %v1184
  %3122 = vmatprep.subr.bf16.mxu0 %v1181
  %3123 = vmatpush1.bf16.msra.mxu0 %v1180
  %3124 = vmatprep.subr.bf16.mxu0 %v1177
  %3125 = vmatpush1.bf16.msra.mxu0 %v1176
  %3126 = vmatprep.subr.bf16.mxu0 %v1173
  %3127 = vmatpush1.bf16.msra.mxu0 %v1172
  %3128 = vmatprep.subr.bf16.mxu0 0
  %3129 = vmatpush2.bf16.msra.mxu0 0
  %3130 = vmatprep.subr.bf16.mxu0 0
  %3131 = vmatpush2.bf16.msra.mxu0 0
  %3132 = vmatprep.subr.bf16.mxu0 0
  %3133 = vmatpush2.bf16.msra.mxu0 0
  %3134 = vmatprep.subr.bf16.mxu0 0
  %3135 = vmatpush2.bf16.msra.mxu0 0
  %3136 = vmatprep.subr.bf16.mxu0 0
  %3137 = vmatpush2.bf16.msra.mxu0 0
  %3138 = vmatprep.subr.bf16.mxu0 0
  %3139 = vmatpush2.bf16.msra.mxu0 0
  %3140 = vmatprep.subr.bf16.mxu0 0
  %3141 = vmatpush2.bf16.msra.mxu0 0
  %3142 = vmatprep.subr.bf16.mxu0 0
  %3143 = vmatpush2.bf16.msra.mxu0 0
  %3144 = vmatprep.mubr.bf16.mxu0 0
  %3145 = vmatmul.mubr.bf16.gmra.mxu0 %v3029
  %v3146 = vpop.f32.mrf.mxu0
  %v3147 = vadd.f32 %v3065, %v3146
  %v3148 = vpop.f32.mrf.mxu0
  %v3149 = vadd.f32 %v3067, %v3148
  %v3150 = vpop.f32.mrf.mxu0
  %v3151 = vpop.f32.mrf.mxu0
  %3152 = vdwg.mxu0
  %3153 = vmatprep.subr.bf16.mxu0 %v1203
  %3154 = vmatpush1.bf16.msra.mxu0 %v1202
  %3155 = vmatprep.subr.bf16.mxu0 %v1199
  %3156 = vmatpush1.bf16.msra.mxu0 %v1198
  %3157 = vmatprep.subr.bf16.mxu0 %v1195
  %3158 = vmatpush1.bf16.msra.mxu0 %v1194
  %3159 = vmatprep.subr.bf16.mxu0 %v1191
  %3160 = vmatpush1.bf16.msra.mxu0 %v1190
  %3161 = vmatprep.subr.bf16.mxu0 %v1187
  %3162 = vmatpush1.bf16.msra.mxu0 %v1186
  %3163 = vmatprep.subr.bf16.mxu0 %v1183
  %3164 = vmatpush1.bf16.msra.mxu0 %v1182
  %3165 = vmatprep.subr.bf16.mxu0 %v1179
  %3166 = vmatpush1.bf16.msra.mxu0 %v1178
  %3167 = vmatprep.subr.bf16.mxu0 %v1175
  %3168 = vmatpush1.bf16.msra.mxu0 %v1174
  %3169 = vmatprep.subr.bf16.mxu0 0
  %3170 = vmatpush2.bf16.msra.mxu0 0
  %3171 = vmatprep.subr.bf16.mxu0 0
  %3172 = vmatpush2.bf16.msra.mxu0 0
  %3173 = vmatprep.subr.bf16.mxu0 0
  %3174 = vmatpush2.bf16.msra.mxu0 0
  %3175 = vmatprep.subr.bf16.mxu0 0
  %3176 = vmatpush2.bf16.msra.mxu0 0
  %3177 = vmatprep.subr.bf16.mxu0 0
  %3178 = vmatpush2.bf16.msra.mxu0 0
  %3179 = vmatprep.subr.bf16.mxu0 0
  %3180 = vmatpush2.bf16.msra.mxu0 0
  %3181 = vmatprep.subr.bf16.mxu0 0
  %3182 = vmatpush2.bf16.msra.mxu0 0
  %3183 = vmatprep.subr.bf16.mxu0 0
  %3184 = vmatpush2.bf16.msra.mxu0 0
  %3185 = vmatprep.mubr.bf16.mxu0 0
  %3186 = vmatmul.mubr.bf16.gmra.mxu0 %v3029
  %v3187 = vpop.f32.mrf.mxu0
  %v3188 = vadd.f32 %v3106, %v3187
  %v3189 = vpop.f32.mrf.mxu0
  %v3190 = vadd.f32 %v3108, %v3189
  %v3191 = vpop.f32.mrf.mxu0
  %v3192 = vpop.f32.mrf.mxu0
  %3193 = vdwg.mxu0
  %v3194 = vadd.f32 %v3147, %v1323
  %v3195 = vadd.f32 %v3149, %v1327
  %v3196 = vadd.f32 %v3188, %v1331
  %v3197 = vadd.f32 %v3190, %v1335
  %v3198 = vxor.u32 %v3194, 2147483648
  %v3199 = vmul.f32 %v3198, 1.442695
  %v3200 = vpow.pop %v3199
  %v3201 = vadd.f32 %v3200, 1.0
  %v3202 = vrcp.pop %v3201
  %v3203 = vmul.f32 1.0, %v3202
  %v3204 = vxor.u32 %v3195, 2147483648
  %v3205 = vmul.f32 %v3204, 1.442695
  %v3206 = vpow.pop %v3205
  %v3207 = vadd.f32 %v3206, 1.0
  %v3208 = vrcp.pop %v3207
  %v3209 = vmul.f32 1.0, %v3208
  %v3210 = vtanh.pop %v3196
  %v3211 = vxor.u32 %v3197, 2147483648
  %v3212 = vmul.f32 %v3211, 1.442695
  %v3213 = vpow.pop %v3212
  %v3214 = vadd.f32 %v3213, 1.0
  %v3215 = vrcp.pop %v3214
  %v3216 = vmul.f32 1.0, %v3215
  %v3217 = vmul.f32 %v3209, %v2910
  %v3218 = vmul.f32 %v3203, %v3210
  %v3219 = vadd.f32 %v3217, %v3218
  %v3220 = vtanh.pop %v3219
  %v3221 = vmul.f32 %v3216, %v3220
  %v3222 = vpack.c.bf16 %v3221, %v3221
  %s3223 = scalar_lea.vmem [#allocation2], 224
  %v3224 = vld [vmem:[%s3223] sm:$0xff]
  %v3225 = vld [vmem:[%s3223 + $0x8] sm:$0xff]
  %v3226 = vld [vmem:[%s3223 + $0x10] sm:$0xff]
  %v3227 = vld [vmem:[%s3223 + $0x18] sm:$0xff]
  %3228 = vmatprep.subr.bf16.mxu0 %v624
  %3229 = vmatpush1.bf16.msra.mxu0 %v623
  %3230 = vmatprep.subr.bf16.mxu0 %v620
  %3231 = vmatpush1.bf16.msra.mxu0 %v619
  %3232 = vmatprep.subr.bf16.mxu0 %v616
  %3233 = vmatpush1.bf16.msra.mxu0 %v615
  %3234 = vmatprep.subr.bf16.mxu0 %v612
  %3235 = vmatpush1.bf16.msra.mxu0 %v611
  %3236 = vmatprep.subr.bf16.mxu0 %v608
  %3237 = vmatpush1.bf16.msra.mxu0 %v607
  %3238 = vmatprep.subr.bf16.mxu0 %v604
  %3239 = vmatpush1.bf16.msra.mxu0 %v603
  %3240 = vmatprep.subr.bf16.mxu0 %v600
  %3241 = vmatpush1.bf16.msra.mxu0 %v599
  %3242 = vmatprep.subr.bf16.mxu0 %v596
  %3243 = vmatpush1.bf16.msra.mxu0 %v595
  %3244 = vmatprep.subr.bf16.mxu0 0
  %3245 = vmatpush2.bf16.msra.mxu0 0
  %3246 = vmatprep.subr.bf16.mxu0 0
  %3247 = vmatpush2.bf16.msra.mxu0 0
  %3248 = vmatprep.subr.bf16.mxu0 0
  %3249 = vmatpush2.bf16.msra.mxu0 0
  %3250 = vmatprep.subr.bf16.mxu0 0
  %3251 = vmatpush2.bf16.msra.mxu0 0
  %3252 = vmatprep.subr.bf16.mxu0 0
  %3253 = vmatpush2.bf16.msra.mxu0 0
  %3254 = vmatprep.subr.bf16.mxu0 0
  %3255 = vmatpush2.bf16.msra.mxu0 0
  %3256 = vmatprep.subr.bf16.mxu0 0
  %3257 = vmatpush2.bf16.msra.mxu0 0
  %3258 = vmatprep.subr.bf16.mxu0 0
  %3259 = vmatpush2.bf16.msra.mxu0 0
  %3260 = vmatprep.mubr.bf16.mxu0 0
  %3261 = vmatmul.mubr.bf16.gmra.mxu0 %v3029
  %v3262 = vpop.f32.mrf.mxu0
  %v3263 = vadd.f32 0.0, %v3262
  %v3264 = vpop.f32.mrf.mxu0
  %v3265 = vadd.f32 0.0, %v3264
  %v3266 = vpop.f32.mrf.mxu0
  %v3267 = vpop.f32.mrf.mxu0
  %3268 = vdwg.mxu0
  %3269 = vmatprep.subr.bf16.mxu0 %v626
  %3270 = vmatpush1.bf16.msra.mxu0 %v625
  %3271 = vmatprep.subr.bf16.mxu0 %v622
  %3272 = vmatpush1.bf16.msra.mxu0 %v621
  %3273 = vmatprep.subr.bf16.mxu0 %v618
  %3274 = vmatpush1.bf16.msra.mxu0 %v617
  %3275 = vmatprep.subr.bf16.mxu0 %v614
  %3276 = vmatpush1.bf16.msra.mxu0 %v613
  %3277 = vmatprep.subr.bf16.mxu0 %v610
  %3278 = vmatpush1.bf16.msra.mxu0 %v609
  %3279 = vmatprep.subr.bf16.mxu0 %v606
  %3280 = vmatpush1.bf16.msra.mxu0 %v605
  %3281 = vmatprep.subr.bf16.mxu0 %v602
  %3282 = vmatpush1.bf16.msra.mxu0 %v601
  %3283 = vmatprep.subr.bf16.mxu0 %v598
  %3284 = vmatpush1.bf16.msra.mxu0 %v597
  %3285 = vmatprep.subr.bf16.mxu0 0
  %3286 = vmatpush2.bf16.msra.mxu0 0
  %3287 = vmatprep.subr.bf16.mxu0 0
  %3288 = vmatpush2.bf16.msra.mxu0 0
  %3289 = vmatprep.subr.bf16.mxu0 0
  %3290 = vmatpush2.bf16.msra.mxu0 0
  %3291 = vmatprep.subr.bf16.mxu0 0
  %3292 = vmatpush2.bf16.msra.mxu0 0
  %3293 = vmatprep.subr.bf16.mxu0 0
  %3294 = vmatpush2.bf16.msra.mxu0 0
  %3295 = vmatprep.subr.bf16.mxu0 0
  %3296 = vmatpush2.bf16.msra.mxu0 0
  %3297 = vmatprep.subr.bf16.mxu0 0
  %3298 = vmatpush2.bf16.msra.mxu0 0
  %3299 = vmatprep.subr.bf16.mxu0 0
  %3300 = vmatpush2.bf16.msra.mxu0 0
  %3301 = vmatprep.mubr.bf16.mxu0 0
  %3302 = vmatmul.mubr.bf16.gmra.mxu0 %v3029
  %v3303 = vpop.f32.mrf.mxu0
  %v3304 = vadd.f32 0.0, %v3303
  %v3305 = vpop.f32.mrf.mxu0
  %v3306 = vadd.f32 0.0, %v3305
  %v3307 = vpop.f32.mrf.mxu0
  %v3308 = vpop.f32.mrf.mxu0
  %3309 = vdwg.mxu0
  %v3310 = vadd.f32 %v3224, %v3263
  %v3311 = vadd.f32 %v3225, %v3265
  %v3312 = vadd.f32 %v3226, %v3304
  %v3313 = vadd.f32 %v3227, %v3306
  %v3314 = vxor.u32 %v3310, 2147483648
  %v3315 = vmul.f32 %v3314, 1.442695
  %v3316 = vpow.pop %v3315
  %v3317 = vadd.f32 %v3316, 1.0
  %v3318 = vrcp.pop %v3317
  %v3319 = vmul.f32 1.0, %v3318
  %v3320 = vxor.u32 %v3311, 2147483648
  %v3321 = vmul.f32 %v3320, 1.442695
  %v3322 = vpow.pop %v3321
  %v3323 = vadd.f32 %v3322, 1.0
  %v3324 = vrcp.pop %v3323
  %v3325 = vmul.f32 1.0, %v3324
  %v3326 = vtanh.pop %v3312
  %v3327 = vxor.u32 %v3313, 2147483648
  %v3328 = vmul.f32 %v3327, 1.442695
  %v3329 = vpow.pop %v3328
  %v3330 = vadd.f32 %v3329, 1.0
  %v3331 = vrcp.pop %v3330
  %v3332 = vmul.f32 1.0, %v3331
  %v3333 = vmul.f32 %v3325, %v3026
  %v3334 = vmul.f32 %v3319, %v3326
  %v3335 = vadd.f32 %v3333, %v3334
  %v3336 = vtanh.pop %v3335
  %v3337 = vmul.f32 %v3332, %v3336
  %v3338 = vpack.c.bf16 %v3337, %v3337
  %3339 = vmatprep.subr.bf16.mxu0 %v959
  %3340 = vmatpush1.bf16.msra.mxu0 %v958
  %3341 = vmatprep.subr.bf16.mxu0 %v955
  %3342 = vmatpush1.bf16.msra.mxu0 %v954
  %3343 = vmatprep.subr.bf16.mxu0 %v951
  %3344 = vmatpush1.bf16.msra.mxu0 %v950
  %3345 = vmatprep.subr.bf16.mxu0 %v947
  %3346 = vmatpush1.bf16.msra.mxu0 %v946
  %3347 = vmatprep.subr.bf16.mxu0 %v943
  %3348 = vmatpush1.bf16.msra.mxu0 %v942
  %3349 = vmatprep.subr.bf16.mxu0 %v939
  %3350 = vmatpush1.bf16.msra.mxu0 %v938
  %3351 = vmatprep.subr.bf16.mxu0 %v935
  %3352 = vmatpush1.bf16.msra.mxu0 %v934
  %3353 = vmatprep.subr.bf16.mxu0 %v931
  %3354 = vmatpush1.bf16.msra.mxu0 %v930
  %3355 = vmatprep.subr.bf16.mxu0 0
  %3356 = vmatpush2.bf16.msra.mxu0 0
  %3357 = vmatprep.subr.bf16.mxu0 0
  %3358 = vmatpush2.bf16.msra.mxu0 0
  %3359 = vmatprep.subr.bf16.mxu0 0
  %3360 = vmatpush2.bf16.msra.mxu0 0
  %3361 = vmatprep.subr.bf16.mxu0 0
  %3362 = vmatpush2.bf16.msra.mxu0 0
  %3363 = vmatprep.subr.bf16.mxu0 0
  %3364 = vmatpush2.bf16.msra.mxu0 0
  %3365 = vmatprep.subr.bf16.mxu0 0
  %3366 = vmatpush2.bf16.msra.mxu0 0
  %3367 = vmatprep.subr.bf16.mxu0 0
  %3368 = vmatpush2.bf16.msra.mxu0 0
  %3369 = vmatprep.subr.bf16.mxu0 0
  %3370 = vmatpush2.bf16.msra.mxu0 0
  %3371 = vmatprep.mubr.bf16.mxu0 0
  %3372 = vmatmul.mubr.bf16.gmra.mxu0 %v3222
  %v3373 = vpop.f32.mrf.mxu0
  %v3374 = vadd.f32 0.0, %v3373
  %v3375 = vpop.f32.mrf.mxu0
  %v3376 = vadd.f32 0.0, %v3375
  %v3377 = vpop.f32.mrf.mxu0
  %v3378 = vpop.f32.mrf.mxu0
  %3379 = vdwg.mxu0
  %3380 = vmatprep.subr.bf16.mxu0 %v961
  %3381 = vmatpush1.bf16.msra.mxu0 %v960
  %3382 = vmatprep.subr.bf16.mxu0 %v957
  %3383 = vmatpush1.bf16.msra.mxu0 %v956
  %3384 = vmatprep.subr.bf16.mxu0 %v953
  %3385 = vmatpush1.bf16.msra.mxu0 %v952
  %3386 = vmatprep.subr.bf16.mxu0 %v949
  %3387 = vmatpush1.bf16.msra.mxu0 %v948
  %3388 = vmatprep.subr.bf16.mxu0 %v945
  %3389 = vmatpush1.bf16.msra.mxu0 %v944
  %3390 = vmatprep.subr.bf16.mxu0 %v941
  %3391 = vmatpush1.bf16.msra.mxu0 %v940
  %3392 = vmatprep.subr.bf16.mxu0 %v937
  %3393 = vmatpush1.bf16.msra.mxu0 %v936
  %3394 = vmatprep.subr.bf16.mxu0 %v933
  %3395 = vmatpush1.bf16.msra.mxu0 %v932
  %3396 = vmatprep.subr.bf16.mxu0 0
  %3397 = vmatpush2.bf16.msra.mxu0 0
  %3398 = vmatprep.subr.bf16.mxu0 0
  %3399 = vmatpush2.bf16.msra.mxu0 0
  %3400 = vmatprep.subr.bf16.mxu0 0
  %3401 = vmatpush2.bf16.msra.mxu0 0
  %3402 = vmatprep.subr.bf16.mxu0 0
  %3403 = vmatpush2.bf16.msra.mxu0 0
  %3404 = vmatprep.subr.bf16.mxu0 0
  %3405 = vmatpush2.bf16.msra.mxu0 0
  %3406 = vmatprep.subr.bf16.mxu0 0
  %3407 = vmatpush2.bf16.msra.mxu0 0
  %3408 = vmatprep.subr.bf16.mxu0 0
  %3409 = vmatpush2.bf16.msra.mxu0 0
  %3410 = vmatprep.subr.bf16.mxu0 0
  %3411 = vmatpush2.bf16.msra.mxu0 0
  %3412 = vmatprep.mubr.bf16.mxu0 0
  %3413 = vmatmul.mubr.bf16.gmra.mxu0 %v3222
  %v3414 = vpop.f32.mrf.mxu0
  %v3415 = vadd.f32 0.0, %v3414
  %v3416 = vpop.f32.mrf.mxu0
  %v3417 = vadd.f32 0.0, %v3416
  %v3418 = vpop.f32.mrf.mxu0
  %v3419 = vpop.f32.mrf.mxu0
  %3420 = vdwg.mxu0
  %3421 = vmatprep.subr.bf16.mxu0 %v1201
  %3422 = vmatpush1.bf16.msra.mxu0 %v1200
  %3423 = vmatprep.subr.bf16.mxu0 %v1197
  %3424 = vmatpush1.bf16.msra.mxu0 %v1196
  %3425 = vmatprep.subr.bf16.mxu0 %v1193
  %3426 = vmatpush1.bf16.msra.mxu0 %v1192
  %3427 = vmatprep.subr.bf16.mxu0 %v1189
  %3428 = vmatpush1.bf16.msra.mxu0 %v1188
  %3429 = vmatprep.subr.bf16.mxu0 %v1185
  %3430 = vmatpush1.bf16.msra.mxu0 %v1184
  %3431 = vmatprep.subr.bf16.mxu0 %v1181
  %3432 = vmatpush1.bf16.msra.mxu0 %v1180
  %3433 = vmatprep.subr.bf16.mxu0 %v1177
  %3434 = vmatpush1.bf16.msra.mxu0 %v1176
  %3435 = vmatprep.subr.bf16.mxu0 %v1173
  %3436 = vmatpush1.bf16.msra.mxu0 %v1172
  %3437 = vmatprep.subr.bf16.mxu0 0
  %3438 = vmatpush2.bf16.msra.mxu0 0
  %3439 = vmatprep.subr.bf16.mxu0 0
  %3440 = vmatpush2.bf16.msra.mxu0 0
  %3441 = vmatprep.subr.bf16.mxu0 0
  %3442 = vmatpush2.bf16.msra.mxu0 0
  %3443 = vmatprep.subr.bf16.mxu0 0
  %3444 = vmatpush2.bf16.msra.mxu0 0
  %3445 = vmatprep.subr.bf16.mxu0 0
  %3446 = vmatpush2.bf16.msra.mxu0 0
  %3447 = vmatprep.subr.bf16.mxu0 0
  %3448 = vmatpush2.bf16.msra.mxu0 0
  %3449 = vmatprep.subr.bf16.mxu0 0
  %3450 = vmatpush2.bf16.msra.mxu0 0
  %3451 = vmatprep.subr.bf16.mxu0 0
  %3452 = vmatpush2.bf16.msra.mxu0 0
  %3453 = vmatprep.mubr.bf16.mxu0 0
  %3454 = vmatmul.mubr.bf16.gmra.mxu0 %v3338
  %v3455 = vpop.f32.mrf.mxu0
  %v3456 = vadd.f32 %v3374, %v3455
  %v3457 = vpop.f32.mrf.mxu0
  %v3458 = vadd.f32 %v3376, %v3457
  %v3459 = vpop.f32.mrf.mxu0
  %v3460 = vpop.f32.mrf.mxu0
  %3461 = vdwg.mxu0
  %3462 = vmatprep.subr.bf16.mxu0 %v1203
  %3463 = vmatpush1.bf16.msra.mxu0 %v1202
  %3464 = vmatprep.subr.bf16.mxu0 %v1199
  %3465 = vmatpush1.bf16.msra.mxu0 %v1198
  %3466 = vmatprep.subr.bf16.mxu0 %v1195
  %3467 = vmatpush1.bf16.msra.mxu0 %v1194
  %3468 = vmatprep.subr.bf16.mxu0 %v1191
  %3469 = vmatpush1.bf16.msra.mxu0 %v1190
  %3470 = vmatprep.subr.bf16.mxu0 %v1187
  %3471 = vmatpush1.bf16.msra.mxu0 %v1186
  %3472 = vmatprep.subr.bf16.mxu0 %v1183
  %3473 = vmatpush1.bf16.msra.mxu0 %v1182
  %3474 = vmatprep.subr.bf16.mxu0 %v1179
  %3475 = vmatpush1.bf16.msra.mxu0 %v1178
  %3476 = vmatprep.subr.bf16.mxu0 %v1175
  %3477 = vmatpush1.bf16.msra.mxu0 %v1174
  %3478 = vmatprep.subr.bf16.mxu0 0
  %3479 = vmatpush2.bf16.msra.mxu0 0
  %3480 = vmatprep.subr.bf16.mxu0 0
  %3481 = vmatpush2.bf16.msra.mxu0 0
  %3482 = vmatprep.subr.bf16.mxu0 0
  %3483 = vmatpush2.bf16.msra.mxu0 0
  %3484 = vmatprep.subr.bf16.mxu0 0
  %3485 = vmatpush2.bf16.msra.mxu0 0
  %3486 = vmatprep.subr.bf16.mxu0 0
  %3487 = vmatpush2.bf16.msra.mxu0 0
  %3488 = vmatprep.subr.bf16.mxu0 0
  %3489 = vmatpush2.bf16.msra.mxu0 0
  %3490 = vmatprep.subr.bf16.mxu0 0
  %3491 = vmatpush2.bf16.msra.mxu0 0
  %3492 = vmatprep.subr.bf16.mxu0 0
  %3493 = vmatpush2.bf16.msra.mxu0 0
  %3494 = vmatprep.mubr.bf16.mxu0 0
  %3495 = vmatmul.mubr.bf16.gmra.mxu0 %v3338
  %v3496 = vpop.f32.mrf.mxu0
  %v3497 = vadd.f32 %v3415, %v3496
  %v3498 = vpop.f32.mrf.mxu0
  %v3499 = vadd.f32 %v3417, %v3498
  %v3500 = vpop.f32.mrf.mxu0
  %v3501 = vpop.f32.mrf.mxu0
  %3502 = vdwg.mxu0
  %v3503 = vadd.f32 %v3456, %v1323
  %v3504 = vadd.f32 %v3458, %v1327
  %v3505 = vadd.f32 %v3497, %v1331
  %v3506 = vadd.f32 %v3499, %v1335
  %v3507 = vxor.u32 %v3503, 2147483648
  %v3508 = vmul.f32 %v3507, 1.442695
  %v3509 = vpow.pop %v3508
  %v3510 = vadd.f32 %v3509, 1.0
  %v3511 = vrcp.pop %v3510
  %v3512 = vmul.f32 1.0, %v3511
  %v3513 = vxor.u32 %v3504, 2147483648
  %v3514 = vmul.f32 %v3513, 1.442695
  %v3515 = vpow.pop %v3514
  %v3516 = vadd.f32 %v3515, 1.0
  %v3517 = vrcp.pop %v3516
  %v3518 = vmul.f32 1.0, %v3517
  %v3519 = vtanh.pop %v3505
  %v3520 = vxor.u32 %v3506, 2147483648
  %v3521 = vmul.f32 %v3520, 1.442695
  %v3522 = vpow.pop %v3521
  %v3523 = vadd.f32 %v3522, 1.0
  %v3524 = vrcp.pop %v3523
  %v3525 = vmul.f32 1.0, %v3524
  %v3526 = vmul.f32 %v3518, %v3219
  %v3527 = vmul.f32 %v3512, %v3519
  %v3528 = vadd.f32 %v3526, %v3527
  %v3529 = vtanh.pop %v3528
  %v3530 = vmul.f32 %v3525, %v3529
  %v3531 = vpack.c.bf16 %v3530, %v3530
  %3532 = vst [vmem:[#allocation3] sm:$0xf] %v3338
  %3533 = vst [vmem:[#allocation4] sm:$0xf] %v3531
  %3534 = vst [vmem:[#allocation5] sm:$0xff] %v3335
  %3535 = vst [vmem:[#allocation6] sm:$0xff] %v3528
  %v3536 = vunpack.c.l.bf16 %v3531
  %3537 = vst [vmem:[%s7] sm:$0xff] %v3536
  // Predicated region
  $region34: #{vqa_forward.2} parent=0 // pred_check
    _
  $region35: #{vqa_forward.2} parent=0 // pred_check_branch
    %3539 = sbr.rel (0) target = $region37
  $region36: #{vqa_forward.2} parent=0 // pred_region
    _
  $region37: #{vqa_forward.2} parent=0 // pred_fallthru
    _
  // Predicated region
  $region38: #{vqa_forward.2} parent=0 // pred_check
    _
  $region39: #{vqa_forward.2} parent=0 // pred_check_branch
    %3541 = sbr.rel (0) target = $region41
  $region40: #{vqa_forward.2} parent=0 // pred_region
    _
  $region41: #{vqa_forward.2} parent=0 // pred_fallthru
    _

</llo_original>
